<compile_context>
chip_gen: v7x
topology: tpu7x:2x2x1
jax: 0.10.0
libtpu: 0.0.40
codegen_flags: <defaults>
</compile_context>

<pallas_src>
import jax
import jax.numpy as jnp
import numpy as np
from jax import lax
from jax.experimental import pallas as pl
from jax.experimental.pallas import tpu as pltpu

LANE = 128
SUBLANE = 8


def _round_up(x, m):
    return ((x + m - 1) // m) * m


def _pick_time_block(s):
    for t in (16, 8, 4, 2, 1):
        if s % t == 0:
            return t
    return 1


def _compiler_params(dimension_semantics, vmem_bytes_estimate):
    kwargs = dict(dimension_semantics=dimension_semantics)
    # Default scoped-VMEM limit is 32 MiB; raise it only when the rough
    # double-buffered working set needs it, capped at v7x's 64 MiB physical
    # VMEM so the kernel stays portable across v5e/v6e/v7x.
    if vmem_bytes_estimate > (32 << 20):
        kwargs["vmem_limit_bytes"] = int(
            min(vmem_bytes_estimate + (4 << 20), 64 << 20))
    return pltpu.CompilerParams(**kwargs)


# ---------------------------------------------------------------------------
# Kernel 1: LSTM recurrence (sequential over time blocks)
# ---------------------------------------------------------------------------
def _lstm_recurrence_kernel(emb_ref, w_ih_ref, w_hh_ref, b_ref, h0_ref, c0_ref,
                            h_seq_ref, h_n_ref, c_n_ref,
                            h_sc, c_sc):
    blk = pl.program_id(0)

    @pl.when(blk == 0)
    def _init():
        h_sc[...] = h0_ref[0]
        c_sc[...] = c0_ref[0]

    t_blk, bp, _ = emb_ref.shape
    hp = h_sc.shape[1]

    # Resident weights (constant index_map: same VMEM buffer every grid step).
    w_ih = w_ih_ref[...]                                   # (Ep, 4*Hp)
    w_hh = w_hh_ref[...]                                   # (Hp, 4*Hp)
    b = jnp.broadcast_to(b_ref[...], (bp, 4 * hp))         # hoisted broadcast

    def step(t, carry):
        x = emb_ref[t]                                     # (Bp, Ep)
        h_prev = h_sc[...]                                 # (Bp, Hp) f32
        c_prev = c_sc[...]
        gates = (
            jnp.dot(x, w_ih, preferred_element_type=jnp.float32)
            + jnp.dot(h_prev.astype(w_hh.dtype), w_hh,
                      preferred_element_type=jnp.float32)
            + b
        )                                                  # (Bp, 4*Hp) f32
        # Hp is a multiple of 128 -> each gate slice is lane-tile aligned
        # (PyTorch gate order i, f, g, o).
        i_g = jax.nn.sigmoid(gates[:, 0 * hp:1 * hp])
        f_g = jax.nn.sigmoid(gates[:, 1 * hp:2 * hp])
        g_g = jnp.tanh(gates[:, 2 * hp:3 * hp])
        o_g = jax.nn.sigmoid(gates[:, 3 * hp:4 * hp])
        c_new = f_g * c_prev + i_g * g_g
        h_new = o_g * jnp.tanh(c_new)
        h_sc[...] = h_new
        c_sc[...] = c_new
        h_seq_ref[t] = h_new.astype(h_seq_ref.dtype)
        return carry

    lax.fori_loop(0, t_blk, step, 0, unroll=True)

    # Final hidden state: write only once, on the last grid step.
    @pl.when(blk == pl.num_programs(0) - 1)
    def _finalize():
        h_n_ref[0] = h_sc[...].astype(h_n_ref.dtype)
        c_n_ref[0] = c_sc[...].astype(c_n_ref.dtype)


# ---------------------------------------------------------------------------
# Kernel 2: vocab projection, hoisted out of the recurrence (parallel grid)
# ---------------------------------------------------------------------------
def _vocab_projection_kernel(h_ref, w_ref, b_ref, o_ref):
    acc = jnp.dot(h_ref[...].astype(w_ref.dtype), w_ref[...],
                  preferred_element_type=jnp.float32)
    o_ref[...] = (acc + b_ref[...]).astype(o_ref.dtype)


# ---------------------------------------------------------------------------
# Wrapper
# ---------------------------------------------------------------------------
def rnn_model_forward(text, params, hidden=None, *, compute_dtype=jnp.float32):
    """RNNModel.forward.

    text:   (S, B) int32 token ids.
    params: PyTorch-layout parameters (see make_params).
    hidden: optional (h0, c0), each (1, B, H); zeros if None.
    Returns (logits (S, B, V) f32, (h_n (1, B, H) f32, c_n (1, B, H) f32)).
    """
    embed = params["embed"]          # (V, E)
    w_ih = params["w_ih"]            # (4H, E)  weight_ih_l0
    w_hh = params["w_hh"]            # (4H, H)  weight_hh_l0
    b_ih = params["b_ih"]            # (4H,)
    b_hh = params["b_hh"]            # (4H,)
    w_out = params["w_out"]          # (V, H)
    b_out = params["b_out"]          # (V,)

    S, B = text.shape
    V, E = embed.shape
    H = w_hh.shape[1]

    Bp = _round_up(B, SUBLANE)
    Ep = _round_up(E, LANE)
    Hp = _round_up(H, LANE)
    Vp = _round_up(V, LANE)
    t_blk = _pick_time_block(S)

    f32 = jnp.float32
    cbytes = jnp.dtype(compute_dtype).itemsize

    def pad_to(x, shape):
        out = jnp.zeros(shape, x.dtype)
        return out.at[tuple(slice(0, s) for s in x.shape)].set(x)

    # per-gate column padding: (in, 4H) -> (in, 4, Hp) -> (in, 4*Hp)
    def pad_gate_cols(w_t):
        in_dim = w_t.shape[0]
        return pad_to(w_t.reshape(in_dim, 4, H),
                      (in_dim, 4, Hp)).reshape(in_dim, 4 * Hp)

    w_ih_p = pad_to(pad_gate_cols(w_ih.T.astype(f32)),
                    (Ep, 4 * Hp)).astype(compute_dtype)
    w_hh_p = pad_to(pad_gate_cols(w_hh.T.astype(f32)),
                    (Hp, 4 * Hp)).astype(compute_dtype)
    b_p = pad_to((b_ih + b_hh).astype(f32).reshape(4, H),
                 (4, Hp)).reshape(1, 4 * Hp)
    w_out_p = pad_to(w_out.T.astype(f32), (Hp, Vp)).astype(compute_dtype)
    b_out_p = pad_to(b_out.astype(f32).reshape(1, V), (1, Vp))

    # Embedding gather (plain-JAX glue).  Could be fused into the recurrence
    # kernel via PrefetchScalarGridSpec + a pl.Element row-gather BlockSpec on
    # the embedding table; kept as XLA glue here.
    embed_p = pad_to(embed.astype(f32), (V, Ep))
    emb = jnp.take(embed_p, text, axis=0)                    # (S, B, Ep)
    emb_p = pad_to(emb, (S, Bp, Ep)).astype(compute_dtype)   # (S, Bp, Ep)

    if hidden is None:
        h0 = jnp.zeros((1, B, H), f32)
        c0 = jnp.zeros((1, B, H), f32)
    else:
        h0, c0 = hidden
    h0_p = pad_to(h0.astype(f32), (1, Bp, Hp))
    c0_p = pad_to(c0.astype(f32), (1, Bp, Hp))

    # ---- recurrence kernel -------------------------------------------------
    rec_vmem = (
        2 * t_blk * Bp * Ep * cbytes            # emb (double-buffered)
        + 2 * (Ep + Hp) * 4 * Hp * cbytes       # gate weights (conservative x2)
        + 2 * 4 * Hp * 4                        # gate bias
        + 2 * 2 * Bp * Hp * 4                   # h0 / c0
        + 2 * t_blk * Bp * Hp * cbytes          # h_seq out
        + 2 * 2 * Bp * Hp * 4                   # h_n / c_n out
        + 2 * Bp * Hp * 4                       # scratch carries
    )

    h_seq_p, h_n_p, c_n_p = pl.pallas_call(
        _lstm_recurrence_kernel,
        out_shape=(
            jax.ShapeDtypeStruct((S, Bp, Hp), compute_dtype),
            jax.ShapeDtypeStruct((1, Bp, Hp), f32),
            jax.ShapeDtypeStruct((1, Bp, Hp), f32),
        ),
        grid_spec=pltpu.PrefetchScalarGridSpec(
            num_scalar_prefetch=0,
            grid=(S // t_blk,),
            in_specs=[
                pl.BlockSpec((t_blk, Bp, Ep), lambda i: (i, 0, 0)),   # emb block
                pl.BlockSpec((Ep, 4 * Hp), lambda i: (0, 0)),         # w_ih^T
                pl.BlockSpec((Hp, 4 * Hp), lambda i: (0, 0)),         # w_hh^T
                pl.BlockSpec((1, 4 * Hp), lambda i: (0, 0)),          # gate bias
                pl.BlockSpec((1, Bp, Hp), lambda i: (0, 0, 0)),       # h0
                pl.BlockSpec((1, Bp, Hp), lambda i: (0, 0, 0)),       # c0
            ],
            out_specs=[
                pl.BlockSpec((t_blk, Bp, Hp), lambda i: (i, 0, 0)),   # h sequence
                pl.BlockSpec((1, Bp, Hp), lambda i: (0, 0, 0)),       # h_n
                pl.BlockSpec((1, Bp, Hp), lambda i: (0, 0, 0)),       # c_n
            ],
            scratch_shapes=[
                pltpu.VMEM((Bp, Hp), f32),    # h carry
                pltpu.VMEM((Bp, Hp), f32),    # c carry
            ],
        ),
        compiler_params=_compiler_params(("arbitrary",), rec_vmem),
    )(emb_p, w_ih_p, w_hh_p, b_p, h0_p, c0_p)

    # ---- vocab projection kernel (one big matmul, parallel grid) -----------
    rows = S * Bp                               # multiple of 8
    tm = 256 if rows >= 256 else rows
    rows_p = _round_up(rows, tm)
    tn = 512 if Vp % 512 == 0 else (256 if Vp % 256 == 0 else 128)

    h2d = h_seq_p.reshape(rows, Hp)
    if rows_p != rows:
        h2d = pad_to(h2d, (rows_p, Hp))

    proj_vmem = (
        2 * tm * Hp * cbytes
        + 2 * Hp * tn * cbytes
        + 2 * tn * 4
        + 2 * tm * tn * 4
    )

    logits_p = pl.pallas_call(
        _vocab_projection_kernel,
        out_shape=jax.ShapeDtypeStruct((rows_p, Vp), f32),
        grid_spec=pltpu.PrefetchScalarGridSpec(
            num_scalar_prefetch=0,
            grid=(rows_p // tm, Vp // tn),
            in_specs=[
                pl.BlockSpec((tm, Hp), lambda i, j: (i, 0)),   # h rows tile
                pl.BlockSpec((Hp, tn), lambda i, j: (0, j)),   # w_out^T V-tile
                pl.BlockSpec((1, tn), lambda i, j: (0, j)),    # bias V-tile
            ],
            out_specs=pl.BlockSpec((tm, tn), lambda i, j: (i, j)),
        ),
        compiler_params=_compiler_params(("parallel", "parallel"), proj_vmem),
    )(h2d, w_out_p, b_out_p)

    logits = logits_p[:rows].reshape(S, Bp, Vp)[:, :B, :V]
    h_n = h_n_p[:, :B, :H]
    c_n = c_n_p[:, :B, :H]
    return logits, (h_n, c_n)


# ---------------------------------------------------------------------------
# Pure-JAX reference (PyTorch semantics) + parameter helpers
# ---------------------------------------------------------------------------
def reference_forward(text, params, hidden=None):
    emb = jnp.take(params["embed"], text, axis=0)      # (S, B, E)
    H = params["w_hh"].shape[1]
    B = text.shape[1]
    w_ih_t = params["w_ih"].T
    w_hh_t = params["w_hh"].T
    b = (params["b_ih"] + params["b_hh"])[None, :]
    if hidden is None:
        h0 = jnp.zeros((B, H), jnp.float32)
        c0 = jnp.zeros((B, H), jnp.float32)
    else:
        h0, c0 = hidden[0][0], hidden[1][0]

    def step(carry, x_t):
        h, c = carry
        gates = x_t @ w_ih_t + h @ w_hh_t + b
        i_g = jax.nn.sigmoid(gates[:, 0 * H:1 * H])
        f_g = jax.nn.sigmoid(gates[:, 1 * H:2 * H])
        g_g = jnp.tanh(gates[:, 2 * H:3 * H])
        o_g = jax.nn.sigmoid(gates[:, 3 * H:4 * H])
        c_new = f_g * c + i_g * g_g
        h_new = o_g * jnp.tanh(c_new)
        return (h_new, c_new), h_new

    (h_n, c_n), outs = lax.scan(step, (h0, c0), emb)
    logits = outs @ params["w_out"].T + params["b_out"][None, None, :]
    return logits, (h_n[None], c_n[None])


def make_params(key, vocab_size, embed_size, hidden_size):
    ks = jax.random.split(key, 7)
    s = 0.1
    return {
        "embed": jax.random.normal(ks[0], (vocab_size, embed_size), jnp.float32) * s,
        "w_ih": jax.random.normal(ks[1], (4 * hidden_size, embed_size), jnp.float32) * s,
        "w_hh": jax.random.normal(ks[2], (4 * hidden_size, hidden_size), jnp.float32) * s,
        "b_ih": jax.random.normal(ks[3], (4 * hidden_size,), jnp.float32) * s,
        "b_hh": jax.random.normal(ks[4], (4 * hidden_size,), jnp.float32) * s,
        "w_out": jax.random.normal(ks[5], (vocab_size, hidden_size), jnp.float32) * s,
        "b_out": jax.random.normal(ks[6], (vocab_size,), jnp.float32) * s,
    }


def init_hidden(bsz, hidden_size):
    return (jnp.zeros((1, bsz, hidden_size), jnp.float32),
            jnp.zeros((1, bsz, hidden_size), jnp.float32))


if __name__ == "__main__":
    VOCAB_SIZE = 256
    EMBED_SIZE = 32
    HIDDEN_SIZE = 32
    SEQ_LEN = 8
    BATCH = 4

    key = jax.random.PRNGKey(0)
    k_param, k_text = jax.random.split(key)
    params = make_params(k_param, VOCAB_SIZE, EMBED_SIZE, HIDDEN_SIZE)
    text = jax.random.randint(k_text, (SEQ_LEN, BATCH), 0, VOCAB_SIZE, jnp.int32)
    hidden = init_hidden(BATCH, HIDDEN_SIZE)

    # f32 path: strict check against the pure-JAX reference.
    logits, (h_n, c_n) = rnn_model_forward(text, params, hidden,
                                           compute_dtype=jnp.float32)
    logits = jax.block_until_ready(logits)
    h_n = jax.block_until_ready(h_n)
    c_n = jax.block_until_ready(c_n)

    ref_logits, (ref_h, ref_c) = reference_forward(text, params, hidden)

    assert logits.shape == (SEQ_LEN, BATCH, VOCAB_SIZE)
    assert h_n.shape == (1, BATCH, HIDDEN_SIZE)
    assert c_n.shape == (1, BATCH, HIDDEN_SIZE)
    np.testing.assert_allclose(np.asarray(logits), np.asarray(ref_logits),
                               rtol=1e-5, atol=1e-5)
    np.testing.assert_allclose(np.asarray(h_n), np.asarray(ref_h),
                               rtol=1e-5, atol=1e-5)
    np.testing.assert_allclose(np.asarray(c_n), np.asarray(ref_c),
                               rtol=1e-5, atol=1e-5)

    # bf16 MXU-operand fast path (v6e/v7x): f32 accumulation + f32 h/c carries,
    # only matmul operands in bf16 -> loose tolerance.
    logits_bf16, _ = rnn_model_forward(text, params, hidden,
                                       compute_dtype=jnp.bfloat16)
    logits_bf16 = jax.block_until_ready(logits_bf16)
    np.testing.assert_allclose(np.asarray(logits_bf16), np.asarray(ref_logits),
                               rtol=1e-1, atol=3e-2)

    print("KERNEL_OK")
</pallas_src>

<mosaic_0001>
module attributes {stable_mosaic.version = 11 : i64} {
  func.func @_lstm_recurrence_kernel(%arg0: i32, %arg1: memref<8x8x128xf32, #tpu.memory_space<vmem>>, %arg2: memref<128x512xf32, #tpu.memory_space<vmem>>, %arg3: memref<128x512xf32, #tpu.memory_space<vmem>>, %arg4: memref<1x512xf32, #tpu.memory_space<vmem>>, %arg5: memref<1x8x128xf32, #tpu.memory_space<vmem>>, %arg6: memref<1x8x128xf32, #tpu.memory_space<vmem>>, %arg7: memref<8x8x128xf32, #tpu.memory_space<vmem>>, %arg8: memref<1x8x128xf32, #tpu.memory_space<vmem>>, %arg9: memref<1x8x128xf32, #tpu.memory_space<vmem>>, %arg10: memref<8x128xf32, #tpu.memory_space<vmem>>, %arg11: memref<8x128xf32, #tpu.memory_space<vmem>>) attributes {dimension_semantics = [#tpu.dimension_semantics<arbitrary>], iteration_bounds = array<i64: 1>, scalar_prefetch = 0 : i64, scratch_operands = 2 : i64, tpu.core_type = #tpu.core_type<tc>, window_params = [{transform_indices = @transform_0, window_bounds = array<i64: 8, 8, 128>}, {pipeline_mode = #tpu.pipeline_mode<synchronous>, transform_indices = @transform_1, window_bounds = array<i64: 128, 512>}, {pipeline_mode = #tpu.pipeline_mode<synchronous>, transform_indices = @transform_2, window_bounds = array<i64: 128, 512>}, {pipeline_mode = #tpu.pipeline_mode<synchronous>, transform_indices = @transform_3, window_bounds = array<i64: 1, 512>}, {pipeline_mode = #tpu.pipeline_mode<synchronous>, transform_indices = @transform_4, window_bounds = array<i64: 1, 8, 128>}, {pipeline_mode = #tpu.pipeline_mode<synchronous>, transform_indices = @transform_5, window_bounds = array<i64: 1, 8, 128>}, {transform_indices = @transform_6, window_bounds = array<i64: 8, 8, 128>}, {pipeline_mode = #tpu.pipeline_mode<synchronous>, transform_indices = @transform_7, window_bounds = array<i64: 1, 8, 128>}, {pipeline_mode = #tpu.pipeline_mode<synchronous>, transform_indices = @transform_8, window_bounds = array<i64: 1, 8, 128>}]} {
    %c0_i32 = arith.constant 0 : i32
    %0 = arith.cmpi eq, %arg0, %c0_i32 : i32
    %1 = arith.extui %0 : i1 to i32
    %c0_i32_0 = arith.constant 0 : i32
    %2 = arith.cmpi ne, %1, %c0_i32_0 : i32
    scf.if %2 {
      %c0_144 = arith.constant 0 : index
      %c0_145 = arith.constant 0 : index
      %c0_146 = arith.constant 0 : index
      %331 = vector.load %arg5[%c0_144, %c0_145, %c0_146] : memref<1x8x128xf32, #tpu.memory_space<vmem>>, vector<1x8x128xf32>
      %332 = vector.shape_cast %331 : vector<1x8x128xf32> to vector<8x128xf32>
      %c0_147 = arith.constant 0 : index
      %c0_148 = arith.constant 0 : index
      %333 = vector.load %arg10[%c0_147, %c0_148] : memref<8x128xf32, #tpu.memory_space<vmem>>, vector<8x128xf32>
      tpu.vector_store %arg10[%c0_147, %c0_148], %332 {strides = array<i32>} : memref<8x128xf32, #tpu.memory_space<vmem>>, vector<8x128xf32>,
      %c0_149 = arith.constant 0 : index
      %c0_150 = arith.constant 0 : index
      %c0_151 = arith.constant 0 : index
      %334 = vector.load %arg6[%c0_149, %c0_150, %c0_151] : memref<1x8x128xf32, #tpu.memory_space<vmem>>, vector<1x8x128xf32>
      %335 = vector.shape_cast %334 : vector<1x8x128xf32> to vector<8x128xf32>
      %c0_152 = arith.constant 0 : index
      %c0_153 = arith.constant 0 : index
      %336 = vector.load %arg11[%c0_152, %c0_153] : memref<8x128xf32, #tpu.memory_space<vmem>>, vector<8x128xf32>
      tpu.vector_store %arg11[%c0_152, %c0_153], %335 {strides = array<i32>} : memref<8x128xf32, #tpu.memory_space<vmem>>, vector<8x128xf32>,
    } else {
    }
    %c0 = arith.constant 0 : index
    %c0_1 = arith.constant 0 : index
    %3 = vector.load %arg2[%c0, %c0_1] : memref<128x512xf32, #tpu.memory_space<vmem>>, vector<128x512xf32>
    %c0_2 = arith.constant 0 : index
    %c0_3 = arith.constant 0 : index
    %4 = vector.load %arg3[%c0_2, %c0_3] : memref<128x512xf32, #tpu.memory_space<vmem>>, vector<128x512xf32>
    %c0_4 = arith.constant 0 : index
    %c0_5 = arith.constant 0 : index
    %5 = vector.load %arg4[%c0_4, %c0_5] : memref<1x512xf32, #tpu.memory_space<vmem>>, vector<1x512xf32>
    %6 = vector.shape_cast %5 : vector<1x512xf32> to vector<1x512xf32>
    %7 = vector.broadcast %6 : vector<1x512xf32> to vector<8x512xf32>
    %c0_i32_6 = arith.constant 0 : i32
    %8 = arith.index_cast %c0_i32_6 : i32 to index
    %c0_7 = arith.constant 0 : index
    %c0_8 = arith.constant 0 : index
    %9 = vector.load %arg1[%8, %c0_7, %c0_8] : memref<8x8x128xf32, #tpu.memory_space<vmem>>, vector<1x8x128xf32>
    %10 = vector.shape_cast %9 : vector<1x8x128xf32> to vector<8x128xf32>
    %c0_9 = arith.constant 0 : index
    %c0_10 = arith.constant 0 : index
    %11 = vector.load %arg10[%c0_9, %c0_10] : memref<8x128xf32, #tpu.memory_space<vmem>>, vector<8x128xf32>
    %c0_11 = arith.constant 0 : index
    %c0_12 = arith.constant 0 : index
    %12 = vector.load %arg11[%c0_11, %c0_12] : memref<8x128xf32, #tpu.memory_space<vmem>>, vector<8x128xf32>
    %cst = arith.constant dense<0.000000e+00> : vector<8x512xf32>
    %13 = tpu.matmul %10, %3, %cst {dimension_numbers = #tpu.dot_dimension_numbers<[1], [0], [0], [1], [0, 0, 1, 1], [], []>} : vector<8x128xf32>, vector<128x512xf32>, vector<8x512xf32> -> vector<8x512xf32>
    %cst_13 = arith.constant dense<0.000000e+00> : vector<8x512xf32>
    %14 = tpu.matmul %11, %4, %cst_13 {dimension_numbers = #tpu.dot_dimension_numbers<[1], [0], [0], [1], [0, 0, 1, 1], [], []>} : vector<8x128xf32>, vector<128x512xf32>, vector<8x512xf32> -> vector<8x512xf32>
    %15 = arith.addf %13, %14 : vector<8x512xf32>
    %16 = arith.addf %15, %7 : vector<8x512xf32>
    %17 = vector.extract_strided_slice %16 {offsets = [0, 0], sizes = [8, 128], strides = [1, 1]} : vector<8x512xf32> to vector<8x128xf32>
    %18 = arith.negf %17 : vector<8x128xf32>
    %19 = math.exp %18 : vector<8x128xf32>
    %cst_14 = arith.constant 1.000000e+00 : f32
    %20 = vector.broadcast %cst_14 : f32 to vector<8x128xf32>
    %21 = arith.addf %20, %19 : vector<8x128xf32>
    %22 = arith.divf %20, %21 : vector<8x128xf32>
    %23 = vector.extract_strided_slice %16 {offsets = [0, 128], sizes = [8, 128], strides = [1, 1]} : vector<8x512xf32> to vector<8x128xf32>
    %24 = arith.negf %23 : vector<8x128xf32>
    %25 = math.exp %24 : vector<8x128xf32>
    %cst_15 = arith.constant 1.000000e+00 : f32
    %26 = vector.broadcast %cst_15 : f32 to vector<8x128xf32>
    %27 = arith.addf %26, %25 : vector<8x128xf32>
    %28 = arith.divf %26, %27 : vector<8x128xf32>
    %29 = vector.extract_strided_slice %16 {offsets = [0, 256], sizes = [8, 128], strides = [1, 1]} : vector<8x512xf32> to vector<8x128xf32>
    %30 = math.tanh %29 : vector<8x128xf32>
    %31 = vector.extract_strided_slice %16 {offsets = [0, 384], sizes = [8, 128], strides = [1, 1]} : vector<8x512xf32> to vector<8x128xf32>
    %32 = arith.negf %31 : vector<8x128xf32>
    %33 = math.exp %32 : vector<8x128xf32>
    %cst_16 = arith.constant 1.000000e+00 : f32
    %34 = vector.broadcast %cst_16 : f32 to vector<8x128xf32>
    %35 = arith.addf %34, %33 : vector<8x128xf32>
    %36 = arith.divf %34, %35 : vector<8x128xf32>
    %37 = arith.mulf %28, %12 : vector<8x128xf32>
    %38 = arith.mulf %22, %30 : vector<8x128xf32>
    %39 = arith.addf %37, %38 : vector<8x128xf32>
    %40 = math.tanh %39 : vector<8x128xf32>
    %41 = arith.mulf %36, %40 : vector<8x128xf32>
    %c0_17 = arith.constant 0 : index
    %c0_18 = arith.constant 0 : index
    %42 = vector.load %arg10[%c0_17, %c0_18] : memref<8x128xf32, #tpu.memory_space<vmem>>, vector<8x128xf32>
    tpu.vector_store %arg10[%c0_17, %c0_18], %41 {strides = array<i32>} : memref<8x128xf32, #tpu.memory_space<vmem>>, vector<8x128xf32>,
    %c0_19 = arith.constant 0 : index
    %c0_20 = arith.constant 0 : index
    %43 = vector.load %arg11[%c0_19, %c0_20] : memref<8x128xf32, #tpu.memory_space<vmem>>, vector<8x128xf32>
    tpu.vector_store %arg11[%c0_19, %c0_20], %39 {strides = array<i32>} : memref<8x128xf32, #tpu.memory_space<vmem>>, vector<8x128xf32>,
    %44 = arith.index_cast %c0_i32_6 : i32 to index
    %c0_21 = arith.constant 0 : index
    %c0_22 = arith.constant 0 : index
    %45 = vector.load %arg7[%44, %c0_21, %c0_22] : memref<8x8x128xf32, #tpu.memory_space<vmem>>, vector<1x8x128xf32>
    %46 = vector.shape_cast %45 : vector<1x8x128xf32> to vector<8x128xf32>
    %47 = vector.shape_cast %41 : vector<8x128xf32> to vector<1x8x128xf32>
    tpu.vector_store %arg7[%44, %c0_21, %c0_22], %47 {strides = array<i32>} : memref<8x8x128xf32, #tpu.memory_space<vmem>>, vector<1x8x128xf32>,
    %c1_i32 = arith.constant 1 : i32
    %48 = arith.index_cast %c1_i32 : i32 to index
    %c0_23 = arith.constant 0 : index
    %c0_24 = arith.constant 0 : index
    %49 = vector.load %arg1[%48, %c0_23, %c0_24] : memref<8x8x128xf32, #tpu.memory_space<vmem>>, vector<1x8x128xf32>
    %50 = vector.shape_cast %49 : vector<1x8x128xf32> to vector<8x128xf32>
    %c0_25 = arith.constant 0 : index
    %c0_26 = arith.constant 0 : index
    %51 = vector.load %arg10[%c0_25, %c0_26] : memref<8x128xf32, #tpu.memory_space<vmem>>, vector<8x128xf32>
    %c0_27 = arith.constant 0 : index
    %c0_28 = arith.constant 0 : index
    %52 = vector.load %arg11[%c0_27, %c0_28] : memref<8x128xf32, #tpu.memory_space<vmem>>, vector<8x128xf32>
    %cst_29 = arith.constant dense<0.000000e+00> : vector<8x512xf32>
    %53 = tpu.matmul %50, %3, %cst_29 {dimension_numbers = #tpu.dot_dimension_numbers<[1], [0], [0], [1], [0, 0, 1, 1], [], []>} : vector<8x128xf32>, vector<128x512xf32>, vector<8x512xf32> -> vector<8x512xf32>
    %cst_30 = arith.constant dense<0.000000e+00> : vector<8x512xf32>
    %54 = tpu.matmul %51, %4, %cst_30 {dimension_numbers = #tpu.dot_dimension_numbers<[1], [0], [0], [1], [0, 0, 1, 1], [], []>} : vector<8x128xf32>, vector<128x512xf32>, vector<8x512xf32> -> vector<8x512xf32>
    %55 = arith.addf %53, %54 : vector<8x512xf32>
    %56 = arith.addf %55, %7 : vector<8x512xf32>
    %57 = vector.extract_strided_slice %56 {offsets = [0, 0], sizes = [8, 128], strides = [1, 1]} : vector<8x512xf32> to vector<8x128xf32>
    %58 = arith.negf %57 : vector<8x128xf32>
    %59 = math.exp %58 : vector<8x128xf32>
    %cst_31 = arith.constant 1.000000e+00 : f32
    %60 = vector.broadcast %cst_31 : f32 to vector<8x128xf32>
    %61 = arith.addf %60, %59 : vector<8x128xf32>
    %62 = arith.divf %60, %61 : vector<8x128xf32>
    %63 = vector.extract_strided_slice %56 {offsets = [0, 128], sizes = [8, 128], strides = [1, 1]} : vector<8x512xf32> to vector<8x128xf32>
    %64 = arith.negf %63 : vector<8x128xf32>
    %65 = math.exp %64 : vector<8x128xf32>
    %cst_32 = arith.constant 1.000000e+00 : f32
    %66 = vector.broadcast %cst_32 : f32 to vector<8x128xf32>
    %67 = arith.addf %66, %65 : vector<8x128xf32>
    %68 = arith.divf %66, %67 : vector<8x128xf32>
    %69 = vector.extract_strided_slice %56 {offsets = [0, 256], sizes = [8, 128], strides = [1, 1]} : vector<8x512xf32> to vector<8x128xf32>
    %70 = math.tanh %69 : vector<8x128xf32>
    %71 = vector.extract_strided_slice %56 {offsets = [0, 384], sizes = [8, 128], strides = [1, 1]} : vector<8x512xf32> to vector<8x128xf32>
    %72 = arith.negf %71 : vector<8x128xf32>
    %73 = math.exp %72 : vector<8x128xf32>
    %cst_33 = arith.constant 1.000000e+00 : f32
    %74 = vector.broadcast %cst_33 : f32 to vector<8x128xf32>
    %75 = arith.addf %74, %73 : vector<8x128xf32>
    %76 = arith.divf %74, %75 : vector<8x128xf32>
    %77 = arith.mulf %68, %52 : vector<8x128xf32>
    %78 = arith.mulf %62, %70 : vector<8x128xf32>
    %79 = arith.addf %77, %78 : vector<8x128xf32>
    %80 = math.tanh %79 : vector<8x128xf32>
    %81 = arith.mulf %76, %80 : vector<8x128xf32>
    %c0_34 = arith.constant 0 : index
    %c0_35 = arith.constant 0 : index
    %82 = vector.load %arg10[%c0_34, %c0_35] : memref<8x128xf32, #tpu.memory_space<vmem>>, vector<8x128xf32>
    tpu.vector_store %arg10[%c0_34, %c0_35], %81 {strides = array<i32>} : memref<8x128xf32, #tpu.memory_space<vmem>>, vector<8x128xf32>,
    %c0_36 = arith.constant 0 : index
    %c0_37 = arith.constant 0 : index
    %83 = vector.load %arg11[%c0_36, %c0_37] : memref<8x128xf32, #tpu.memory_space<vmem>>, vector<8x128xf32>
    tpu.vector_store %arg11[%c0_36, %c0_37], %79 {strides = array<i32>} : memref<8x128xf32, #tpu.memory_space<vmem>>, vector<8x128xf32>,
    %84 = arith.index_cast %c1_i32 : i32 to index
    %c0_38 = arith.constant 0 : index
    %c0_39 = arith.constant 0 : index
    %85 = vector.load %arg7[%84, %c0_38, %c0_39] : memref<8x8x128xf32, #tpu.memory_space<vmem>>, vector<1x8x128xf32>
    %86 = vector.shape_cast %85 : vector<1x8x128xf32> to vector<8x128xf32>
    %87 = vector.shape_cast %81 : vector<8x128xf32> to vector<1x8x128xf32>
    tpu.vector_store %arg7[%84, %c0_38, %c0_39], %87 {strides = array<i32>} : memref<8x8x128xf32, #tpu.memory_space<vmem>>, vector<1x8x128xf32>,
    %c2_i32 = arith.constant 2 : i32
    %88 = arith.index_cast %c2_i32 : i32 to index
    %c0_40 = arith.constant 0 : index
    %c0_41 = arith.constant 0 : index
    %89 = vector.load %arg1[%88, %c0_40, %c0_41] : memref<8x8x128xf32, #tpu.memory_space<vmem>>, vector<1x8x128xf32>
    %90 = vector.shape_cast %89 : vector<1x8x128xf32> to vector<8x128xf32>
    %c0_42 = arith.constant 0 : index
    %c0_43 = arith.constant 0 : index
    %91 = vector.load %arg10[%c0_42, %c0_43] : memref<8x128xf32, #tpu.memory_space<vmem>>, vector<8x128xf32>
    %c0_44 = arith.constant 0 : index
    %c0_45 = arith.constant 0 : index
    %92 = vector.load %arg11[%c0_44, %c0_45] : memref<8x128xf32, #tpu.memory_space<vmem>>, vector<8x128xf32>
    %cst_46 = arith.constant dense<0.000000e+00> : vector<8x512xf32>
    %93 = tpu.matmul %90, %3, %cst_46 {dimension_numbers = #tpu.dot_dimension_numbers<[1], [0], [0], [1], [0, 0, 1, 1], [], []>} : vector<8x128xf32>, vector<128x512xf32>, vector<8x512xf32> -> vector<8x512xf32>
    %cst_47 = arith.constant dense<0.000000e+00> : vector<8x512xf32>
    %94 = tpu.matmul %91, %4, %cst_47 {dimension_numbers = #tpu.dot_dimension_numbers<[1], [0], [0], [1], [0, 0, 1, 1], [], []>} : vector<8x128xf32>, vector<128x512xf32>, vector<8x512xf32> -> vector<8x512xf32>
    %95 = arith.addf %93, %94 : vector<8x512xf32>
    %96 = arith.addf %95, %7 : vector<8x512xf32>
    %97 = vector.extract_strided_slice %96 {offsets = [0, 0], sizes = [8, 128], strides = [1, 1]} : vector<8x512xf32> to vector<8x128xf32>
    %98 = arith.negf %97 : vector<8x128xf32>
    %99 = math.exp %98 : vector<8x128xf32>
    %cst_48 = arith.constant 1.000000e+00 : f32
    %100 = vector.broadcast %cst_48 : f32 to vector<8x128xf32>
    %101 = arith.addf %100, %99 : vector<8x128xf32>
    %102 = arith.divf %100, %101 : vector<8x128xf32>
    %103 = vector.extract_strided_slice %96 {offsets = [0, 128], sizes = [8, 128], strides = [1, 1]} : vector<8x512xf32> to vector<8x128xf32>
    %104 = arith.negf %103 : vector<8x128xf32>
    %105 = math.exp %104 : vector<8x128xf32>
    %cst_49 = arith.constant 1.000000e+00 : f32
    %106 = vector.broadcast %cst_49 : f32 to vector<8x128xf32>
    %107 = arith.addf %106, %105 : vector<8x128xf32>
    %108 = arith.divf %106, %107 : vector<8x128xf32>
    %109 = vector.extract_strided_slice %96 {offsets = [0, 256], sizes = [8, 128], strides = [1, 1]} : vector<8x512xf32> to vector<8x128xf32>
    %110 = math.tanh %109 : vector<8x128xf32>
    %111 = vector.extract_strided_slice %96 {offsets = [0, 384], sizes = [8, 128], strides = [1, 1]} : vector<8x512xf32> to vector<8x128xf32>
    %112 = arith.negf %111 : vector<8x128xf32>
    %113 = math.exp %112 : vector<8x128xf32>
    %cst_50 = arith.constant 1.000000e+00 : f32
    %114 = vector.broadcast %cst_50 : f32 to vector<8x128xf32>
    %115 = arith.addf %114, %113 : vector<8x128xf32>
    %116 = arith.divf %114, %115 : vector<8x128xf32>
    %117 = arith.mulf %108, %92 : vector<8x128xf32>
    %118 = arith.mulf %102, %110 : vector<8x128xf32>
    %119 = arith.addf %117, %118 : vector<8x128xf32>
    %120 = math.tanh %119 : vector<8x128xf32>
    %121 = arith.mulf %116, %120 : vector<8x128xf32>
    %c0_51 = arith.constant 0 : index
    %c0_52 = arith.constant 0 : index
    %122 = vector.load %arg10[%c0_51, %c0_52] : memref<8x128xf32, #tpu.memory_space<vmem>>, vector<8x128xf32>
    tpu.vector_store %arg10[%c0_51, %c0_52], %121 {strides = array<i32>} : memref<8x128xf32, #tpu.memory_space<vmem>>, vector<8x128xf32>,
    %c0_53 = arith.constant 0 : index
    %c0_54 = arith.constant 0 : index
    %123 = vector.load %arg11[%c0_53, %c0_54] : memref<8x128xf32, #tpu.memory_space<vmem>>, vector<8x128xf32>
    tpu.vector_store %arg11[%c0_53, %c0_54], %119 {strides = array<i32>} : memref<8x128xf32, #tpu.memory_space<vmem>>, vector<8x128xf32>,
    %124 = arith.index_cast %c2_i32 : i32 to index
    %c0_55 = arith.constant 0 : index
    %c0_56 = arith.constant 0 : index
    %125 = vector.load %arg7[%124, %c0_55, %c0_56] : memref<8x8x128xf32, #tpu.memory_space<vmem>>, vector<1x8x128xf32>
    %126 = vector.shape_cast %125 : vector<1x8x128xf32> to vector<8x128xf32>
    %127 = vector.shape_cast %121 : vector<8x128xf32> to vector<1x8x128xf32>
    tpu.vector_store %arg7[%124, %c0_55, %c0_56], %127 {strides = array<i32>} : memref<8x8x128xf32, #tpu.memory_space<vmem>>, vector<1x8x128xf32>,
    %c3_i32 = arith.constant 3 : i32
    %128 = arith.index_cast %c3_i32 : i32 to index
    %c0_57 = arith.constant 0 : index
    %c0_58 = arith.constant 0 : index
    %129 = vector.load %arg1[%128, %c0_57, %c0_58] : memref<8x8x128xf32, #tpu.memory_space<vmem>>, vector<1x8x128xf32>
    %130 = vector.shape_cast %129 : vector<1x8x128xf32> to vector<8x128xf32>
    %c0_59 = arith.constant 0 : index
    %c0_60 = arith.constant 0 : index
    %131 = vector.load %arg10[%c0_59, %c0_60] : memref<8x128xf32, #tpu.memory_space<vmem>>, vector<8x128xf32>
    %c0_61 = arith.constant 0 : index
    %c0_62 = arith.constant 0 : index
    %132 = vector.load %arg11[%c0_61, %c0_62] : memref<8x128xf32, #tpu.memory_space<vmem>>, vector<8x128xf32>
    %cst_63 = arith.constant dense<0.000000e+00> : vector<8x512xf32>
    %133 = tpu.matmul %130, %3, %cst_63 {dimension_numbers = #tpu.dot_dimension_numbers<[1], [0], [0], [1], [0, 0, 1, 1], [], []>} : vector<8x128xf32>, vector<128x512xf32>, vector<8x512xf32> -> vector<8x512xf32>
    %cst_64 = arith.constant dense<0.000000e+00> : vector<8x512xf32>
    %134 = tpu.matmul %131, %4, %cst_64 {dimension_numbers = #tpu.dot_dimension_numbers<[1], [0], [0], [1], [0, 0, 1, 1], [], []>} : vector<8x128xf32>, vector<128x512xf32>, vector<8x512xf32> -> vector<8x512xf32>
    %135 = arith.addf %133, %134 : vector<8x512xf32>
    %136 = arith.addf %135, %7 : vector<8x512xf32>
    %137 = vector.extract_strided_slice %136 {offsets = [0, 0], sizes = [8, 128], strides = [1, 1]} : vector<8x512xf32> to vector<8x128xf32>
    %138 = arith.negf %137 : vector<8x128xf32>
    %139 = math.exp %138 : vector<8x128xf32>
    %cst_65 = arith.constant 1.000000e+00 : f32
    %140 = vector.broadcast %cst_65 : f32 to vector<8x128xf32>
    %141 = arith.addf %140, %139 : vector<8x128xf32>
    %142 = arith.divf %140, %141 : vector<8x128xf32>
    %143 = vector.extract_strided_slice %136 {offsets = [0, 128], sizes = [8, 128], strides = [1, 1]} : vector<8x512xf32> to vector<8x128xf32>
    %144 = arith.negf %143 : vector<8x128xf32>
    %145 = math.exp %144 : vector<8x128xf32>
    %cst_66 = arith.constant 1.000000e+00 : f32
    %146 = vector.broadcast %cst_66 : f32 to vector<8x128xf32>
    %147 = arith.addf %146, %145 : vector<8x128xf32>
    %148 = arith.divf %146, %147 : vector<8x128xf32>
    %149 = vector.extract_strided_slice %136 {offsets = [0, 256], sizes = [8, 128], strides = [1, 1]} : vector<8x512xf32> to vector<8x128xf32>
    %150 = math.tanh %149 : vector<8x128xf32>
    %151 = vector.extract_strided_slice %136 {offsets = [0, 384], sizes = [8, 128], strides = [1, 1]} : vector<8x512xf32> to vector<8x128xf32>
    %152 = arith.negf %151 : vector<8x128xf32>
    %153 = math.exp %152 : vector<8x128xf32>
    %cst_67 = arith.constant 1.000000e+00 : f32
    %154 = vector.broadcast %cst_67 : f32 to vector<8x128xf32>
    %155 = arith.addf %154, %153 : vector<8x128xf32>
    %156 = arith.divf %154, %155 : vector<8x128xf32>
    %157 = arith.mulf %148, %132 : vector<8x128xf32>
    %158 = arith.mulf %142, %150 : vector<8x128xf32>
    %159 = arith.addf %157, %158 : vector<8x128xf32>
    %160 = math.tanh %159 : vector<8x128xf32>
    %161 = arith.mulf %156, %160 : vector<8x128xf32>
    %c0_68 = arith.constant 0 : index
    %c0_69 = arith.constant 0 : index
    %162 = vector.load %arg10[%c0_68, %c0_69] : memref<8x128xf32, #tpu.memory_space<vmem>>, vector<8x128xf32>
    tpu.vector_store %arg10[%c0_68, %c0_69], %161 {strides = array<i32>} : memref<8x128xf32, #tpu.memory_space<vmem>>, vector<8x128xf32>,
    %c0_70 = arith.constant 0 : index
    %c0_71 = arith.constant 0 : index
    %163 = vector.load %arg11[%c0_70, %c0_71] : memref<8x128xf32, #tpu.memory_space<vmem>>, vector<8x128xf32>
    tpu.vector_store %arg11[%c0_70, %c0_71], %159 {strides = array<i32>} : memref<8x128xf32, #tpu.memory_space<vmem>>, vector<8x128xf32>,
    %164 = arith.index_cast %c3_i32 : i32 to index
    %c0_72 = arith.constant 0 : index
    %c0_73 = arith.constant 0 : index
    %165 = vector.load %arg7[%164, %c0_72, %c0_73] : memref<8x8x128xf32, #tpu.memory_space<vmem>>, vector<1x8x128xf32>
    %166 = vector.shape_cast %165 : vector<1x8x128xf32> to vector<8x128xf32>
    %167 = vector.shape_cast %161 : vector<8x128xf32> to vector<1x8x128xf32>
    tpu.vector_store %arg7[%164, %c0_72, %c0_73], %167 {strides = array<i32>} : memref<8x8x128xf32, #tpu.memory_space<vmem>>, vector<1x8x128xf32>,
    %c4_i32 = arith.constant 4 : i32
    %168 = arith.index_cast %c4_i32 : i32 to index
    %c0_74 = arith.constant 0 : index
    %c0_75 = arith.constant 0 : index
    %169 = vector.load %arg1[%168, %c0_74, %c0_75] : memref<8x8x128xf32, #tpu.memory_space<vmem>>, vector<1x8x128xf32>
    %170 = vector.shape_cast %169 : vector<1x8x128xf32> to vector<8x128xf32>
    %c0_76 = arith.constant 0 : index
    %c0_77 = arith.constant 0 : index
    %171 = vector.load %arg10[%c0_76, %c0_77] : memref<8x128xf32, #tpu.memory_space<vmem>>, vector<8x128xf32>
    %c0_78 = arith.constant 0 : index
    %c0_79 = arith.constant 0 : index
    %172 = vector.load %arg11[%c0_78, %c0_79] : memref<8x128xf32, #tpu.memory_space<vmem>>, vector<8x128xf32>
    %cst_80 = arith.constant dense<0.000000e+00> : vector<8x512xf32>
    %173 = tpu.matmul %170, %3, %cst_80 {dimension_numbers = #tpu.dot_dimension_numbers<[1], [0], [0], [1], [0, 0, 1, 1], [], []>} : vector<8x128xf32>, vector<128x512xf32>, vector<8x512xf32> -> vector<8x512xf32>
    %cst_81 = arith.constant dense<0.000000e+00> : vector<8x512xf32>
    %174 = tpu.matmul %171, %4, %cst_81 {dimension_numbers = #tpu.dot_dimension_numbers<[1], [0], [0], [1], [0, 0, 1, 1], [], []>} : vector<8x128xf32>, vector<128x512xf32>, vector<8x512xf32> -> vector<8x512xf32>
    %175 = arith.addf %173, %174 : vector<8x512xf32>
    %176 = arith.addf %175, %7 : vector<8x512xf32>
    %177 = vector.extract_strided_slice %176 {offsets = [0, 0], sizes = [8, 128], strides = [1, 1]} : vector<8x512xf32> to vector<8x128xf32>
    %178 = arith.negf %177 : vector<8x128xf32>
    %179 = math.exp %178 : vector<8x128xf32>
    %cst_82 = arith.constant 1.000000e+00 : f32
    %180 = vector.broadcast %cst_82 : f32 to vector<8x128xf32>
    %181 = arith.addf %180, %179 : vector<8x128xf32>
    %182 = arith.divf %180, %181 : vector<8x128xf32>
    %183 = vector.extract_strided_slice %176 {offsets = [0, 128], sizes = [8, 128], strides = [1, 1]} : vector<8x512xf32> to vector<8x128xf32>
    %184 = arith.negf %183 : vector<8x128xf32>
    %185 = math.exp %184 : vector<8x128xf32>
    %cst_83 = arith.constant 1.000000e+00 : f32
    %186 = vector.broadcast %cst_83 : f32 to vector<8x128xf32>
    %187 = arith.addf %186, %185 : vector<8x128xf32>
    %188 = arith.divf %186, %187 : vector<8x128xf32>
    %189 = vector.extract_strided_slice %176 {offsets = [0, 256], sizes = [8, 128], strides = [1, 1]} : vector<8x512xf32> to vector<8x128xf32>
    %190 = math.tanh %189 : vector<8x128xf32>
    %191 = vector.extract_strided_slice %176 {offsets = [0, 384], sizes = [8, 128], strides = [1, 1]} : vector<8x512xf32> to vector<8x128xf32>
    %192 = arith.negf %191 : vector<8x128xf32>
    %193 = math.exp %192 : vector<8x128xf32>
    %cst_84 = arith.constant 1.000000e+00 : f32
    %194 = vector.broadcast %cst_84 : f32 to vector<8x128xf32>
    %195 = arith.addf %194, %193 : vector<8x128xf32>
    %196 = arith.divf %194, %195 : vector<8x128xf32>
    %197 = arith.mulf %188, %172 : vector<8x128xf32>
    %198 = arith.mulf %182, %190 : vector<8x128xf32>
    %199 = arith.addf %197, %198 : vector<8x128xf32>
    %200 = math.tanh %199 : vector<8x128xf32>
    %201 = arith.mulf %196, %200 : vector<8x128xf32>
    %c0_85 = arith.constant 0 : index
    %c0_86 = arith.constant 0 : index
    %202 = vector.load %arg10[%c0_85, %c0_86] : memref<8x128xf32, #tpu.memory_space<vmem>>, vector<8x128xf32>
    tpu.vector_store %arg10[%c0_85, %c0_86], %201 {strides = array<i32>} : memref<8x128xf32, #tpu.memory_space<vmem>>, vector<8x128xf32>,
    %c0_87 = arith.constant 0 : index
    %c0_88 = arith.constant 0 : index
    %203 = vector.load %arg11[%c0_87, %c0_88] : memref<8x128xf32, #tpu.memory_space<vmem>>, vector<8x128xf32>
    tpu.vector_store %arg11[%c0_87, %c0_88], %199 {strides = array<i32>} : memref<8x128xf32, #tpu.memory_space<vmem>>, vector<8x128xf32>,
    %204 = arith.index_cast %c4_i32 : i32 to index
    %c0_89 = arith.constant 0 : index
    %c0_90 = arith.constant 0 : index
    %205 = vector.load %arg7[%204, %c0_89, %c0_90] : memref<8x8x128xf32, #tpu.memory_space<vmem>>, vector<1x8x128xf32>
    %206 = vector.shape_cast %205 : vector<1x8x128xf32> to vector<8x128xf32>
    %207 = vector.shape_cast %201 : vector<8x128xf32> to vector<1x8x128xf32>
    tpu.vector_store %arg7[%204, %c0_89, %c0_90], %207 {strides = array<i32>} : memref<8x8x128xf32, #tpu.memory_space<vmem>>, vector<1x8x128xf32>,
    %c5_i32 = arith.constant 5 : i32
    %208 = arith.index_cast %c5_i32 : i32 to index
    %c0_91 = arith.constant 0 : index
    %c0_92 = arith.constant 0 : index
    %209 = vector.load %arg1[%208, %c0_91, %c0_92] : memref<8x8x128xf32, #tpu.memory_space<vmem>>, vector<1x8x128xf32>
    %210 = vector.shape_cast %209 : vector<1x8x128xf32> to vector<8x128xf32>
    %c0_93 = arith.constant 0 : index
    %c0_94 = arith.constant 0 : index
    %211 = vector.load %arg10[%c0_93, %c0_94] : memref<8x128xf32, #tpu.memory_space<vmem>>, vector<8x128xf32>
    %c0_95 = arith.constant 0 : index
    %c0_96 = arith.constant 0 : index
    %212 = vector.load %arg11[%c0_95, %c0_96] : memref<8x128xf32, #tpu.memory_space<vmem>>, vector<8x128xf32>
    %cst_97 = arith.constant dense<0.000000e+00> : vector<8x512xf32>
    %213 = tpu.matmul %210, %3, %cst_97 {dimension_numbers = #tpu.dot_dimension_numbers<[1], [0], [0], [1], [0, 0, 1, 1], [], []>} : vector<8x128xf32>, vector<128x512xf32>, vector<8x512xf32> -> vector<8x512xf32>
    %cst_98 = arith.constant dense<0.000000e+00> : vector<8x512xf32>
    %214 = tpu.matmul %211, %4, %cst_98 {dimension_numbers = #tpu.dot_dimension_numbers<[1], [0], [0], [1], [0, 0, 1, 1], [], []>} : vector<8x128xf32>, vector<128x512xf32>, vector<8x512xf32> -> vector<8x512xf32>
    %215 = arith.addf %213, %214 : vector<8x512xf32>
    %216 = arith.addf %215, %7 : vector<8x512xf32>
    %217 = vector.extract_strided_slice %216 {offsets = [0, 0], sizes = [8, 128], strides = [1, 1]} : vector<8x512xf32> to vector<8x128xf32>
    %218 = arith.negf %217 : vector<8x128xf32>
    %219 = math.exp %218 : vector<8x128xf32>
    %cst_99 = arith.constant 1.000000e+00 : f32
    %220 = vector.broadcast %cst_99 : f32 to vector<8x128xf32>
    %221 = arith.addf %220, %219 : vector<8x128xf32>
    %222 = arith.divf %220, %221 : vector<8x128xf32>
    %223 = vector.extract_strided_slice %216 {offsets = [0, 128], sizes = [8, 128], strides = [1, 1]} : vector<8x512xf32> to vector<8x128xf32>
    %224 = arith.negf %223 : vector<8x128xf32>
    %225 = math.exp %224 : vector<8x128xf32>
    %cst_100 = arith.constant 1.000000e+00 : f32
    %226 = vector.broadcast %cst_100 : f32 to vector<8x128xf32>
    %227 = arith.addf %226, %225 : vector<8x128xf32>
    %228 = arith.divf %226, %227 : vector<8x128xf32>
    %229 = vector.extract_strided_slice %216 {offsets = [0, 256], sizes = [8, 128], strides = [1, 1]} : vector<8x512xf32> to vector<8x128xf32>
    %230 = math.tanh %229 : vector<8x128xf32>
    %231 = vector.extract_strided_slice %216 {offsets = [0, 384], sizes = [8, 128], strides = [1, 1]} : vector<8x512xf32> to vector<8x128xf32>
    %232 = arith.negf %231 : vector<8x128xf32>
    %233 = math.exp %232 : vector<8x128xf32>
    %cst_101 = arith.constant 1.000000e+00 : f32
    %234 = vector.broadcast %cst_101 : f32 to vector<8x128xf32>
    %235 = arith.addf %234, %233 : vector<8x128xf32>
    %236 = arith.divf %234, %235 : vector<8x128xf32>
    %237 = arith.mulf %228, %212 : vector<8x128xf32>
    %238 = arith.mulf %222, %230 : vector<8x128xf32>
    %239 = arith.addf %237, %238 : vector<8x128xf32>
    %240 = math.tanh %239 : vector<8x128xf32>
    %241 = arith.mulf %236, %240 : vector<8x128xf32>
    %c0_102 = arith.constant 0 : index
    %c0_103 = arith.constant 0 : index
    %242 = vector.load %arg10[%c0_102, %c0_103] : memref<8x128xf32, #tpu.memory_space<vmem>>, vector<8x128xf32>
    tpu.vector_store %arg10[%c0_102, %c0_103], %241 {strides = array<i32>} : memref<8x128xf32, #tpu.memory_space<vmem>>, vector<8x128xf32>,
    %c0_104 = arith.constant 0 : index
    %c0_105 = arith.constant 0 : index
    %243 = vector.load %arg11[%c0_104, %c0_105] : memref<8x128xf32, #tpu.memory_space<vmem>>, vector<8x128xf32>
    tpu.vector_store %arg11[%c0_104, %c0_105], %239 {strides = array<i32>} : memref<8x128xf32, #tpu.memory_space<vmem>>, vector<8x128xf32>,
    %244 = arith.index_cast %c5_i32 : i32 to index
    %c0_106 = arith.constant 0 : index
    %c0_107 = arith.constant 0 : index
    %245 = vector.load %arg7[%244, %c0_106, %c0_107] : memref<8x8x128xf32, #tpu.memory_space<vmem>>, vector<1x8x128xf32>
    %246 = vector.shape_cast %245 : vector<1x8x128xf32> to vector<8x128xf32>
    %247 = vector.shape_cast %241 : vector<8x128xf32> to vector<1x8x128xf32>
    tpu.vector_store %arg7[%244, %c0_106, %c0_107], %247 {strides = array<i32>} : memref<8x8x128xf32, #tpu.memory_space<vmem>>, vector<1x8x128xf32>,
    %c6_i32 = arith.constant 6 : i32
    %248 = arith.index_cast %c6_i32 : i32 to index
    %c0_108 = arith.constant 0 : index
    %c0_109 = arith.constant 0 : index
    %249 = vector.load %arg1[%248, %c0_108, %c0_109] : memref<8x8x128xf32, #tpu.memory_space<vmem>>, vector<1x8x128xf32>
    %250 = vector.shape_cast %249 : vector<1x8x128xf32> to vector<8x128xf32>
    %c0_110 = arith.constant 0 : index
    %c0_111 = arith.constant 0 : index
    %251 = vector.load %arg10[%c0_110, %c0_111] : memref<8x128xf32, #tpu.memory_space<vmem>>, vector<8x128xf32>
    %c0_112 = arith.constant 0 : index
    %c0_113 = arith.constant 0 : index
    %252 = vector.load %arg11[%c0_112, %c0_113] : memref<8x128xf32, #tpu.memory_space<vmem>>, vector<8x128xf32>
    %cst_114 = arith.constant dense<0.000000e+00> : vector<8x512xf32>
    %253 = tpu.matmul %250, %3, %cst_114 {dimension_numbers = #tpu.dot_dimension_numbers<[1], [0], [0], [1], [0, 0, 1, 1], [], []>} : vector<8x128xf32>, vector<128x512xf32>, vector<8x512xf32> -> vector<8x512xf32>
    %cst_115 = arith.constant dense<0.000000e+00> : vector<8x512xf32>
    %254 = tpu.matmul %251, %4, %cst_115 {dimension_numbers = #tpu.dot_dimension_numbers<[1], [0], [0], [1], [0, 0, 1, 1], [], []>} : vector<8x128xf32>, vector<128x512xf32>, vector<8x512xf32> -> vector<8x512xf32>
    %255 = arith.addf %253, %254 : vector<8x512xf32>
    %256 = arith.addf %255, %7 : vector<8x512xf32>
    %257 = vector.extract_strided_slice %256 {offsets = [0, 0], sizes = [8, 128], strides = [1, 1]} : vector<8x512xf32> to vector<8x128xf32>
    %258 = arith.negf %257 : vector<8x128xf32>
    %259 = math.exp %258 : vector<8x128xf32>
    %cst_116 = arith.constant 1.000000e+00 : f32
    %260 = vector.broadcast %cst_116 : f32 to vector<8x128xf32>
    %261 = arith.addf %260, %259 : vector<8x128xf32>
    %262 = arith.divf %260, %261 : vector<8x128xf32>
    %263 = vector.extract_strided_slice %256 {offsets = [0, 128], sizes = [8, 128], strides = [1, 1]} : vector<8x512xf32> to vector<8x128xf32>
    %264 = arith.negf %263 : vector<8x128xf32>
    %265 = math.exp %264 : vector<8x128xf32>
    %cst_117 = arith.constant 1.000000e+00 : f32
    %266 = vector.broadcast %cst_117 : f32 to vector<8x128xf32>
    %267 = arith.addf %266, %265 : vector<8x128xf32>
    %268 = arith.divf %266, %267 : vector<8x128xf32>
    %269 = vector.extract_strided_slice %256 {offsets = [0, 256], sizes = [8, 128], strides = [1, 1]} : vector<8x512xf32> to vector<8x128xf32>
    %270 = math.tanh %269 : vector<8x128xf32>
    %271 = vector.extract_strided_slice %256 {offsets = [0, 384], sizes = [8, 128], strides = [1, 1]} : vector<8x512xf32> to vector<8x128xf32>
    %272 = arith.negf %271 : vector<8x128xf32>
    %273 = math.exp %272 : vector<8x128xf32>
    %cst_118 = arith.constant 1.000000e+00 : f32
    %274 = vector.broadcast %cst_118 : f32 to vector<8x128xf32>
    %275 = arith.addf %274, %273 : vector<8x128xf32>
    %276 = arith.divf %274, %275 : vector<8x128xf32>
    %277 = arith.mulf %268, %252 : vector<8x128xf32>
    %278 = arith.mulf %262, %270 : vector<8x128xf32>
    %279 = arith.addf %277, %278 : vector<8x128xf32>
    %280 = math.tanh %279 : vector<8x128xf32>
    %281 = arith.mulf %276, %280 : vector<8x128xf32>
    %c0_119 = arith.constant 0 : index
    %c0_120 = arith.constant 0 : index
    %282 = vector.load %arg10[%c0_119, %c0_120] : memref<8x128xf32, #tpu.memory_space<vmem>>, vector<8x128xf32>
    tpu.vector_store %arg10[%c0_119, %c0_120], %281 {strides = array<i32>} : memref<8x128xf32, #tpu.memory_space<vmem>>, vector<8x128xf32>,
    %c0_121 = arith.constant 0 : index
    %c0_122 = arith.constant 0 : index
    %283 = vector.load %arg11[%c0_121, %c0_122] : memref<8x128xf32, #tpu.memory_space<vmem>>, vector<8x128xf32>
    tpu.vector_store %arg11[%c0_121, %c0_122], %279 {strides = array<i32>} : memref<8x128xf32, #tpu.memory_space<vmem>>, vector<8x128xf32>,
    %284 = arith.index_cast %c6_i32 : i32 to index
    %c0_123 = arith.constant 0 : index
    %c0_124 = arith.constant 0 : index
    %285 = vector.load %arg7[%284, %c0_123, %c0_124] : memref<8x8x128xf32, #tpu.memory_space<vmem>>, vector<1x8x128xf32>
    %286 = vector.shape_cast %285 : vector<1x8x128xf32> to vector<8x128xf32>
    %287 = vector.shape_cast %281 : vector<8x128xf32> to vector<1x8x128xf32>
    tpu.vector_store %arg7[%284, %c0_123, %c0_124], %287 {strides = array<i32>} : memref<8x8x128xf32, #tpu.memory_space<vmem>>, vector<1x8x128xf32>,
    %c7_i32 = arith.constant 7 : i32
    %288 = arith.index_cast %c7_i32 : i32 to index
    %c0_125 = arith.constant 0 : index
    %c0_126 = arith.constant 0 : index
    %289 = vector.load %arg1[%288, %c0_125, %c0_126] : memref<8x8x128xf32, #tpu.memory_space<vmem>>, vector<1x8x128xf32>
    %290 = vector.shape_cast %289 : vector<1x8x128xf32> to vector<8x128xf32>
    %c0_127 = arith.constant 0 : index
    %c0_128 = arith.constant 0 : index
    %291 = vector.load %arg10[%c0_127, %c0_128] : memref<8x128xf32, #tpu.memory_space<vmem>>, vector<8x128xf32>
    %c0_129 = arith.constant 0 : index
    %c0_130 = arith.constant 0 : index
    %292 = vector.load %arg11[%c0_129, %c0_130] : memref<8x128xf32, #tpu.memory_space<vmem>>, vector<8x128xf32>
    %cst_131 = arith.constant dense<0.000000e+00> : vector<8x512xf32>
    %293 = tpu.matmul %290, %3, %cst_131 {dimension_numbers = #tpu.dot_dimension_numbers<[1], [0], [0], [1], [0, 0, 1, 1], [], []>} : vector<8x128xf32>, vector<128x512xf32>, vector<8x512xf32> -> vector<8x512xf32>
    %cst_132 = arith.constant dense<0.000000e+00> : vector<8x512xf32>
    %294 = tpu.matmul %291, %4, %cst_132 {dimension_numbers = #tpu.dot_dimension_numbers<[1], [0], [0], [1], [0, 0, 1, 1], [], []>} : vector<8x128xf32>, vector<128x512xf32>, vector<8x512xf32> -> vector<8x512xf32>
    %295 = arith.addf %293, %294 : vector<8x512xf32>
    %296 = arith.addf %295, %7 : vector<8x512xf32>
    %297 = vector.extract_strided_slice %296 {offsets = [0, 0], sizes = [8, 128], strides = [1, 1]} : vector<8x512xf32> to vector<8x128xf32>
    %298 = arith.negf %297 : vector<8x128xf32>
    %299 = math.exp %298 : vector<8x128xf32>
    %cst_133 = arith.constant 1.000000e+00 : f32
    %300 = vector.broadcast %cst_133 : f32 to vector<8x128xf32>
    %301 = arith.addf %300, %299 : vector<8x128xf32>
    %302 = arith.divf %300, %301 : vector<8x128xf32>
    %303 = vector.extract_strided_slice %296 {offsets = [0, 128], sizes = [8, 128], strides = [1, 1]} : vector<8x512xf32> to vector<8x128xf32>
    %304 = arith.negf %303 : vector<8x128xf32>
    %305 = math.exp %304 : vector<8x128xf32>
    %cst_134 = arith.constant 1.000000e+00 : f32
    %306 = vector.broadcast %cst_134 : f32 to vector<8x128xf32>
    %307 = arith.addf %306, %305 : vector<8x128xf32>
    %308 = arith.divf %306, %307 : vector<8x128xf32>
    %309 = vector.extract_strided_slice %296 {offsets = [0, 256], sizes = [8, 128], strides = [1, 1]} : vector<8x512xf32> to vector<8x128xf32>
    %310 = math.tanh %309 : vector<8x128xf32>
    %311 = vector.extract_strided_slice %296 {offsets = [0, 384], sizes = [8, 128], strides = [1, 1]} : vector<8x512xf32> to vector<8x128xf32>
    %312 = arith.negf %311 : vector<8x128xf32>
    %313 = math.exp %312 : vector<8x128xf32>
    %cst_135 = arith.constant 1.000000e+00 : f32
    %314 = vector.broadcast %cst_135 : f32 to vector<8x128xf32>
    %315 = arith.addf %314, %313 : vector<8x128xf32>
    %316 = arith.divf %314, %315 : vector<8x128xf32>
    %317 = arith.mulf %308, %292 : vector<8x128xf32>
    %318 = arith.mulf %302, %310 : vector<8x128xf32>
    %319 = arith.addf %317, %318 : vector<8x128xf32>
    %320 = math.tanh %319 : vector<8x128xf32>
    %321 = arith.mulf %316, %320 : vector<8x128xf32>
    %c0_136 = arith.constant 0 : index
    %c0_137 = arith.constant 0 : index
    %322 = vector.load %arg10[%c0_136, %c0_137] : memref<8x128xf32, #tpu.memory_space<vmem>>, vector<8x128xf32>
    tpu.vector_store %arg10[%c0_136, %c0_137], %321 {strides = array<i32>} : memref<8x128xf32, #tpu.memory_space<vmem>>, vector<8x128xf32>,
    %c0_138 = arith.constant 0 : index
    %c0_139 = arith.constant 0 : index
    %323 = vector.load %arg11[%c0_138, %c0_139] : memref<8x128xf32, #tpu.memory_space<vmem>>, vector<8x128xf32>
    tpu.vector_store %arg11[%c0_138, %c0_139], %319 {strides = array<i32>} : memref<8x128xf32, #tpu.memory_space<vmem>>, vector<8x128xf32>,
    %324 = arith.index_cast %c7_i32 : i32 to index
    %c0_140 = arith.constant 0 : index
    %c0_141 = arith.constant 0 : index
    %325 = vector.load %arg7[%324, %c0_140, %c0_141] : memref<8x8x128xf32, #tpu.memory_space<vmem>>, vector<1x8x128xf32>
    %326 = vector.shape_cast %325 : vector<1x8x128xf32> to vector<8x128xf32>
    %327 = vector.shape_cast %321 : vector<8x128xf32> to vector<1x8x128xf32>
    tpu.vector_store %arg7[%324, %c0_140, %c0_141], %327 {strides = array<i32>} : memref<8x8x128xf32, #tpu.memory_space<vmem>>, vector<1x8x128xf32>,
    %c8_i32 = arith.constant 8 : i32
    %c0_i32_142 = arith.constant 0 : i32
    %328 = arith.cmpi eq, %arg0, %c0_i32_142 : i32
    %329 = arith.extui %328 : i1 to i32
    %c0_i32_143 = arith.constant 0 : i32
    %330 = arith.cmpi ne, %329, %c0_i32_143 : i32
    scf.if %330 {
      %c0_144 = arith.constant 0 : index
      %c0_145 = arith.constant 0 : index
      %331 = vector.load %arg10[%c0_144, %c0_145] : memref<8x128xf32, #tpu.memory_space<vmem>>, vector<8x128xf32>
      %c0_146 = arith.constant 0 : index
      %c0_147 = arith.constant 0 : index
      %c0_148 = arith.constant 0 : index
      %332 = vector.load %arg8[%c0_146, %c0_147, %c0_148] : memref<1x8x128xf32, #tpu.memory_space<vmem>>, vector<1x8x128xf32>
      %333 = vector.shape_cast %332 : vector<1x8x128xf32> to vector<8x128xf32>
      %334 = vector.shape_cast %331 : vector<8x128xf32> to vector<1x8x128xf32>
      tpu.vector_store %arg8[%c0_146, %c0_147, %c0_148], %334 {strides = array<i32>} : memref<1x8x128xf32, #tpu.memory_space<vmem>>, vector<1x8x128xf32>,
      %c0_149 = arith.constant 0 : index
      %c0_150 = arith.constant 0 : index
      %335 = vector.load %arg11[%c0_149, %c0_150] : memref<8x128xf32, #tpu.memory_space<vmem>>, vector<8x128xf32>
      %c0_151 = arith.constant 0 : index
      %c0_152 = arith.constant 0 : index
      %c0_153 = arith.constant 0 : index
      %336 = vector.load %arg9[%c0_151, %c0_152, %c0_153] : memref<1x8x128xf32, #tpu.memory_space<vmem>>, vector<1x8x128xf32>
      %337 = vector.shape_cast %336 : vector<1x8x128xf32> to vector<8x128xf32>
      %338 = vector.shape_cast %335 : vector<8x128xf32> to vector<1x8x128xf32>
      tpu.vector_store %arg9[%c0_151, %c0_152, %c0_153], %338 {strides = array<i32>} : memref<1x8x128xf32, #tpu.memory_space<vmem>>, vector<1x8x128xf32>,
    } else {
    }
    return
  }
  func.func @transform_0(%arg0: i32) -> (i32, i32, i32) {
    %c0_i32 = arith.constant 0 : i32
    %c0_i32_0 = arith.constant 0 : i32
    %c0_i32_1 = arith.constant 0 : i32
    return %arg0, %c0_i32, %c0_i32_0 : i32, i32, i32
  }
  func.func @transform_1(%arg0: i32) -> (i32, i32) {
    %c0_i32 = arith.constant 0 : i32
    %c0_i32_0 = arith.constant 0 : i32
    %c0_i32_1 = arith.constant 0 : i32
    return %c0_i32, %c0_i32_0 : i32, i32
  }
  func.func @transform_2(%arg0: i32) -> (i32, i32) {
    %c0_i32 = arith.constant 0 : i32
    %c0_i32_0 = arith.constant 0 : i32
    %c0_i32_1 = arith.constant 0 : i32
    return %c0_i32, %c0_i32_0 : i32, i32
  }
  func.func @transform_3(%arg0: i32) -> (i32, i32) {
    %c0_i32 = arith.constant 0 : i32
    %c0_i32_0 = arith.constant 0 : i32
    %c0_i32_1 = arith.constant 0 : i32
    return %c0_i32, %c0_i32_0 : i32, i32
  }
  func.func @transform_4(%arg0: i32) -> (i32, i32, i32) {
    %c0_i32 = arith.constant 0 : i32
    %c0_i32_0 = arith.constant 0 : i32
    %c0_i32_1 = arith.constant 0 : i32
    %c0_i32_2 = arith.constant 0 : i32
    return %c0_i32, %c0_i32_0, %c0_i32_1 : i32, i32, i32
  }
  func.func @transform_5(%arg0: i32) -> (i32, i32, i32) {
    %c0_i32 = arith.constant 0 : i32
    %c0_i32_0 = arith.constant 0 : i32
    %c0_i32_1 = arith.constant 0 : i32
    %c0_i32_2 = arith.constant 0 : i32
    return %c0_i32, %c0_i32_0, %c0_i32_1 : i32, i32, i32
  }
  func.func @transform_6(%arg0: i32) -> (i32, i32, i32) {
    %c0_i32 = arith.constant 0 : i32
    %c0_i32_0 = arith.constant 0 : i32
    %c0_i32_1 = arith.constant 0 : i32
    return %arg0, %c0_i32, %c0_i32_0 : i32, i32, i32
  }
  func.func @transform_7(%arg0: i32) -> (i32, i32, i32) {
    %c0_i32 = arith.constant 0 : i32
    %c0_i32_0 = arith.constant 0 : i32
    %c0_i32_1 = arith.constant 0 : i32
    %c0_i32_2 = arith.constant 0 : i32
    return %c0_i32, %c0_i32_0, %c0_i32_1 : i32, i32, i32
  }
  func.func @transform_8(%arg0: i32) -> (i32, i32, i32) {
    %c0_i32 = arith.constant 0 : i32
    %c0_i32_0 = arith.constant 0 : i32
    %c0_i32_1 = arith.constant 0 : i32
    %c0_i32_2 = arith.constant 0 : i32
    return %c0_i32, %c0_i32_0, %c0_i32_1 : i32, i32, i32
  }
}

</mosaic_0001>

<llo_original>
// kernel: tpu_custom_call.1
$region0: #{tpu_custom_call.1}
  #allocation0 [shape = 'u32[]', space=smem, size = 0x4, offset = 0x4, fixed_abs, tag = 'smem constant byte address 0x4 - core index']
  #allocation1 [shape = 'u32[144,128]{1,0:T(1,128)}', space=vmem, size = 0x12000, scoped, tag = 'internal scratch']
  #allocation2 [shape = 'f32[8,128]{1,0:T(8,128)}', space=vmem, size = 0x1000, scoped, tag = 'scratch operand']
  #allocation3 [shape = 'f32[8,128]{1,0:T(8,128)}', space=vmem, size = 0x1000, scoped, tag = 'scratch operand']
  %s0 = inlined_call_operand.hbm [shape: f32[8,8,128], index: 0, kind: input, shape index: {}]
  %s1 = inlined_call_operand.hbm [shape: f32[128,512], index: 1, kind: input, shape index: {}]
  %s2 = inlined_call_operand.hbm [shape: f32[128,512], index: 2, kind: input, shape index: {}]
  %s3 = inlined_call_operand.hbm [shape: f32[1,512], index: 3, kind: input, shape index: {}]
  %s4 = inlined_call_operand.vmem [shape: f32[1,8,128], index: 4, kind: input, shape index: {}]
  %s5 = inlined_call_operand.vmem [shape: f32[1,8,128], index: 5, kind: input, shape index: {}]
  %s6 = inlined_call_operand.hbm [shape: f32[8,8,128], index: 6, kind: output, shape index: {0}]
  %s7 = inlined_call_operand.hbm [shape: f32[1,8,128], index: 7, kind: output, shape index: {1}]
  %s8 = inlined_call_operand.hbm [shape: f32[1,8,128], index: 8, kind: output, shape index: {2}]
  %9 = xla_tuple %s6, %s7, %s8
  %s10 = sld [smem:[#allocation0]]
  $region74: #{tpu_custom_call.1} parent=0
    _
  %s12 = ssub.s32 1, %s10
  %s13 = scalar_select 0, %s12, %s10
  $region1: #{tpu_custom_call.1} parent=0
    #allocation4 [shape = 'u8[32768]{0}', space=vmem, size = 0x8000, scoped, tag = 'input window, operand 0, single buffered']
    #allocation5 [shape = 's32[1]{0}', space=sflag, size = 0x4, scoped, tag = 'scoped memory for tpu_custom_call.1']
    #allocation6 [shape = 's32[1]{0}', space=sflag, size = 0x4, scoped, tag = 'scoped memory for tpu_custom_call.1']
    #allocation7 [shape = 'u8[262144]{0}', space=vmem, size = 0x40000, scoped, tag = 'input window, operand 1, single buffered']
    #allocation8 [shape = 's32[1]{0}', space=sflag, size = 0x4, scoped, tag = 'scoped memory for tpu_custom_call.1']
    #allocation9 [shape = 'u8[262144]{0}', space=vmem, size = 0x40000, scoped, tag = 'input window, operand 2, single buffered']
    #allocation10 [shape = 'u8[2048]{0}', space=vmem, size = 0x800, scoped, tag = 'input window, operand 3, single buffered']
    #allocation11 [shape = 's32[1]{0}', space=sflag, size = 0x4, scoped, tag = 'scoped memory for tpu_custom_call.1']
    #allocation12 [shape = 'u8[32768]{0}', space=vmem, size = 0x8000, scoped, tag = 'output window, operand 0, single buffered']
    #allocation13 [shape = 'u8[4096]{0}', space=vmem, size = 0x1000, scoped, tag = 'output window, operand 1, single buffered']
    #allocation14 [shape = 's32[1]{0}', space=sflag, size = 0x4, scoped, tag = 'scoped memory for tpu_custom_call.1']
    #allocation15 [shape = 'u8[4096]{0}', space=vmem, size = 0x1000, scoped, tag = 'output window, operand 2, single buffered']
    %14 = vsyncpa [#allocation5], 0
    %15 = vsyncpa [#allocation8], 0
    %16 = vsyncpa [#allocation11], 0
    %17 = vsyncpa [#allocation6], 0
    %18 = vsyncpa [#allocation14], 0
    // Predicated region
    $region2: #{tpu_custom_call.1} parent=1 // pred_check
      _
    $region3: #{tpu_custom_call.1} parent=1 // pred_check_branch
      %20 = sbr.rel (0) target = $region5
    $region4: #{tpu_custom_call.1} parent=1 // pred_region
      %s22 = ssub.s32 1024, 1024
      %23 = vsyncadd [#allocation5], %s22
      %s24 = sshll.u32 [#allocation4], 4
      %s25 = int_to_ptr.vmem [resolvable:$true] %s24
      %30 = dma.hbm_to_vmem [thread:$0]  %s0, 1024, %s25, [#allocation5], 128, 128, 8
    $region5: #{tpu_custom_call.1} parent=1 // pred_fallthru
      _
    // Predicated region
    $region6: #{tpu_custom_call.1} parent=1 // pred_check
      _
    $region7: #{tpu_custom_call.1} parent=1 // pred_check_branch
      %32 = sbr.rel (0) target = $region9
    $region8: #{tpu_custom_call.1} parent=1 // pred_region
      %s34 = ssub.s32 8192, 8192
      %35 = vsyncadd [#allocation8], %s34
      %s36 = sshll.u32 [#allocation7], 4
      %s37 = int_to_ptr.vmem [resolvable:$true] %s36
      %42 = dma.hbm_to_vmem [thread:$0]  %s1, 8192, %s37, [#allocation8], 512, 512, 32
    $region9: #{tpu_custom_call.1} parent=1 // pred_fallthru
      _
    // Predicated region
    $region10: #{tpu_custom_call.1} parent=1 // pred_check
      _
    $region11: #{tpu_custom_call.1} parent=1 // pred_check_branch
      %44 = sbr.rel (0) target = $region13
    $region12: #{tpu_custom_call.1} parent=1 // pred_region
      %s46 = ssub.s32 8192, 8192
      %47 = vsyncadd [#allocation8], %s46
      %s48 = sshll.u32 [#allocation9], 4
      %s49 = int_to_ptr.vmem [resolvable:$true] %s48
      %54 = dma.hbm_to_vmem [thread:$0]  %s2, 8192, %s49, [#allocation8], 512, 512, 32
    $region13: #{tpu_custom_call.1} parent=1 // pred_fallthru
      _
    // Predicated region
    $region14: #{tpu_custom_call.1} parent=1 // pred_check
      _
    $region15: #{tpu_custom_call.1} parent=1 // pred_check_branch
      %56 = sbr.rel (0) target = $region17
    $region16: #{tpu_custom_call.1} parent=1 // pred_region
      %s58 = ssub.s32 64, 64
      %59 = vsyncadd [#allocation11], %s58
      %s61 = sshll.u32 [#allocation10], 4
      %s62 = int_to_ptr.vmem [resolvable:$true] %s61
      %64 = dma.hbm_to_vmem [thread:$0]  %s3, 64, %s62, [#allocation11]
    $region17: #{tpu_custom_call.1} parent=1 // pred_fallthru
      _
    // Predicated region
    $region18: #{tpu_custom_call.1} parent=1 // pred_check
      _
    $region19: #{tpu_custom_call.1} parent=1 // pred_check_branch
      %66 = sbr.rel (0) target = $region21
    $region20: #{tpu_custom_call.1} parent=1 // pred_region
      _
    $region21: #{tpu_custom_call.1} parent=1 // pred_fallthru
      _
    // Predicated region
    $region22: #{tpu_custom_call.1} parent=1 // pred_check
      _
    $region23: #{tpu_custom_call.1} parent=1 // pred_check_branch
      %68 = sbr.rel (0) target = $region25
    $region24: #{tpu_custom_call.1} parent=1 // pred_region
      _
    $region25: #{tpu_custom_call.1} parent=1 // pred_fallthru
      _
    // Predicated region
    $region26: #{tpu_custom_call.1} parent=1 // pred_check
      _
    $region27: #{tpu_custom_call.1} parent=1 // pred_check_branch
      %70 = sbr.rel (0) target = $region29
    $region28: #{tpu_custom_call.1} parent=1 // pred_region
      %71 = dma.done [#allocation5], 1024
    $region29: #{tpu_custom_call.1} parent=1 // pred_fallthru
      _
    // Predicated region
    $region30: #{tpu_custom_call.1} parent=1 // pred_check
      _
    $region31: #{tpu_custom_call.1} parent=1 // pred_check_branch
      %73 = sbr.rel (0) target = $region33
    $region32: #{tpu_custom_call.1} parent=1 // pred_region
      %74 = dma.done [#allocation8], 8192
    $region33: #{tpu_custom_call.1} parent=1 // pred_fallthru
      _
    // Predicated region
    $region34: #{tpu_custom_call.1} parent=1 // pred_check
      _
    $region35: #{tpu_custom_call.1} parent=1 // pred_check_branch
      %76 = sbr.rel (0) target = $region37
    $region36: #{tpu_custom_call.1} parent=1 // pred_region
      %77 = dma.done [#allocation8], 8192
    $region37: #{tpu_custom_call.1} parent=1 // pred_fallthru
      _
    // Predicated region
    $region38: #{tpu_custom_call.1} parent=1 // pred_check
      _
    $region39: #{tpu_custom_call.1} parent=1 // pred_check_branch
      %79 = sbr.rel (0) target = $region41
    $region40: #{tpu_custom_call.1} parent=1 // pred_region
      %80 = dma.done [#allocation11], 64
    $region41: #{tpu_custom_call.1} parent=1 // pred_fallthru
      _
    %p81 = scmp.eq.s32.totalorder 0, 0
    // Predicated region
    $region42: #{tpu_custom_call.1} parent=1 // pred_check
      %p82 = pneg %p81
    $region43: #{tpu_custom_call.1} parent=1 // pred_check_branch
      %84 = sbr.rel (%p82) target = $region45
    $region44: #{tpu_custom_call.1} parent=1 // pred_region
      %v85 = vld [vmem:[%s4] sm:$0xff]
      %86 = vst [vmem:[#allocation2] sm:$0xff] %v85
      %v87 = vld [vmem:[%s5] sm:$0xff]
      %88 = vst [vmem:[#allocation3] sm:$0xff] %v87
    $region45: #{tpu_custom_call.1} parent=1 // pred_fallthru
      _
    %v89 = vld [vmem:[#allocation7] sm:$0xff]
    %v90 = vld [vmem:[#allocation7 + $0x8] sm:$0xff]
    %v91 = vld [vmem:[#allocation7 + $0x10] sm:$0xff]
    %v92 = vld [vmem:[#allocation7 + $0x18] sm:$0xff]
    %v93 = vld [vmem:[#allocation7 + $0x20] sm:$0xff]
    %v94 = vld [vmem:[#allocation7 + $0x28] sm:$0xff]
    %v95 = vld [vmem:[#allocation7 + $0x30] sm:$0xff]
    %v96 = vld [vmem:[#allocation7 + $0x38] sm:$0xff]
    %v97 = vld [vmem:[#allocation7 + $0x40] sm:$0xff]
    %v98 = vld [vmem:[#allocation7 + $0x48] sm:$0xff]
    %v99 = vld [vmem:[#allocation7 + $0x50] sm:$0xff]
    %v100 = vld [vmem:[#allocation7 + $0x58] sm:$0xff]
    %v101 = vld [vmem:[#allocation7 + $0x60] sm:$0xff]
    %v102 = vld [vmem:[#allocation7 + $0x68] sm:$0xff]
    %v103 = vld [vmem:[#allocation7 + $0x70] sm:$0xff]
    %v104 = vld [vmem:[#allocation7 + $0x78] sm:$0xff]
    %v105 = vld [vmem:[#allocation7 + $0x80] sm:$0xff]
    %v106 = vld [vmem:[#allocation7 + $0x88] sm:$0xff]
    %v107 = vld [vmem:[#allocation7 + $0x90] sm:$0xff]
    %v108 = vld [vmem:[#allocation7 + $0x98] sm:$0xff]
    %v109 = vld [vmem:[#allocation7 + $0xa0] sm:$0xff]
    %v110 = vld [vmem:[#allocation7 + $0xa8] sm:$0xff]
    %v111 = vld [vmem:[#allocation7 + $0xb0] sm:$0xff]
    %v112 = vld [vmem:[#allocation7 + $0xb8] sm:$0xff]
    %v113 = vld [vmem:[#allocation7 + $0xc0] sm:$0xff]
    %v114 = vld [vmem:[#allocation7 + $0xc8] sm:$0xff]
    %v115 = vld [vmem:[#allocation7 + $0xd0] sm:$0xff]
    %v116 = vld [vmem:[#allocation7 + $0xd8] sm:$0xff]
    %v117 = vld [vmem:[#allocation7 + $0xe0] sm:$0xff]
    %v118 = vld [vmem:[#allocation7 + $0xe8] sm:$0xff]
    %v119 = vld [vmem:[#allocation7 + $0xf0] sm:$0xff]
    %v120 = vld [vmem:[#allocation7 + $0xf8] sm:$0xff]
    %v121 = vld [vmem:[#allocation7 + $0x100] sm:$0xff]
    %v122 = vld [vmem:[#allocation7 + $0x108] sm:$0xff]
    %v123 = vld [vmem:[#allocation7 + $0x110] sm:$0xff]
    %v124 = vld [vmem:[#allocation7 + $0x118] sm:$0xff]
    %v125 = vld [vmem:[#allocation7 + $0x120] sm:$0xff]
    %v126 = vld [vmem:[#allocation7 + $0x128] sm:$0xff]
    %v127 = vld [vmem:[#allocation7 + $0x130] sm:$0xff]
    %v128 = vld [vmem:[#allocation7 + $0x138] sm:$0xff]
    %v129 = vld [vmem:[#allocation7 + $0x140] sm:$0xff]
    %v130 = vld [vmem:[#allocation7 + $0x148] sm:$0xff]
    %v131 = vld [vmem:[#allocation7 + $0x150] sm:$0xff]
    %v132 = vld [vmem:[#allocation7 + $0x158] sm:$0xff]
    %v133 = vld [vmem:[#allocation7 + $0x160] sm:$0xff]
    %v134 = vld [vmem:[#allocation7 + $0x168] sm:$0xff]
    %v135 = vld [vmem:[#allocation7 + $0x170] sm:$0xff]
    %v136 = vld [vmem:[#allocation7 + $0x178] sm:$0xff]
    %v137 = vld [vmem:[#allocation7 + $0x180] sm:$0xff]
    %v138 = vld [vmem:[#allocation7 + $0x188] sm:$0xff]
    %v139 = vld [vmem:[#allocation7 + $0x190] sm:$0xff]
    %v140 = vld [vmem:[#allocation7 + $0x198] sm:$0xff]
    %v141 = vld [vmem:[#allocation7 + $0x1a0] sm:$0xff]
    %v142 = vld [vmem:[#allocation7 + $0x1a8] sm:$0xff]
    %v143 = vld [vmem:[#allocation7 + $0x1b0] sm:$0xff]
    %v144 = vld [vmem:[#allocation7 + $0x1b8] sm:$0xff]
    %v145 = vld [vmem:[#allocation7 + $0x1c0] sm:$0xff]
    %v146 = vld [vmem:[#allocation7 + $0x1c8] sm:$0xff]
    %v147 = vld [vmem:[#allocation7 + $0x1d0] sm:$0xff]
    %v148 = vld [vmem:[#allocation7 + $0x1d8] sm:$0xff]
    %v149 = vld [vmem:[#allocation7 + $0x1e0] sm:$0xff]
    %v150 = vld [vmem:[#allocation7 + $0x1e8] sm:$0xff]
    %v151 = vld [vmem:[#allocation7 + $0x1f0] sm:$0xff]
    %v152 = vld [vmem:[#allocation7 + $0x1f8] sm:$0xff]
    %v153 = vld [vmem:[#allocation9] sm:$0xff]
    %v154 = vld [vmem:[#allocation9 + $0x8] sm:$0xff]
    %v155 = vld [vmem:[#allocation9 + $0x10] sm:$0xff]
    %v156 = vld [vmem:[#allocation9 + $0x18] sm:$0xff]
    %v157 = vld [vmem:[#allocation9 + $0x20] sm:$0xff]
    %v158 = vld [vmem:[#allocation9 + $0x28] sm:$0xff]
    %v159 = vld [vmem:[#allocation9 + $0x30] sm:$0xff]
    %v160 = vld [vmem:[#allocation9 + $0x38] sm:$0xff]
    %v161 = vld [vmem:[#allocation9 + $0x40] sm:$0xff]
    %v162 = vld [vmem:[#allocation9 + $0x48] sm:$0xff]
    %v163 = vld [vmem:[#allocation9 + $0x50] sm:$0xff]
    %v164 = vld [vmem:[#allocation9 + $0x58] sm:$0xff]
    %v165 = vld [vmem:[#allocation9 + $0x60] sm:$0xff]
    %v166 = vld [vmem:[#allocation9 + $0x68] sm:$0xff]
    %v167 = vld [vmem:[#allocation9 + $0x70] sm:$0xff]
    %v168 = vld [vmem:[#allocation9 + $0x78] sm:$0xff]
    %v169 = vld [vmem:[#allocation9 + $0x80] sm:$0xff]
    %v170 = vld [vmem:[#allocation9 + $0x88] sm:$0xff]
    %v171 = vld [vmem:[#allocation9 + $0x90] sm:$0xff]
    %v172 = vld [vmem:[#allocation9 + $0x98] sm:$0xff]
    %v173 = vld [vmem:[#allocation9 + $0xa0] sm:$0xff]
    %v174 = vld [vmem:[#allocation9 + $0xa8] sm:$0xff]
    %v175 = vld [vmem:[#allocation9 + $0xb0] sm:$0xff]
    %v176 = vld [vmem:[#allocation9 + $0xb8] sm:$0xff]
    %v177 = vld [vmem:[#allocation9 + $0xc0] sm:$0xff]
    %v178 = vld [vmem:[#allocation9 + $0xc8] sm:$0xff]
    %v179 = vld [vmem:[#allocation9 + $0xd0] sm:$0xff]
    %v180 = vld [vmem:[#allocation9 + $0xd8] sm:$0xff]
    %v181 = vld [vmem:[#allocation9 + $0xe0] sm:$0xff]
    %v182 = vld [vmem:[#allocation9 + $0xe8] sm:$0xff]
    %v183 = vld [vmem:[#allocation9 + $0xf0] sm:$0xff]
    %v184 = vld [vmem:[#allocation9 + $0xf8] sm:$0xff]
    %v185 = vld [vmem:[#allocation9 + $0x100] sm:$0xff]
    %v186 = vld [vmem:[#allocation9 + $0x108] sm:$0xff]
    %v187 = vld [vmem:[#allocation9 + $0x110] sm:$0xff]
    %v188 = vld [vmem:[#allocation9 + $0x118] sm:$0xff]
    %v189 = vld [vmem:[#allocation9 + $0x120] sm:$0xff]
    %v190 = vld [vmem:[#allocation9 + $0x128] sm:$0xff]
    %v191 = vld [vmem:[#allocation9 + $0x130] sm:$0xff]
    %v192 = vld [vmem:[#allocation9 + $0x138] sm:$0xff]
    %v193 = vld [vmem:[#allocation9 + $0x140] sm:$0xff]
    %v194 = vld [vmem:[#allocation9 + $0x148] sm:$0xff]
    %v195 = vld [vmem:[#allocation9 + $0x150] sm:$0xff]
    %v196 = vld [vmem:[#allocation9 + $0x158] sm:$0xff]
    %v197 = vld [vmem:[#allocation9 + $0x160] sm:$0xff]
    %v198 = vld [vmem:[#allocation9 + $0x168] sm:$0xff]
    %v199 = vld [vmem:[#allocation9 + $0x170] sm:$0xff]
    %v200 = vld [vmem:[#allocation9 + $0x178] sm:$0xff]
    %v201 = vld [vmem:[#allocation9 + $0x180] sm:$0xff]
    %v202 = vld [vmem:[#allocation9 + $0x188] sm:$0xff]
    %v203 = vld [vmem:[#allocation9 + $0x190] sm:$0xff]
    %v204 = vld [vmem:[#allocation9 + $0x198] sm:$0xff]
    %v205 = vld [vmem:[#allocation9 + $0x1a0] sm:$0xff]
    %v206 = vld [vmem:[#allocation9 + $0x1a8] sm:$0xff]
    %v207 = vld [vmem:[#allocation9 + $0x1b0] sm:$0xff]
    %v208 = vld [vmem:[#allocation9 + $0x1b8] sm:$0xff]
    %v209 = vld [vmem:[#allocation9 + $0x1c0] sm:$0xff]
    %v210 = vld [vmem:[#allocation9 + $0x1c8] sm:$0xff]
    %v211 = vld [vmem:[#allocation9 + $0x1d0] sm:$0xff]
    %v212 = vld [vmem:[#allocation9 + $0x1d8] sm:$0xff]
    %v213 = vld [vmem:[#allocation9 + $0x1e0] sm:$0xff]
    %v214 = vld [vmem:[#allocation9 + $0x1e8] sm:$0xff]
    %v215 = vld [vmem:[#allocation9 + $0x1f0] sm:$0xff]
    %v216 = vld [vmem:[#allocation9 + $0x1f8] sm:$0xff]
    %v217 = vld [vmem:[#allocation10] sm:$0xf]
    %v219 = vlaneseq
    %v220 = vshrl.u32 %v219, 7
    %v221 = vsub.s32 0, %v220
    %v222 = vrot.slane %v217, %v221
    %v223 = vlaneseq
    %v224 = vshrl.u32 %v223, 7
    %v225 = vsub.s32 1, %v224
    %v226 = vrot.slane %v217, %v225
    %v227 = vlaneseq
    %v228 = vshrl.u32 %v227, 7
    %v229 = vsub.s32 2, %v228
    %v230 = vrot.slane %v217, %v229
    %v231 = vlaneseq
    %v232 = vshrl.u32 %v231, 7
    %v233 = vsub.s32 3, %v232
    %v234 = vrot.slane %v217, %v233
    %v239 = vld [vmem:[#allocation4] sm:$0xff]
    %v240 = vld [vmem:[#allocation2] sm:$0xff]
    %v241 = vld [vmem:[#allocation3] sm:$0xff]
    %242 = vmatprep.subr.mxu0 %v154
    %243 = vmatpush1.msra.mxu0 %v153
    %244 = vmatprep.subr.mxu0 %v158
    %245 = vmatpush1.msra.mxu0 %v157
    %246 = vmatprep.subr.mxu0 %v162
    %247 = vmatpush1.msra.mxu0 %v161
    %248 = vmatprep.subr.mxu0 %v166
    %249 = vmatpush1.msra.mxu0 %v165
    %250 = vmatprep.subr.mxu0 %v170
    %251 = vmatpush1.msra.mxu0 %v169
    %252 = vmatprep.subr.mxu0 %v174
    %253 = vmatpush1.msra.mxu0 %v173
    %254 = vmatprep.subr.mxu0 %v178
    %255 = vmatpush1.msra.mxu0 %v177
    %256 = vmatprep.subr.mxu0 %v182
    %257 = vmatpush1.msra.mxu0 %v181
    %258 = vmatprep.subr.mxu0 %v186
    %259 = vmatpush1.msra.mxu0 %v185
    %260 = vmatprep.subr.mxu0 %v190
    %261 = vmatpush1.msra.mxu0 %v189
    %262 = vmatprep.subr.mxu0 %v194
    %263 = vmatpush1.msra.mxu0 %v193
    %264 = vmatprep.subr.mxu0 %v198
    %265 = vmatpush1.msra.mxu0 %v197
    %266 = vmatprep.subr.mxu0 %v202
    %267 = vmatpush1.msra.mxu0 %v201
    %268 = vmatprep.subr.mxu0 %v206
    %269 = vmatpush1.msra.mxu0 %v205
    %270 = vmatprep.subr.mxu0 %v210
    %271 = vmatpush1.msra.mxu0 %v209
    %272 = vmatprep.subr.mxu0 %v214
    %273 = vmatpush1.msra.mxu0 %v213
    %274 = vmatprep.subr.mxu0 0.0
    %275 = vmatpush1.msra.mxu0 0.0
    %276 = vmatprep.subr.mxu0 0.0
    %277 = vmatpush1.msra.mxu0 0.0
    %278 = vmatprep.subr.mxu0 0.0
    %279 = vmatpush1.msra.mxu0 0.0
    %280 = vmatprep.subr.mxu0 0.0
    %281 = vmatpush1.msra.mxu0 0.0
    %282 = vmatprep.subr.mxu0 0.0
    %283 = vmatpush1.msra.mxu0 0.0
    %284 = vmatprep.subr.mxu0 0.0
    %285 = vmatpush1.msra.mxu0 0.0
    %286 = vmatprep.subr.mxu0 0.0
    %287 = vmatpush1.msra.mxu0 0.0
    %288 = vmatprep.subr.mxu0 0.0
    %289 = vmatpush1.msra.mxu0 0.0
    %290 = vmatprep.subr.mxu0 0.0
    %291 = vmatpush1.msra.mxu0 0.0
    %292 = vmatprep.subr.mxu0 0.0
    %293 = vmatpush1.msra.mxu0 0.0
    %294 = vmatprep.subr.mxu0 0.0
    %295 = vmatpush1.msra.mxu0 0.0
    %296 = vmatprep.subr.mxu0 0.0
    %297 = vmatpush1.msra.mxu0 0.0
    %298 = vmatprep.subr.mxu0 0.0
    %299 = vmatpush1.msra.mxu0 0.0
    %300 = vmatprep.subr.mxu0 0.0
    %301 = vmatpush1.msra.mxu0 0.0
    %302 = vmatprep.subr.mxu0 0.0
    %303 = vmatpush1.msra.mxu0 0.0
    %304 = vmatprep.subr.mxu0 0.0
    %305 = vmatpush1.msra.mxu0 0.0
    %306 = vmatprep.mubr.f32.mxu0 0.0
    %307 = vmatmul.mubr.f32.gmra.mrb[0].mxu0 %v240
    %v308 = vpop.f32.mrb[0].mxu0
    %v309 = vadd.f32 0.0, %v308
    %v310 = vpop.f32.mrb[0].mxu0
    %v311 = vadd.f32 0.0, %v310
    %312 = vdwg.mxu0
    %313 = vmatprep.subr.mxu0 %v156
    %314 = vmatpush1.msra.mxu0 %v155
    %315 = vmatprep.subr.mxu0 %v160
    %316 = vmatpush1.msra.mxu0 %v159
    %317 = vmatprep.subr.mxu0 %v164
    %318 = vmatpush1.msra.mxu0 %v163
    %319 = vmatprep.subr.mxu0 %v168
    %320 = vmatpush1.msra.mxu0 %v167
    %321 = vmatprep.subr.mxu0 %v172
    %322 = vmatpush1.msra.mxu0 %v171
    %323 = vmatprep.subr.mxu0 %v176
    %324 = vmatpush1.msra.mxu0 %v175
    %325 = vmatprep.subr.mxu0 %v180
    %326 = vmatpush1.msra.mxu0 %v179
    %327 = vmatprep.subr.mxu0 %v184
    %328 = vmatpush1.msra.mxu0 %v183
    %329 = vmatprep.subr.mxu0 %v188
    %330 = vmatpush1.msra.mxu0 %v187
    %331 = vmatprep.subr.mxu0 %v192
    %332 = vmatpush1.msra.mxu0 %v191
    %333 = vmatprep.subr.mxu0 %v196
    %334 = vmatpush1.msra.mxu0 %v195
    %335 = vmatprep.subr.mxu0 %v200
    %336 = vmatpush1.msra.mxu0 %v199
    %337 = vmatprep.subr.mxu0 %v204
    %338 = vmatpush1.msra.mxu0 %v203
    %339 = vmatprep.subr.mxu0 %v208
    %340 = vmatpush1.msra.mxu0 %v207
    %341 = vmatprep.subr.mxu0 %v212
    %342 = vmatpush1.msra.mxu0 %v211
    %343 = vmatprep.subr.mxu0 %v216
    %344 = vmatpush1.msra.mxu0 %v215
    %345 = vmatprep.subr.mxu0 0.0
    %346 = vmatpush1.msra.mxu0 0.0
    %347 = vmatprep.subr.mxu0 0.0
    %348 = vmatpush1.msra.mxu0 0.0
    %349 = vmatprep.subr.mxu0 0.0
    %350 = vmatpush1.msra.mxu0 0.0
    %351 = vmatprep.subr.mxu0 0.0
    %352 = vmatpush1.msra.mxu0 0.0
    %353 = vmatprep.subr.mxu0 0.0
    %354 = vmatpush1.msra.mxu0 0.0
    %355 = vmatprep.subr.mxu0 0.0
    %356 = vmatpush1.msra.mxu0 0.0
    %357 = vmatprep.subr.mxu0 0.0
    %358 = vmatpush1.msra.mxu0 0.0
    %359 = vmatprep.subr.mxu0 0.0
    %360 = vmatpush1.msra.mxu0 0.0
    %361 = vmatprep.subr.mxu0 0.0
    %362 = vmatpush1.msra.mxu0 0.0
    %363 = vmatprep.subr.mxu0 0.0
    %364 = vmatpush1.msra.mxu0 0.0
    %365 = vmatprep.subr.mxu0 0.0
    %366 = vmatpush1.msra.mxu0 0.0
    %367 = vmatprep.subr.mxu0 0.0
    %368 = vmatpush1.msra.mxu0 0.0
    %369 = vmatprep.subr.mxu0 0.0
    %370 = vmatpush1.msra.mxu0 0.0
    %371 = vmatprep.subr.mxu0 0.0
    %372 = vmatpush1.msra.mxu0 0.0
    %373 = vmatprep.subr.mxu0 0.0
    %374 = vmatpush1.msra.mxu0 0.0
    %375 = vmatprep.subr.mxu0 0.0
    %376 = vmatpush1.msra.mxu0 0.0
    %377 = vmatprep.mubr.f32.mxu0 0.0
    %378 = vmatmul.mubr.f32.gmra.mrb[0].mxu0 %v240
    %v379 = vpop.f32.mrb[0].mxu0
    %v380 = vadd.f32 0.0, %v379
    %v381 = vpop.f32.mrb[0].mxu0
    %v382 = vadd.f32 0.0, %v381
    %383 = vdwg.mxu0
    %384 = vmatprep.subr.mxu0 %v90
    %385 = vmatpush1.msra.mxu0 %v89
    %386 = vmatprep.subr.mxu0 %v94
    %387 = vmatpush1.msra.mxu0 %v93
    %388 = vmatprep.subr.mxu0 %v98
    %389 = vmatpush1.msra.mxu0 %v97
    %390 = vmatprep.subr.mxu0 %v102
    %391 = vmatpush1.msra.mxu0 %v101
    %392 = vmatprep.subr.mxu0 %v106
    %393 = vmatpush1.msra.mxu0 %v105
    %394 = vmatprep.subr.mxu0 %v110
    %395 = vmatpush1.msra.mxu0 %v109
    %396 = vmatprep.subr.mxu0 %v114
    %397 = vmatpush1.msra.mxu0 %v113
    %398 = vmatprep.subr.mxu0 %v118
    %399 = vmatpush1.msra.mxu0 %v117
    %400 = vmatprep.subr.mxu0 %v122
    %401 = vmatpush1.msra.mxu0 %v121
    %402 = vmatprep.subr.mxu0 %v126
    %403 = vmatpush1.msra.mxu0 %v125
    %404 = vmatprep.subr.mxu0 %v130
    %405 = vmatpush1.msra.mxu0 %v129
    %406 = vmatprep.subr.mxu0 %v134
    %407 = vmatpush1.msra.mxu0 %v133
    %408 = vmatprep.subr.mxu0 %v138
    %409 = vmatpush1.msra.mxu0 %v137
    %410 = vmatprep.subr.mxu0 %v142
    %411 = vmatpush1.msra.mxu0 %v141
    %412 = vmatprep.subr.mxu0 %v146
    %413 = vmatpush1.msra.mxu0 %v145
    %414 = vmatprep.subr.mxu0 %v150
    %415 = vmatpush1.msra.mxu0 %v149
    %416 = vmatprep.subr.mxu0 0.0
    %417 = vmatpush1.msra.mxu0 0.0
    %418 = vmatprep.subr.mxu0 0.0
    %419 = vmatpush1.msra.mxu0 0.0
    %420 = vmatprep.subr.mxu0 0.0
    %421 = vmatpush1.msra.mxu0 0.0
    %422 = vmatprep.subr.mxu0 0.0
    %423 = vmatpush1.msra.mxu0 0.0
    %424 = vmatprep.subr.mxu0 0.0
    %425 = vmatpush1.msra.mxu0 0.0
    %426 = vmatprep.subr.mxu0 0.0
    %427 = vmatpush1.msra.mxu0 0.0
    %428 = vmatprep.subr.mxu0 0.0
    %429 = vmatpush1.msra.mxu0 0.0
    %430 = vmatprep.subr.mxu0 0.0
    %431 = vmatpush1.msra.mxu0 0.0
    %432 = vmatprep.subr.mxu0 0.0
    %433 = vmatpush1.msra.mxu0 0.0
    %434 = vmatprep.subr.mxu0 0.0
    %435 = vmatpush1.msra.mxu0 0.0
    %436 = vmatprep.subr.mxu0 0.0
    %437 = vmatpush1.msra.mxu0 0.0
    %438 = vmatprep.subr.mxu0 0.0
    %439 = vmatpush1.msra.mxu0 0.0
    %440 = vmatprep.subr.mxu0 0.0
    %441 = vmatpush1.msra.mxu0 0.0
    %442 = vmatprep.subr.mxu0 0.0
    %443 = vmatpush1.msra.mxu0 0.0
    %444 = vmatprep.subr.mxu0 0.0
    %445 = vmatpush1.msra.mxu0 0.0
    %446 = vmatprep.subr.mxu0 0.0
    %447 = vmatpush1.msra.mxu0 0.0
    %448 = vmatprep.mubr.f32.mxu0 0.0
    %449 = vmatmul.mubr.f32.gmra.mrb[0].mxu0 %v239
    %v450 = vpop.f32.mrb[0].mxu0
    %v451 = vadd.f32 %v309, %v450
    %v452 = vpop.f32.mrb[0].mxu0
    %v453 = vadd.f32 %v311, %v452
    %454 = vdwg.mxu0
    %455 = vmatprep.subr.mxu0 %v92
    %456 = vmatpush1.msra.mxu0 %v91
    %457 = vmatprep.subr.mxu0 %v96
    %458 = vmatpush1.msra.mxu0 %v95
    %459 = vmatprep.subr.mxu0 %v100
    %460 = vmatpush1.msra.mxu0 %v99
    %461 = vmatprep.subr.mxu0 %v104
    %462 = vmatpush1.msra.mxu0 %v103
    %463 = vmatprep.subr.mxu0 %v108
    %464 = vmatpush1.msra.mxu0 %v107
    %465 = vmatprep.subr.mxu0 %v112
    %466 = vmatpush1.msra.mxu0 %v111
    %467 = vmatprep.subr.mxu0 %v116
    %468 = vmatpush1.msra.mxu0 %v115
    %469 = vmatprep.subr.mxu0 %v120
    %470 = vmatpush1.msra.mxu0 %v119
    %471 = vmatprep.subr.mxu0 %v124
    %472 = vmatpush1.msra.mxu0 %v123
    %473 = vmatprep.subr.mxu0 %v128
    %474 = vmatpush1.msra.mxu0 %v127
    %475 = vmatprep.subr.mxu0 %v132
    %476 = vmatpush1.msra.mxu0 %v131
    %477 = vmatprep.subr.mxu0 %v136
    %478 = vmatpush1.msra.mxu0 %v135
    %479 = vmatprep.subr.mxu0 %v140
    %480 = vmatpush1.msra.mxu0 %v139
    %481 = vmatprep.subr.mxu0 %v144
    %482 = vmatpush1.msra.mxu0 %v143
    %483 = vmatprep.subr.mxu0 %v148
    %484 = vmatpush1.msra.mxu0 %v147
    %485 = vmatprep.subr.mxu0 %v152
    %486 = vmatpush1.msra.mxu0 %v151
    %487 = vmatprep.subr.mxu0 0.0
    %488 = vmatpush1.msra.mxu0 0.0
    %489 = vmatprep.subr.mxu0 0.0
    %490 = vmatpush1.msra.mxu0 0.0
    %491 = vmatprep.subr.mxu0 0.0
    %492 = vmatpush1.msra.mxu0 0.0
    %493 = vmatprep.subr.mxu0 0.0
    %494 = vmatpush1.msra.mxu0 0.0
    %495 = vmatprep.subr.mxu0 0.0
    %496 = vmatpush1.msra.mxu0 0.0
    %497 = vmatprep.subr.mxu0 0.0
    %498 = vmatpush1.msra.mxu0 0.0
    %499 = vmatprep.subr.mxu0 0.0
    %500 = vmatpush1.msra.mxu0 0.0
    %501 = vmatprep.subr.mxu0 0.0
    %502 = vmatpush1.msra.mxu0 0.0
    %503 = vmatprep.subr.mxu0 0.0
    %504 = vmatpush1.msra.mxu0 0.0
    %505 = vmatprep.subr.mxu0 0.0
    %506 = vmatpush1.msra.mxu0 0.0
    %507 = vmatprep.subr.mxu0 0.0
    %508 = vmatpush1.msra.mxu0 0.0
    %509 = vmatprep.subr.mxu0 0.0
    %510 = vmatpush1.msra.mxu0 0.0
    %511 = vmatprep.subr.mxu0 0.0
    %512 = vmatpush1.msra.mxu0 0.0
    %513 = vmatprep.subr.mxu0 0.0
    %514 = vmatpush1.msra.mxu0 0.0
    %515 = vmatprep.subr.mxu0 0.0
    %516 = vmatpush1.msra.mxu0 0.0
    %517 = vmatprep.subr.mxu0 0.0
    %518 = vmatpush1.msra.mxu0 0.0
    %519 = vmatprep.mubr.f32.mxu0 0.0
    %520 = vmatmul.mubr.f32.gmra.mrb[0].mxu0 %v239
    %v521 = vpop.f32.mrb[0].mxu0
    %v522 = vadd.f32 %v380, %v521
    %v523 = vpop.f32.mrb[0].mxu0
    %v524 = vadd.f32 %v382, %v523
    %525 = vdwg.mxu0
    %v526 = vadd.f32 %v451, %v222
    %v527 = vadd.f32 %v453, %v226
    %v528 = vadd.f32 %v522, %v230
    %v529 = vadd.f32 %v524, %v234
    %v530 = vxor.u32 %v526, 2147483648
    %v531 = vmul.f32 %v530, 1.442695
    %v532 = vpow.pop %v531
    %v533 = vadd.f32 %v532, 1.0
    %v534 = vrcp.pop %v533
    %v535 = vmul.f32 1.0, %v534
    %v536 = vxor.u32 %v527, 2147483648
    %v537 = vmul.f32 %v536, 1.442695
    %v538 = vpow.pop %v537
    %v539 = vadd.f32 %v538, 1.0
    %v540 = vrcp.pop %v539
    %v541 = vmul.f32 1.0, %v540
    %v542 = vtanh.pop %v528
    %v543 = vxor.u32 %v529, 2147483648
    %v544 = vmul.f32 %v543, 1.442695
    %v545 = vpow.pop %v544
    %v546 = vadd.f32 %v545, 1.0
    %v547 = vrcp.pop %v546
    %v548 = vmul.f32 1.0, %v547
    %v549 = vmul.f32 %v541, %v241
    %v550 = vmul.f32 %v535, %v542
    %v551 = vadd.f32 %v549, %v550
    %v552 = vtanh.pop %v551
    %v553 = vmul.f32 %v548, %v552
    %554 = vst [vmem:[#allocation2] sm:$0xff] %v553
    %555 = vst [vmem:[#allocation3] sm:$0xff] %v551
    %556 = vst [vmem:[#allocation12] sm:$0xff] %v553
    %s557 = scalar_lea.vmem [#allocation4], 8
    %v558 = vld [vmem:[%s557] sm:$0xff]
    %v559 = vld [vmem:[#allocation2] sm:$0xff]
    %v560 = vld [vmem:[#allocation3] sm:$0xff]
    %561 = vmatprep.subr.mxu0 %v154
    %562 = vmatpush1.msra.mxu0 %v153
    %563 = vmatprep.subr.mxu0 %v158
    %564 = vmatpush1.msra.mxu0 %v157
    %565 = vmatprep.subr.mxu0 %v162
    %566 = vmatpush1.msra.mxu0 %v161
    %567 = vmatprep.subr.mxu0 %v166
    %568 = vmatpush1.msra.mxu0 %v165
    %569 = vmatprep.subr.mxu0 %v170
    %570 = vmatpush1.msra.mxu0 %v169
    %571 = vmatprep.subr.mxu0 %v174
    %572 = vmatpush1.msra.mxu0 %v173
    %573 = vmatprep.subr.mxu0 %v178
    %574 = vmatpush1.msra.mxu0 %v177
    %575 = vmatprep.subr.mxu0 %v182
    %576 = vmatpush1.msra.mxu0 %v181
    %577 = vmatprep.subr.mxu0 %v186
    %578 = vmatpush1.msra.mxu0 %v185
    %579 = vmatprep.subr.mxu0 %v190
    %580 = vmatpush1.msra.mxu0 %v189
    %581 = vmatprep.subr.mxu0 %v194
    %582 = vmatpush1.msra.mxu0 %v193
    %583 = vmatprep.subr.mxu0 %v198
    %584 = vmatpush1.msra.mxu0 %v197
    %585 = vmatprep.subr.mxu0 %v202
    %586 = vmatpush1.msra.mxu0 %v201
    %587 = vmatprep.subr.mxu0 %v206
    %588 = vmatpush1.msra.mxu0 %v205
    %589 = vmatprep.subr.mxu0 %v210
    %590 = vmatpush1.msra.mxu0 %v209
    %591 = vmatprep.subr.mxu0 %v214
    %592 = vmatpush1.msra.mxu0 %v213
    %593 = vmatprep.subr.mxu0 0.0
    %594 = vmatpush1.msra.mxu0 0.0
    %595 = vmatprep.subr.mxu0 0.0
    %596 = vmatpush1.msra.mxu0 0.0
    %597 = vmatprep.subr.mxu0 0.0
    %598 = vmatpush1.msra.mxu0 0.0
    %599 = vmatprep.subr.mxu0 0.0
    %600 = vmatpush1.msra.mxu0 0.0
    %601 = vmatprep.subr.mxu0 0.0
    %602 = vmatpush1.msra.mxu0 0.0
    %603 = vmatprep.subr.mxu0 0.0
    %604 = vmatpush1.msra.mxu0 0.0
    %605 = vmatprep.subr.mxu0 0.0
    %606 = vmatpush1.msra.mxu0 0.0
    %607 = vmatprep.subr.mxu0 0.0
    %608 = vmatpush1.msra.mxu0 0.0
    %609 = vmatprep.subr.mxu0 0.0
    %610 = vmatpush1.msra.mxu0 0.0
    %611 = vmatprep.subr.mxu0 0.0
    %612 = vmatpush1.msra.mxu0 0.0
    %613 = vmatprep.subr.mxu0 0.0
    %614 = vmatpush1.msra.mxu0 0.0
    %615 = vmatprep.subr.mxu0 0.0
    %616 = vmatpush1.msra.mxu0 0.0
    %617 = vmatprep.subr.mxu0 0.0
    %618 = vmatpush1.msra.mxu0 0.0
    %619 = vmatprep.subr.mxu0 0.0
    %620 = vmatpush1.msra.mxu0 0.0
    %621 = vmatprep.subr.mxu0 0.0
    %622 = vmatpush1.msra.mxu0 0.0
    %623 = vmatprep.subr.mxu0 0.0
    %624 = vmatpush1.msra.mxu0 0.0
    %625 = vmatprep.mubr.f32.mxu0 0.0
    %626 = vmatmul.mubr.f32.gmra.mrb[0].mxu0 %v559
    %v627 = vpop.f32.mrb[0].mxu0
    %v628 = vadd.f32 0.0, %v627
    %v629 = vpop.f32.mrb[0].mxu0
    %v630 = vadd.f32 0.0, %v629
    %631 = vdwg.mxu0
    %632 = vmatprep.subr.mxu0 %v156
    %633 = vmatpush1.msra.mxu0 %v155
    %634 = vmatprep.subr.mxu0 %v160
    %635 = vmatpush1.msra.mxu0 %v159
    %636 = vmatprep.subr.mxu0 %v164
    %637 = vmatpush1.msra.mxu0 %v163
    %638 = vmatprep.subr.mxu0 %v168
    %639 = vmatpush1.msra.mxu0 %v167
    %640 = vmatprep.subr.mxu0 %v172
    %641 = vmatpush1.msra.mxu0 %v171
    %642 = vmatprep.subr.mxu0 %v176
    %643 = vmatpush1.msra.mxu0 %v175
    %644 = vmatprep.subr.mxu0 %v180
    %645 = vmatpush1.msra.mxu0 %v179
    %646 = vmatprep.subr.mxu0 %v184
    %647 = vmatpush1.msra.mxu0 %v183
    %648 = vmatprep.subr.mxu0 %v188
    %649 = vmatpush1.msra.mxu0 %v187
    %650 = vmatprep.subr.mxu0 %v192
    %651 = vmatpush1.msra.mxu0 %v191
    %652 = vmatprep.subr.mxu0 %v196
    %653 = vmatpush1.msra.mxu0 %v195
    %654 = vmatprep.subr.mxu0 %v200
    %655 = vmatpush1.msra.mxu0 %v199
    %656 = vmatprep.subr.mxu0 %v204
    %657 = vmatpush1.msra.mxu0 %v203
    %658 = vmatprep.subr.mxu0 %v208
    %659 = vmatpush1.msra.mxu0 %v207
    %660 = vmatprep.subr.mxu0 %v212
    %661 = vmatpush1.msra.mxu0 %v211
    %662 = vmatprep.subr.mxu0 %v216
    %663 = vmatpush1.msra.mxu0 %v215
    %664 = vmatprep.subr.mxu0 0.0
    %665 = vmatpush1.msra.mxu0 0.0
    %666 = vmatprep.subr.mxu0 0.0
    %667 = vmatpush1.msra.mxu0 0.0
    %668 = vmatprep.subr.mxu0 0.0
    %669 = vmatpush1.msra.mxu0 0.0
    %670 = vmatprep.subr.mxu0 0.0
    %671 = vmatpush1.msra.mxu0 0.0
    %672 = vmatprep.subr.mxu0 0.0
    %673 = vmatpush1.msra.mxu0 0.0
    %674 = vmatprep.subr.mxu0 0.0
    %675 = vmatpush1.msra.mxu0 0.0
    %676 = vmatprep.subr.mxu0 0.0
    %677 = vmatpush1.msra.mxu0 0.0
    %678 = vmatprep.subr.mxu0 0.0
    %679 = vmatpush1.msra.mxu0 0.0
    %680 = vmatprep.subr.mxu0 0.0
    %681 = vmatpush1.msra.mxu0 0.0
    %682 = vmatprep.subr.mxu0 0.0
    %683 = vmatpush1.msra.mxu0 0.0
    %684 = vmatprep.subr.mxu0 0.0
    %685 = vmatpush1.msra.mxu0 0.0
    %686 = vmatprep.subr.mxu0 0.0
    %687 = vmatpush1.msra.mxu0 0.0
    %688 = vmatprep.subr.mxu0 0.0
    %689 = vmatpush1.msra.mxu0 0.0
    %690 = vmatprep.subr.mxu0 0.0
    %691 = vmatpush1.msra.mxu0 0.0
    %692 = vmatprep.subr.mxu0 0.0
    %693 = vmatpush1.msra.mxu0 0.0
    %694 = vmatprep.subr.mxu0 0.0
    %695 = vmatpush1.msra.mxu0 0.0
    %696 = vmatprep.mubr.f32.mxu0 0.0
    %697 = vmatmul.mubr.f32.gmra.mrb[0].mxu0 %v559
    %v698 = vpop.f32.mrb[0].mxu0
    %v699 = vadd.f32 0.0, %v698
    %v700 = vpop.f32.mrb[0].mxu0
    %v701 = vadd.f32 0.0, %v700
    %702 = vdwg.mxu0
    %703 = vmatprep.subr.mxu0 %v90
    %704 = vmatpush1.msra.mxu0 %v89
    %705 = vmatprep.subr.mxu0 %v94
    %706 = vmatpush1.msra.mxu0 %v93
    %707 = vmatprep.subr.mxu0 %v98
    %708 = vmatpush1.msra.mxu0 %v97
    %709 = vmatprep.subr.mxu0 %v102
    %710 = vmatpush1.msra.mxu0 %v101
    %711 = vmatprep.subr.mxu0 %v106
    %712 = vmatpush1.msra.mxu0 %v105
    %713 = vmatprep.subr.mxu0 %v110
    %714 = vmatpush1.msra.mxu0 %v109
    %715 = vmatprep.subr.mxu0 %v114
    %716 = vmatpush1.msra.mxu0 %v113
    %717 = vmatprep.subr.mxu0 %v118
    %718 = vmatpush1.msra.mxu0 %v117
    %719 = vmatprep.subr.mxu0 %v122
    %720 = vmatpush1.msra.mxu0 %v121
    %721 = vmatprep.subr.mxu0 %v126
    %722 = vmatpush1.msra.mxu0 %v125
    %723 = vmatprep.subr.mxu0 %v130
    %724 = vmatpush1.msra.mxu0 %v129
    %725 = vmatprep.subr.mxu0 %v134
    %726 = vmatpush1.msra.mxu0 %v133
    %727 = vmatprep.subr.mxu0 %v138
    %728 = vmatpush1.msra.mxu0 %v137
    %729 = vmatprep.subr.mxu0 %v142
    %730 = vmatpush1.msra.mxu0 %v141
    %731 = vmatprep.subr.mxu0 %v146
    %732 = vmatpush1.msra.mxu0 %v145
    %733 = vmatprep.subr.mxu0 %v150
    %734 = vmatpush1.msra.mxu0 %v149
    %735 = vmatprep.subr.mxu0 0.0
    %736 = vmatpush1.msra.mxu0 0.0
    %737 = vmatprep.subr.mxu0 0.0
    %738 = vmatpush1.msra.mxu0 0.0
    %739 = vmatprep.subr.mxu0 0.0
    %740 = vmatpush1.msra.mxu0 0.0
    %741 = vmatprep.subr.mxu0 0.0
    %742 = vmatpush1.msra.mxu0 0.0
    %743 = vmatprep.subr.mxu0 0.0
    %744 = vmatpush1.msra.mxu0 0.0
    %745 = vmatprep.subr.mxu0 0.0
    %746 = vmatpush1.msra.mxu0 0.0
    %747 = vmatprep.subr.mxu0 0.0
    %748 = vmatpush1.msra.mxu0 0.0
    %749 = vmatprep.subr.mxu0 0.0
    %750 = vmatpush1.msra.mxu0 0.0
    %751 = vmatprep.subr.mxu0 0.0
    %752 = vmatpush1.msra.mxu0 0.0
    %753 = vmatprep.subr.mxu0 0.0
    %754 = vmatpush1.msra.mxu0 0.0
    %755 = vmatprep.subr.mxu0 0.0
    %756 = vmatpush1.msra.mxu0 0.0
    %757 = vmatprep.subr.mxu0 0.0
    %758 = vmatpush1.msra.mxu0 0.0
    %759 = vmatprep.subr.mxu0 0.0
    %760 = vmatpush1.msra.mxu0 0.0
    %761 = vmatprep.subr.mxu0 0.0
    %762 = vmatpush1.msra.mxu0 0.0
    %763 = vmatprep.subr.mxu0 0.0
    %764 = vmatpush1.msra.mxu0 0.0
    %765 = vmatprep.subr.mxu0 0.0
    %766 = vmatpush1.msra.mxu0 0.0
    %767 = vmatprep.mubr.f32.mxu0 0.0
    %768 = vmatmul.mubr.f32.gmra.mrb[0].mxu0 %v558
    %v769 = vpop.f32.mrb[0].mxu0
    %v770 = vadd.f32 %v628, %v769
    %v771 = vpop.f32.mrb[0].mxu0
    %v772 = vadd.f32 %v630, %v771
    %773 = vdwg.mxu0
    %774 = vmatprep.subr.mxu0 %v92
    %775 = vmatpush1.msra.mxu0 %v91
    %776 = vmatprep.subr.mxu0 %v96
    %777 = vmatpush1.msra.mxu0 %v95
    %778 = vmatprep.subr.mxu0 %v100
    %779 = vmatpush1.msra.mxu0 %v99
    %780 = vmatprep.subr.mxu0 %v104
    %781 = vmatpush1.msra.mxu0 %v103
    %782 = vmatprep.subr.mxu0 %v108
    %783 = vmatpush1.msra.mxu0 %v107
    %784 = vmatprep.subr.mxu0 %v112
    %785 = vmatpush1.msra.mxu0 %v111
    %786 = vmatprep.subr.mxu0 %v116
    %787 = vmatpush1.msra.mxu0 %v115
    %788 = vmatprep.subr.mxu0 %v120
    %789 = vmatpush1.msra.mxu0 %v119
    %790 = vmatprep.subr.mxu0 %v124
    %791 = vmatpush1.msra.mxu0 %v123
    %792 = vmatprep.subr.mxu0 %v128
    %793 = vmatpush1.msra.mxu0 %v127
    %794 = vmatprep.subr.mxu0 %v132
    %795 = vmatpush1.msra.mxu0 %v131
    %796 = vmatprep.subr.mxu0 %v136
    %797 = vmatpush1.msra.mxu0 %v135
    %798 = vmatprep.subr.mxu0 %v140
    %799 = vmatpush1.msra.mxu0 %v139
    %800 = vmatprep.subr.mxu0 %v144
    %801 = vmatpush1.msra.mxu0 %v143
    %802 = vmatprep.subr.mxu0 %v148
    %803 = vmatpush1.msra.mxu0 %v147
    %804 = vmatprep.subr.mxu0 %v152
    %805 = vmatpush1.msra.mxu0 %v151
    %806 = vmatprep.subr.mxu0 0.0
    %807 = vmatpush1.msra.mxu0 0.0
    %808 = vmatprep.subr.mxu0 0.0
    %809 = vmatpush1.msra.mxu0 0.0
    %810 = vmatprep.subr.mxu0 0.0
    %811 = vmatpush1.msra.mxu0 0.0
    %812 = vmatprep.subr.mxu0 0.0
    %813 = vmatpush1.msra.mxu0 0.0
    %814 = vmatprep.subr.mxu0 0.0
    %815 = vmatpush1.msra.mxu0 0.0
    %816 = vmatprep.subr.mxu0 0.0
    %817 = vmatpush1.msra.mxu0 0.0
    %818 = vmatprep.subr.mxu0 0.0
    %819 = vmatpush1.msra.mxu0 0.0
    %820 = vmatprep.subr.mxu0 0.0
    %821 = vmatpush1.msra.mxu0 0.0
    %822 = vmatprep.subr.mxu0 0.0
    %823 = vmatpush1.msra.mxu0 0.0
    %824 = vmatprep.subr.mxu0 0.0
    %825 = vmatpush1.msra.mxu0 0.0
    %826 = vmatprep.subr.mxu0 0.0
    %827 = vmatpush1.msra.mxu0 0.0
    %828 = vmatprep.subr.mxu0 0.0
    %829 = vmatpush1.msra.mxu0 0.0
    %830 = vmatprep.subr.mxu0 0.0
    %831 = vmatpush1.msra.mxu0 0.0
    %832 = vmatprep.subr.mxu0 0.0
    %833 = vmatpush1.msra.mxu0 0.0
    %834 = vmatprep.subr.mxu0 0.0
    %835 = vmatpush1.msra.mxu0 0.0
    %836 = vmatprep.subr.mxu0 0.0
    %837 = vmatpush1.msra.mxu0 0.0
    %838 = vmatprep.mubr.f32.mxu0 0.0
    %839 = vmatmul.mubr.f32.gmra.mrb[0].mxu0 %v558
    %v840 = vpop.f32.mrb[0].mxu0
    %v841 = vadd.f32 %v699, %v840
    %v842 = vpop.f32.mrb[0].mxu0
    %v843 = vadd.f32 %v701, %v842
    %844 = vdwg.mxu0
    %v845 = vadd.f32 %v770, %v222
    %v846 = vadd.f32 %v772, %v226
    %v847 = vadd.f32 %v841, %v230
    %v848 = vadd.f32 %v843, %v234
    %v849 = vxor.u32 %v845, 2147483648
    %v850 = vmul.f32 %v849, 1.442695
    %v851 = vpow.pop %v850
    %v852 = vadd.f32 %v851, 1.0
    %v853 = vrcp.pop %v852
    %v854 = vmul.f32 1.0, %v853
    %v855 = vxor.u32 %v846, 2147483648
    %v856 = vmul.f32 %v855, 1.442695
    %v857 = vpow.pop %v856
    %v858 = vadd.f32 %v857, 1.0
    %v859 = vrcp.pop %v858
    %v860 = vmul.f32 1.0, %v859
    %v861 = vtanh.pop %v847
    %v862 = vxor.u32 %v848, 2147483648
    %v863 = vmul.f32 %v862, 1.442695
    %v864 = vpow.pop %v863
    %v865 = vadd.f32 %v864, 1.0
    %v866 = vrcp.pop %v865
    %v867 = vmul.f32 1.0, %v866
    %v868 = vmul.f32 %v860, %v560
    %v869 = vmul.f32 %v854, %v861
    %v870 = vadd.f32 %v868, %v869
    %v871 = vtanh.pop %v870
    %v872 = vmul.f32 %v867, %v871
    %873 = vst [vmem:[#allocation2] sm:$0xff] %v872
    %874 = vst [vmem:[#allocation3] sm:$0xff] %v870
    %s875 = scalar_lea.vmem [#allocation12], 8
    %876 = vst [vmem:[%s875] sm:$0xff] %v872
    %s877 = scalar_lea.vmem [#allocation4], 16
    %v878 = vld [vmem:[%s877] sm:$0xff]
    %v879 = vld [vmem:[#allocation2] sm:$0xff]
    %v880 = vld [vmem:[#allocation3] sm:$0xff]
    %881 = vmatprep.subr.mxu0 %v154
    %882 = vmatpush1.msra.mxu0 %v153
    %883 = vmatprep.subr.mxu0 %v158
    %884 = vmatpush1.msra.mxu0 %v157
    %885 = vmatprep.subr.mxu0 %v162
    %886 = vmatpush1.msra.mxu0 %v161
    %887 = vmatprep.subr.mxu0 %v166
    %888 = vmatpush1.msra.mxu0 %v165
    %889 = vmatprep.subr.mxu0 %v170
    %890 = vmatpush1.msra.mxu0 %v169
    %891 = vmatprep.subr.mxu0 %v174
    %892 = vmatpush1.msra.mxu0 %v173
    %893 = vmatprep.subr.mxu0 %v178
    %894 = vmatpush1.msra.mxu0 %v177
    %895 = vmatprep.subr.mxu0 %v182
    %896 = vmatpush1.msra.mxu0 %v181
    %897 = vmatprep.subr.mxu0 %v186
    %898 = vmatpush1.msra.mxu0 %v185
    %899 = vmatprep.subr.mxu0 %v190
    %900 = vmatpush1.msra.mxu0 %v189
    %901 = vmatprep.subr.mxu0 %v194
    %902 = vmatpush1.msra.mxu0 %v193
    %903 = vmatprep.subr.mxu0 %v198
    %904 = vmatpush1.msra.mxu0 %v197
    %905 = vmatprep.subr.mxu0 %v202
    %906 = vmatpush1.msra.mxu0 %v201
    %907 = vmatprep.subr.mxu0 %v206
    %908 = vmatpush1.msra.mxu0 %v205
    %909 = vmatprep.subr.mxu0 %v210
    %910 = vmatpush1.msra.mxu0 %v209
    %911 = vmatprep.subr.mxu0 %v214
    %912 = vmatpush1.msra.mxu0 %v213
    %913 = vmatprep.subr.mxu0 0.0
    %914 = vmatpush1.msra.mxu0 0.0
    %915 = vmatprep.subr.mxu0 0.0
    %916 = vmatpush1.msra.mxu0 0.0
    %917 = vmatprep.subr.mxu0 0.0
    %918 = vmatpush1.msra.mxu0 0.0
    %919 = vmatprep.subr.mxu0 0.0
    %920 = vmatpush1.msra.mxu0 0.0
    %921 = vmatprep.subr.mxu0 0.0
    %922 = vmatpush1.msra.mxu0 0.0
    %923 = vmatprep.subr.mxu0 0.0
    %924 = vmatpush1.msra.mxu0 0.0
    %925 = vmatprep.subr.mxu0 0.0
    %926 = vmatpush1.msra.mxu0 0.0
    %927 = vmatprep.subr.mxu0 0.0
    %928 = vmatpush1.msra.mxu0 0.0
    %929 = vmatprep.subr.mxu0 0.0
    %930 = vmatpush1.msra.mxu0 0.0
    %931 = vmatprep.subr.mxu0 0.0
    %932 = vmatpush1.msra.mxu0 0.0
    %933 = vmatprep.subr.mxu0 0.0
    %934 = vmatpush1.msra.mxu0 0.0
    %935 = vmatprep.subr.mxu0 0.0
    %936 = vmatpush1.msra.mxu0 0.0
    %937 = vmatprep.subr.mxu0 0.0
    %938 = vmatpush1.msra.mxu0 0.0
    %939 = vmatprep.subr.mxu0 0.0
    %940 = vmatpush1.msra.mxu0 0.0
    %941 = vmatprep.subr.mxu0 0.0
    %942 = vmatpush1.msra.mxu0 0.0
    %943 = vmatprep.subr.mxu0 0.0
    %944 = vmatpush1.msra.mxu0 0.0
    %945 = vmatprep.mubr.f32.mxu0 0.0
    %946 = vmatmul.mubr.f32.gmra.mrb[0].mxu0 %v879
    %v947 = vpop.f32.mrb[0].mxu0
    %v948 = vadd.f32 0.0, %v947
    %v949 = vpop.f32.mrb[0].mxu0
    %v950 = vadd.f32 0.0, %v949
    %951 = vdwg.mxu0
    %952 = vmatprep.subr.mxu0 %v156
    %953 = vmatpush1.msra.mxu0 %v155
    %954 = vmatprep.subr.mxu0 %v160
    %955 = vmatpush1.msra.mxu0 %v159
    %956 = vmatprep.subr.mxu0 %v164
    %957 = vmatpush1.msra.mxu0 %v163
    %958 = vmatprep.subr.mxu0 %v168
    %959 = vmatpush1.msra.mxu0 %v167
    %960 = vmatprep.subr.mxu0 %v172
    %961 = vmatpush1.msra.mxu0 %v171
    %962 = vmatprep.subr.mxu0 %v176
    %963 = vmatpush1.msra.mxu0 %v175
    %964 = vmatprep.subr.mxu0 %v180
    %965 = vmatpush1.msra.mxu0 %v179
    %966 = vmatprep.subr.mxu0 %v184
    %967 = vmatpush1.msra.mxu0 %v183
    %968 = vmatprep.subr.mxu0 %v188
    %969 = vmatpush1.msra.mxu0 %v187
    %970 = vmatprep.subr.mxu0 %v192
    %971 = vmatpush1.msra.mxu0 %v191
    %972 = vmatprep.subr.mxu0 %v196
    %973 = vmatpush1.msra.mxu0 %v195
    %974 = vmatprep.subr.mxu0 %v200
    %975 = vmatpush1.msra.mxu0 %v199
    %976 = vmatprep.subr.mxu0 %v204
    %977 = vmatpush1.msra.mxu0 %v203
    %978 = vmatprep.subr.mxu0 %v208
    %979 = vmatpush1.msra.mxu0 %v207
    %980 = vmatprep.subr.mxu0 %v212
    %981 = vmatpush1.msra.mxu0 %v211
    %982 = vmatprep.subr.mxu0 %v216
    %983 = vmatpush1.msra.mxu0 %v215
    %984 = vmatprep.subr.mxu0 0.0
    %985 = vmatpush1.msra.mxu0 0.0
    %986 = vmatprep.subr.mxu0 0.0
    %987 = vmatpush1.msra.mxu0 0.0
    %988 = vmatprep.subr.mxu0 0.0
    %989 = vmatpush1.msra.mxu0 0.0
    %990 = vmatprep.subr.mxu0 0.0
    %991 = vmatpush1.msra.mxu0 0.0
    %992 = vmatprep.subr.mxu0 0.0
    %993 = vmatpush1.msra.mxu0 0.0
    %994 = vmatprep.subr.mxu0 0.0
    %995 = vmatpush1.msra.mxu0 0.0
    %996 = vmatprep.subr.mxu0 0.0
    %997 = vmatpush1.msra.mxu0 0.0
    %998 = vmatprep.subr.mxu0 0.0
    %999 = vmatpush1.msra.mxu0 0.0
    %1000 = vmatprep.subr.mxu0 0.0
    %1001 = vmatpush1.msra.mxu0 0.0
    %1002 = vmatprep.subr.mxu0 0.0
    %1003 = vmatpush1.msra.mxu0 0.0
    %1004 = vmatprep.subr.mxu0 0.0
    %1005 = vmatpush1.msra.mxu0 0.0
    %1006 = vmatprep.subr.mxu0 0.0
    %1007 = vmatpush1.msra.mxu0 0.0
    %1008 = vmatprep.subr.mxu0 0.0
    %1009 = vmatpush1.msra.mxu0 0.0
    %1010 = vmatprep.subr.mxu0 0.0
    %1011 = vmatpush1.msra.mxu0 0.0
    %1012 = vmatprep.subr.mxu0 0.0
    %1013 = vmatpush1.msra.mxu0 0.0
    %1014 = vmatprep.subr.mxu0 0.0
    %1015 = vmatpush1.msra.mxu0 0.0
    %1016 = vmatprep.mubr.f32.mxu0 0.0
    %1017 = vmatmul.mubr.f32.gmra.mrb[0].mxu0 %v879
    %v1018 = vpop.f32.mrb[0].mxu0
    %v1019 = vadd.f32 0.0, %v1018
    %v1020 = vpop.f32.mrb[0].mxu0
    %v1021 = vadd.f32 0.0, %v1020
    %1022 = vdwg.mxu0
    %1023 = vmatprep.subr.mxu0 %v90
    %1024 = vmatpush1.msra.mxu0 %v89
    %1025 = vmatprep.subr.mxu0 %v94
    %1026 = vmatpush1.msra.mxu0 %v93
    %1027 = vmatprep.subr.mxu0 %v98
    %1028 = vmatpush1.msra.mxu0 %v97
    %1029 = vmatprep.subr.mxu0 %v102
    %1030 = vmatpush1.msra.mxu0 %v101
    %1031 = vmatprep.subr.mxu0 %v106
    %1032 = vmatpush1.msra.mxu0 %v105
    %1033 = vmatprep.subr.mxu0 %v110
    %1034 = vmatpush1.msra.mxu0 %v109
    %1035 = vmatprep.subr.mxu0 %v114
    %1036 = vmatpush1.msra.mxu0 %v113
    %1037 = vmatprep.subr.mxu0 %v118
    %1038 = vmatpush1.msra.mxu0 %v117
    %1039 = vmatprep.subr.mxu0 %v122
    %1040 = vmatpush1.msra.mxu0 %v121
    %1041 = vmatprep.subr.mxu0 %v126
    %1042 = vmatpush1.msra.mxu0 %v125
    %1043 = vmatprep.subr.mxu0 %v130
    %1044 = vmatpush1.msra.mxu0 %v129
    %1045 = vmatprep.subr.mxu0 %v134
    %1046 = vmatpush1.msra.mxu0 %v133
    %1047 = vmatprep.subr.mxu0 %v138
    %1048 = vmatpush1.msra.mxu0 %v137
    %1049 = vmatprep.subr.mxu0 %v142
    %1050 = vmatpush1.msra.mxu0 %v141
    %1051 = vmatprep.subr.mxu0 %v146
    %1052 = vmatpush1.msra.mxu0 %v145
    %1053 = vmatprep.subr.mxu0 %v150
    %1054 = vmatpush1.msra.mxu0 %v149
    %1055 = vmatprep.subr.mxu0 0.0
    %1056 = vmatpush1.msra.mxu0 0.0
    %1057 = vmatprep.subr.mxu0 0.0
    %1058 = vmatpush1.msra.mxu0 0.0
    %1059 = vmatprep.subr.mxu0 0.0
    %1060 = vmatpush1.msra.mxu0 0.0
    %1061 = vmatprep.subr.mxu0 0.0
    %1062 = vmatpush1.msra.mxu0 0.0
    %1063 = vmatprep.subr.mxu0 0.0
    %1064 = vmatpush1.msra.mxu0 0.0
    %1065 = vmatprep.subr.mxu0 0.0
    %1066 = vmatpush1.msra.mxu0 0.0
    %1067 = vmatprep.subr.mxu0 0.0
    %1068 = vmatpush1.msra.mxu0 0.0
    %1069 = vmatprep.subr.mxu0 0.0
    %1070 = vmatpush1.msra.mxu0 0.0
    %1071 = vmatprep.subr.mxu0 0.0
    %1072 = vmatpush1.msra.mxu0 0.0
    %1073 = vmatprep.subr.mxu0 0.0
    %1074 = vmatpush1.msra.mxu0 0.0
    %1075 = vmatprep.subr.mxu0 0.0
    %1076 = vmatpush1.msra.mxu0 0.0
    %1077 = vmatprep.subr.mxu0 0.0
    %1078 = vmatpush1.msra.mxu0 0.0
    %1079 = vmatprep.subr.mxu0 0.0
    %1080 = vmatpush1.msra.mxu0 0.0
    %1081 = vmatprep.subr.mxu0 0.0
    %1082 = vmatpush1.msra.mxu0 0.0
    %1083 = vmatprep.subr.mxu0 0.0
    %1084 = vmatpush1.msra.mxu0 0.0
    %1085 = vmatprep.subr.mxu0 0.0
    %1086 = vmatpush1.msra.mxu0 0.0
    %1087 = vmatprep.mubr.f32.mxu0 0.0
    %1088 = vmatmul.mubr.f32.gmra.mrb[0].mxu0 %v878
    %v1089 = vpop.f32.mrb[0].mxu0
    %v1090 = vadd.f32 %v948, %v1089
    %v1091 = vpop.f32.mrb[0].mxu0
    %v1092 = vadd.f32 %v950, %v1091
    %1093 = vdwg.mxu0
    %1094 = vmatprep.subr.mxu0 %v92
    %1095 = vmatpush1.msra.mxu0 %v91
    %1096 = vmatprep.subr.mxu0 %v96
    %1097 = vmatpush1.msra.mxu0 %v95
    %1098 = vmatprep.subr.mxu0 %v100
    %1099 = vmatpush1.msra.mxu0 %v99
    %1100 = vmatprep.subr.mxu0 %v104
    %1101 = vmatpush1.msra.mxu0 %v103
    %1102 = vmatprep.subr.mxu0 %v108
    %1103 = vmatpush1.msra.mxu0 %v107
    %1104 = vmatprep.subr.mxu0 %v112
    %1105 = vmatpush1.msra.mxu0 %v111
    %1106 = vmatprep.subr.mxu0 %v116
    %1107 = vmatpush1.msra.mxu0 %v115
    %1108 = vmatprep.subr.mxu0 %v120
    %1109 = vmatpush1.msra.mxu0 %v119
    %1110 = vmatprep.subr.mxu0 %v124
    %1111 = vmatpush1.msra.mxu0 %v123
    %1112 = vmatprep.subr.mxu0 %v128
    %1113 = vmatpush1.msra.mxu0 %v127
    %1114 = vmatprep.subr.mxu0 %v132
    %1115 = vmatpush1.msra.mxu0 %v131
    %1116 = vmatprep.subr.mxu0 %v136
    %1117 = vmatpush1.msra.mxu0 %v135
    %1118 = vmatprep.subr.mxu0 %v140
    %1119 = vmatpush1.msra.mxu0 %v139
    %1120 = vmatprep.subr.mxu0 %v144
    %1121 = vmatpush1.msra.mxu0 %v143
    %1122 = vmatprep.subr.mxu0 %v148
    %1123 = vmatpush1.msra.mxu0 %v147
    %1124 = vmatprep.subr.mxu0 %v152
    %1125 = vmatpush1.msra.mxu0 %v151
    %1126 = vmatprep.subr.mxu0 0.0
    %1127 = vmatpush1.msra.mxu0 0.0
    %1128 = vmatprep.subr.mxu0 0.0
    %1129 = vmatpush1.msra.mxu0 0.0
    %1130 = vmatprep.subr.mxu0 0.0
    %1131 = vmatpush1.msra.mxu0 0.0
    %1132 = vmatprep.subr.mxu0 0.0
    %1133 = vmatpush1.msra.mxu0 0.0
    %1134 = vmatprep.subr.mxu0 0.0
    %1135 = vmatpush1.msra.mxu0 0.0
    %1136 = vmatprep.subr.mxu0 0.0
    %1137 = vmatpush1.msra.mxu0 0.0
    %1138 = vmatprep.subr.mxu0 0.0
    %1139 = vmatpush1.msra.mxu0 0.0
    %1140 = vmatprep.subr.mxu0 0.0
    %1141 = vmatpush1.msra.mxu0 0.0
    %1142 = vmatprep.subr.mxu0 0.0
    %1143 = vmatpush1.msra.mxu0 0.0
    %1144 = vmatprep.subr.mxu0 0.0
    %1145 = vmatpush1.msra.mxu0 0.0
    %1146 = vmatprep.subr.mxu0 0.0
    %1147 = vmatpush1.msra.mxu0 0.0
    %1148 = vmatprep.subr.mxu0 0.0
    %1149 = vmatpush1.msra.mxu0 0.0
    %1150 = vmatprep.subr.mxu0 0.0
    %1151 = vmatpush1.msra.mxu0 0.0
    %1152 = vmatprep.subr.mxu0 0.0
    %1153 = vmatpush1.msra.mxu0 0.0
    %1154 = vmatprep.subr.mxu0 0.0
    %1155 = vmatpush1.msra.mxu0 0.0
    %1156 = vmatprep.subr.mxu0 0.0
    %1157 = vmatpush1.msra.mxu0 0.0
    %1158 = vmatprep.mubr.f32.mxu0 0.0
    %1159 = vmatmul.mubr.f32.gmra.mrb[0].mxu0 %v878
    %v1160 = vpop.f32.mrb[0].mxu0
    %v1161 = vadd.f32 %v1019, %v1160
    %v1162 = vpop.f32.mrb[0].mxu0
    %v1163 = vadd.f32 %v1021, %v1162
    %1164 = vdwg.mxu0
    %v1165 = vadd.f32 %v1090, %v222
    %v1166 = vadd.f32 %v1092, %v226
    %v1167 = vadd.f32 %v1161, %v230
    %v1168 = vadd.f32 %v1163, %v234
    %v1169 = vxor.u32 %v1165, 2147483648
    %v1170 = vmul.f32 %v1169, 1.442695
    %v1171 = vpow.pop %v1170
    %v1172 = vadd.f32 %v1171, 1.0
    %v1173 = vrcp.pop %v1172
    %v1174 = vmul.f32 1.0, %v1173
    %v1175 = vxor.u32 %v1166, 2147483648
    %v1176 = vmul.f32 %v1175, 1.442695
    %v1177 = vpow.pop %v1176
    %v1178 = vadd.f32 %v1177, 1.0
    %v1179 = vrcp.pop %v1178
    %v1180 = vmul.f32 1.0, %v1179
    %v1181 = vtanh.pop %v1167
    %v1182 = vxor.u32 %v1168, 2147483648
    %v1183 = vmul.f32 %v1182, 1.442695
    %v1184 = vpow.pop %v1183
    %v1185 = vadd.f32 %v1184, 1.0
    %v1186 = vrcp.pop %v1185
    %v1187 = vmul.f32 1.0, %v1186
    %v1188 = vmul.f32 %v1180, %v880
    %v1189 = vmul.f32 %v1174, %v1181
    %v1190 = vadd.f32 %v1188, %v1189
    %v1191 = vtanh.pop %v1190
    %v1192 = vmul.f32 %v1187, %v1191
    %1193 = vst [vmem:[#allocation2] sm:$0xff] %v1192
    %1194 = vst [vmem:[#allocation3] sm:$0xff] %v1190
    %s1195 = scalar_lea.vmem [#allocation12], 16
    %1196 = vst [vmem:[%s1195] sm:$0xff] %v1192
    %s1197 = scalar_lea.vmem [#allocation4], 24
    %v1198 = vld [vmem:[%s1197] sm:$0xff]
    %v1199 = vld [vmem:[#allocation2] sm:$0xff]
    %v1200 = vld [vmem:[#allocation3] sm:$0xff]
    %1201 = vmatprep.subr.mxu0 %v154
    %1202 = vmatpush1.msra.mxu0 %v153
    %1203 = vmatprep.subr.mxu0 %v158
    %1204 = vmatpush1.msra.mxu0 %v157
    %1205 = vmatprep.subr.mxu0 %v162
    %1206 = vmatpush1.msra.mxu0 %v161
    %1207 = vmatprep.subr.mxu0 %v166
    %1208 = vmatpush1.msra.mxu0 %v165
    %1209 = vmatprep.subr.mxu0 %v170
    %1210 = vmatpush1.msra.mxu0 %v169
    %1211 = vmatprep.subr.mxu0 %v174
    %1212 = vmatpush1.msra.mxu0 %v173
    %1213 = vmatprep.subr.mxu0 %v178
    %1214 = vmatpush1.msra.mxu0 %v177
    %1215 = vmatprep.subr.mxu0 %v182
    %1216 = vmatpush1.msra.mxu0 %v181
    %1217 = vmatprep.subr.mxu0 %v186
    %1218 = vmatpush1.msra.mxu0 %v185
    %1219 = vmatprep.subr.mxu0 %v190
    %1220 = vmatpush1.msra.mxu0 %v189
    %1221 = vmatprep.subr.mxu0 %v194
    %1222 = vmatpush1.msra.mxu0 %v193
    %1223 = vmatprep.subr.mxu0 %v198
    %1224 = vmatpush1.msra.mxu0 %v197
    %1225 = vmatprep.subr.mxu0 %v202
    %1226 = vmatpush1.msra.mxu0 %v201
    %1227 = vmatprep.subr.mxu0 %v206
    %1228 = vmatpush1.msra.mxu0 %v205
    %1229 = vmatprep.subr.mxu0 %v210
    %1230 = vmatpush1.msra.mxu0 %v209
    %1231 = vmatprep.subr.mxu0 %v214
    %1232 = vmatpush1.msra.mxu0 %v213
    %1233 = vmatprep.subr.mxu0 0.0
    %1234 = vmatpush1.msra.mxu0 0.0
    %1235 = vmatprep.subr.mxu0 0.0
    %1236 = vmatpush1.msra.mxu0 0.0
    %1237 = vmatprep.subr.mxu0 0.0
    %1238 = vmatpush1.msra.mxu0 0.0
    %1239 = vmatprep.subr.mxu0 0.0
    %1240 = vmatpush1.msra.mxu0 0.0
    %1241 = vmatprep.subr.mxu0 0.0
    %1242 = vmatpush1.msra.mxu0 0.0
    %1243 = vmatprep.subr.mxu0 0.0
    %1244 = vmatpush1.msra.mxu0 0.0
    %1245 = vmatprep.subr.mxu0 0.0
    %1246 = vmatpush1.msra.mxu0 0.0
    %1247 = vmatprep.subr.mxu0 0.0
    %1248 = vmatpush1.msra.mxu0 0.0
    %1249 = vmatprep.subr.mxu0 0.0
    %1250 = vmatpush1.msra.mxu0 0.0
    %1251 = vmatprep.subr.mxu0 0.0
    %1252 = vmatpush1.msra.mxu0 0.0
    %1253 = vmatprep.subr.mxu0 0.0
    %1254 = vmatpush1.msra.mxu0 0.0
    %1255 = vmatprep.subr.mxu0 0.0
    %1256 = vmatpush1.msra.mxu0 0.0
    %1257 = vmatprep.subr.mxu0 0.0
    %1258 = vmatpush1.msra.mxu0 0.0
    %1259 = vmatprep.subr.mxu0 0.0
    %1260 = vmatpush1.msra.mxu0 0.0
    %1261 = vmatprep.subr.mxu0 0.0
    %1262 = vmatpush1.msra.mxu0 0.0
    %1263 = vmatprep.subr.mxu0 0.0
    %1264 = vmatpush1.msra.mxu0 0.0
    %1265 = vmatprep.mubr.f32.mxu0 0.0
    %1266 = vmatmul.mubr.f32.gmra.mrb[0].mxu0 %v1199
    %v1267 = vpop.f32.mrb[0].mxu0
    %v1268 = vadd.f32 0.0, %v1267
    %v1269 = vpop.f32.mrb[0].mxu0
    %v1270 = vadd.f32 0.0, %v1269
    %1271 = vdwg.mxu0
    %1272 = vmatprep.subr.mxu0 %v156
    %1273 = vmatpush1.msra.mxu0 %v155
    %1274 = vmatprep.subr.mxu0 %v160
    %1275 = vmatpush1.msra.mxu0 %v159
    %1276 = vmatprep.subr.mxu0 %v164
    %1277 = vmatpush1.msra.mxu0 %v163
    %1278 = vmatprep.subr.mxu0 %v168
    %1279 = vmatpush1.msra.mxu0 %v167
    %1280 = vmatprep.subr.mxu0 %v172
    %1281 = vmatpush1.msra.mxu0 %v171
    %1282 = vmatprep.subr.mxu0 %v176
    %1283 = vmatpush1.msra.mxu0 %v175
    %1284 = vmatprep.subr.mxu0 %v180
    %1285 = vmatpush1.msra.mxu0 %v179
    %1286 = vmatprep.subr.mxu0 %v184
    %1287 = vmatpush1.msra.mxu0 %v183
    %1288 = vmatprep.subr.mxu0 %v188
    %1289 = vmatpush1.msra.mxu0 %v187
    %1290 = vmatprep.subr.mxu0 %v192
    %1291 = vmatpush1.msra.mxu0 %v191
    %1292 = vmatprep.subr.mxu0 %v196
    %1293 = vmatpush1.msra.mxu0 %v195
    %1294 = vmatprep.subr.mxu0 %v200
    %1295 = vmatpush1.msra.mxu0 %v199
    %1296 = vmatprep.subr.mxu0 %v204
    %1297 = vmatpush1.msra.mxu0 %v203
    %1298 = vmatprep.subr.mxu0 %v208
    %1299 = vmatpush1.msra.mxu0 %v207
    %1300 = vmatprep.subr.mxu0 %v212
    %1301 = vmatpush1.msra.mxu0 %v211
    %1302 = vmatprep.subr.mxu0 %v216
    %1303 = vmatpush1.msra.mxu0 %v215
    %1304 = vmatprep.subr.mxu0 0.0
    %1305 = vmatpush1.msra.mxu0 0.0
    %1306 = vmatprep.subr.mxu0 0.0
    %1307 = vmatpush1.msra.mxu0 0.0
    %1308 = vmatprep.subr.mxu0 0.0
    %1309 = vmatpush1.msra.mxu0 0.0
    %1310 = vmatprep.subr.mxu0 0.0
    %1311 = vmatpush1.msra.mxu0 0.0
    %1312 = vmatprep.subr.mxu0 0.0
    %1313 = vmatpush1.msra.mxu0 0.0
    %1314 = vmatprep.subr.mxu0 0.0
    %1315 = vmatpush1.msra.mxu0 0.0
    %1316 = vmatprep.subr.mxu0 0.0
    %1317 = vmatpush1.msra.mxu0 0.0
    %1318 = vmatprep.subr.mxu0 0.0
    %1319 = vmatpush1.msra.mxu0 0.0
    %1320 = vmatprep.subr.mxu0 0.0
    %1321 = vmatpush1.msra.mxu0 0.0
    %1322 = vmatprep.subr.mxu0 0.0
    %1323 = vmatpush1.msra.mxu0 0.0
    %1324 = vmatprep.subr.mxu0 0.0
    %1325 = vmatpush1.msra.mxu0 0.0
    %1326 = vmatprep.subr.mxu0 0.0
    %1327 = vmatpush1.msra.mxu0 0.0
    %1328 = vmatprep.subr.mxu0 0.0
    %1329 = vmatpush1.msra.mxu0 0.0
    %1330 = vmatprep.subr.mxu0 0.0
    %1331 = vmatpush1.msra.mxu0 0.0
    %1332 = vmatprep.subr.mxu0 0.0
    %1333 = vmatpush1.msra.mxu0 0.0
    %1334 = vmatprep.subr.mxu0 0.0
    %1335 = vmatpush1.msra.mxu0 0.0
    %1336 = vmatprep.mubr.f32.mxu0 0.0
    %1337 = vmatmul.mubr.f32.gmra.mrb[0].mxu0 %v1199
    %v1338 = vpop.f32.mrb[0].mxu0
    %v1339 = vadd.f32 0.0, %v1338
    %v1340 = vpop.f32.mrb[0].mxu0
    %v1341 = vadd.f32 0.0, %v1340
    %1342 = vdwg.mxu0
    %1343 = vmatprep.subr.mxu0 %v90
    %1344 = vmatpush1.msra.mxu0 %v89
    %1345 = vmatprep.subr.mxu0 %v94
    %1346 = vmatpush1.msra.mxu0 %v93
    %1347 = vmatprep.subr.mxu0 %v98
    %1348 = vmatpush1.msra.mxu0 %v97
    %1349 = vmatprep.subr.mxu0 %v102
    %1350 = vmatpush1.msra.mxu0 %v101
    %1351 = vmatprep.subr.mxu0 %v106
    %1352 = vmatpush1.msra.mxu0 %v105
    %1353 = vmatprep.subr.mxu0 %v110
    %1354 = vmatpush1.msra.mxu0 %v109
    %1355 = vmatprep.subr.mxu0 %v114
    %1356 = vmatpush1.msra.mxu0 %v113
    %1357 = vmatprep.subr.mxu0 %v118
    %1358 = vmatpush1.msra.mxu0 %v117
    %1359 = vmatprep.subr.mxu0 %v122
    %1360 = vmatpush1.msra.mxu0 %v121
    %1361 = vmatprep.subr.mxu0 %v126
    %1362 = vmatpush1.msra.mxu0 %v125
    %1363 = vmatprep.subr.mxu0 %v130
    %1364 = vmatpush1.msra.mxu0 %v129
    %1365 = vmatprep.subr.mxu0 %v134
    %1366 = vmatpush1.msra.mxu0 %v133
    %1367 = vmatprep.subr.mxu0 %v138
    %1368 = vmatpush1.msra.mxu0 %v137
    %1369 = vmatprep.subr.mxu0 %v142
    %1370 = vmatpush1.msra.mxu0 %v141
    %1371 = vmatprep.subr.mxu0 %v146
    %1372 = vmatpush1.msra.mxu0 %v145
    %1373 = vmatprep.subr.mxu0 %v150
    %1374 = vmatpush1.msra.mxu0 %v149
    %1375 = vmatprep.subr.mxu0 0.0
    %1376 = vmatpush1.msra.mxu0 0.0
    %1377 = vmatprep.subr.mxu0 0.0
    %1378 = vmatpush1.msra.mxu0 0.0
    %1379 = vmatprep.subr.mxu0 0.0
    %1380 = vmatpush1.msra.mxu0 0.0
    %1381 = vmatprep.subr.mxu0 0.0
    %1382 = vmatpush1.msra.mxu0 0.0
    %1383 = vmatprep.subr.mxu0 0.0
    %1384 = vmatpush1.msra.mxu0 0.0
    %1385 = vmatprep.subr.mxu0 0.0
    %1386 = vmatpush1.msra.mxu0 0.0
    %1387 = vmatprep.subr.mxu0 0.0
    %1388 = vmatpush1.msra.mxu0 0.0
    %1389 = vmatprep.subr.mxu0 0.0
    %1390 = vmatpush1.msra.mxu0 0.0
    %1391 = vmatprep.subr.mxu0 0.0
    %1392 = vmatpush1.msra.mxu0 0.0
    %1393 = vmatprep.subr.mxu0 0.0
    %1394 = vmatpush1.msra.mxu0 0.0
    %1395 = vmatprep.subr.mxu0 0.0
    %1396 = vmatpush1.msra.mxu0 0.0
    %1397 = vmatprep.subr.mxu0 0.0
    %1398 = vmatpush1.msra.mxu0 0.0
    %1399 = vmatprep.subr.mxu0 0.0
    %1400 = vmatpush1.msra.mxu0 0.0
    %1401 = vmatprep.subr.mxu0 0.0
    %1402 = vmatpush1.msra.mxu0 0.0
    %1403 = vmatprep.subr.mxu0 0.0
    %1404 = vmatpush1.msra.mxu0 0.0
    %1405 = vmatprep.subr.mxu0 0.0
    %1406 = vmatpush1.msra.mxu0 0.0
    %1407 = vmatprep.mubr.f32.mxu0 0.0
    %1408 = vmatmul.mubr.f32.gmra.mrb[0].mxu0 %v1198
    %v1409 = vpop.f32.mrb[0].mxu0
    %v1410 = vadd.f32 %v1268, %v1409
    %v1411 = vpop.f32.mrb[0].mxu0
    %v1412 = vadd.f32 %v1270, %v1411
    %1413 = vdwg.mxu0
    %1414 = vmatprep.subr.mxu0 %v92
    %1415 = vmatpush1.msra.mxu0 %v91
    %1416 = vmatprep.subr.mxu0 %v96
    %1417 = vmatpush1.msra.mxu0 %v95
    %1418 = vmatprep.subr.mxu0 %v100
    %1419 = vmatpush1.msra.mxu0 %v99
    %1420 = vmatprep.subr.mxu0 %v104
    %1421 = vmatpush1.msra.mxu0 %v103
    %1422 = vmatprep.subr.mxu0 %v108
    %1423 = vmatpush1.msra.mxu0 %v107
    %1424 = vmatprep.subr.mxu0 %v112
    %1425 = vmatpush1.msra.mxu0 %v111
    %1426 = vmatprep.subr.mxu0 %v116
    %1427 = vmatpush1.msra.mxu0 %v115
    %1428 = vmatprep.subr.mxu0 %v120
    %1429 = vmatpush1.msra.mxu0 %v119
    %1430 = vmatprep.subr.mxu0 %v124
    %1431 = vmatpush1.msra.mxu0 %v123
    %1432 = vmatprep.subr.mxu0 %v128
    %1433 = vmatpush1.msra.mxu0 %v127
    %1434 = vmatprep.subr.mxu0 %v132
    %1435 = vmatpush1.msra.mxu0 %v131
    %1436 = vmatprep.subr.mxu0 %v136
    %1437 = vmatpush1.msra.mxu0 %v135
    %1438 = vmatprep.subr.mxu0 %v140
    %1439 = vmatpush1.msra.mxu0 %v139
    %1440 = vmatprep.subr.mxu0 %v144
    %1441 = vmatpush1.msra.mxu0 %v143
    %1442 = vmatprep.subr.mxu0 %v148
    %1443 = vmatpush1.msra.mxu0 %v147
    %1444 = vmatprep.subr.mxu0 %v152
    %1445 = vmatpush1.msra.mxu0 %v151
    %1446 = vmatprep.subr.mxu0 0.0
    %1447 = vmatpush1.msra.mxu0 0.0
    %1448 = vmatprep.subr.mxu0 0.0
    %1449 = vmatpush1.msra.mxu0 0.0
    %1450 = vmatprep.subr.mxu0 0.0
    %1451 = vmatpush1.msra.mxu0 0.0
    %1452 = vmatprep.subr.mxu0 0.0
    %1453 = vmatpush1.msra.mxu0 0.0
    %1454 = vmatprep.subr.mxu0 0.0
    %1455 = vmatpush1.msra.mxu0 0.0
    %1456 = vmatprep.subr.mxu0 0.0
    %1457 = vmatpush1.msra.mxu0 0.0
    %1458 = vmatprep.subr.mxu0 0.0
    %1459 = vmatpush1.msra.mxu0 0.0
    %1460 = vmatprep.subr.mxu0 0.0
    %1461 = vmatpush1.msra.mxu0 0.0
    %1462 = vmatprep.subr.mxu0 0.0
    %1463 = vmatpush1.msra.mxu0 0.0
    %1464 = vmatprep.subr.mxu0 0.0
    %1465 = vmatpush1.msra.mxu0 0.0
    %1466 = vmatprep.subr.mxu0 0.0
    %1467 = vmatpush1.msra.mxu0 0.0
    %1468 = vmatprep.subr.mxu0 0.0
    %1469 = vmatpush1.msra.mxu0 0.0
    %1470 = vmatprep.subr.mxu0 0.0
    %1471 = vmatpush1.msra.mxu0 0.0
    %1472 = vmatprep.subr.mxu0 0.0
    %1473 = vmatpush1.msra.mxu0 0.0
    %1474 = vmatprep.subr.mxu0 0.0
    %1475 = vmatpush1.msra.mxu0 0.0
    %1476 = vmatprep.subr.mxu0 0.0
    %1477 = vmatpush1.msra.mxu0 0.0
    %1478 = vmatprep.mubr.f32.mxu0 0.0
    %1479 = vmatmul.mubr.f32.gmra.mrb[0].mxu0 %v1198
    %v1480 = vpop.f32.mrb[0].mxu0
    %v1481 = vadd.f32 %v1339, %v1480
    %v1482 = vpop.f32.mrb[0].mxu0
    %v1483 = vadd.f32 %v1341, %v1482
    %1484 = vdwg.mxu0
    %v1485 = vadd.f32 %v1410, %v222
    %v1486 = vadd.f32 %v1412, %v226
    %v1487 = vadd.f32 %v1481, %v230
    %v1488 = vadd.f32 %v1483, %v234
    %v1489 = vxor.u32 %v1485, 2147483648
    %v1490 = vmul.f32 %v1489, 1.442695
    %v1491 = vpow.pop %v1490
    %v1492 = vadd.f32 %v1491, 1.0
    %v1493 = vrcp.pop %v1492
    %v1494 = vmul.f32 1.0, %v1493
    %v1495 = vxor.u32 %v1486, 2147483648
    %v1496 = vmul.f32 %v1495, 1.442695
    %v1497 = vpow.pop %v1496
    %v1498 = vadd.f32 %v1497, 1.0
    %v1499 = vrcp.pop %v1498
    %v1500 = vmul.f32 1.0, %v1499
    %v1501 = vtanh.pop %v1487
    %v1502 = vxor.u32 %v1488, 2147483648
    %v1503 = vmul.f32 %v1502, 1.442695
    %v1504 = vpow.pop %v1503
    %v1505 = vadd.f32 %v1504, 1.0
    %v1506 = vrcp.pop %v1505
    %v1507 = vmul.f32 1.0, %v1506
    %v1508 = vmul.f32 %v1500, %v1200
    %v1509 = vmul.f32 %v1494, %v1501
    %v1510 = vadd.f32 %v1508, %v1509
    %v1511 = vtanh.pop %v1510
    %v1512 = vmul.f32 %v1507, %v1511
    %1513 = vst [vmem:[#allocation2] sm:$0xff] %v1512
    %1514 = vst [vmem:[#allocation3] sm:$0xff] %v1510
    %s1515 = scalar_lea.vmem [#allocation12], 24
    %1516 = vst [vmem:[%s1515] sm:$0xff] %v1512
    %s1517 = scalar_lea.vmem [#allocation4], 32
    %v1518 = vld [vmem:[%s1517] sm:$0xff]
    %v1519 = vld [vmem:[#allocation2] sm:$0xff]
    %v1520 = vld [vmem:[#allocation3] sm:$0xff]
    %1521 = vmatprep.subr.mxu0 %v154
    %1522 = vmatpush1.msra.mxu0 %v153
    %1523 = vmatprep.subr.mxu0 %v158
    %1524 = vmatpush1.msra.mxu0 %v157
    %1525 = vmatprep.subr.mxu0 %v162
    %1526 = vmatpush1.msra.mxu0 %v161
    %1527 = vmatprep.subr.mxu0 %v166
    %1528 = vmatpush1.msra.mxu0 %v165
    %1529 = vmatprep.subr.mxu0 %v170
    %1530 = vmatpush1.msra.mxu0 %v169
    %1531 = vmatprep.subr.mxu0 %v174
    %1532 = vmatpush1.msra.mxu0 %v173
    %1533 = vmatprep.subr.mxu0 %v178
    %1534 = vmatpush1.msra.mxu0 %v177
    %1535 = vmatprep.subr.mxu0 %v182
    %1536 = vmatpush1.msra.mxu0 %v181
    %1537 = vmatprep.subr.mxu0 %v186
    %1538 = vmatpush1.msra.mxu0 %v185
    %1539 = vmatprep.subr.mxu0 %v190
    %1540 = vmatpush1.msra.mxu0 %v189
    %1541 = vmatprep.subr.mxu0 %v194
    %1542 = vmatpush1.msra.mxu0 %v193
    %1543 = vmatprep.subr.mxu0 %v198
    %1544 = vmatpush1.msra.mxu0 %v197
    %1545 = vmatprep.subr.mxu0 %v202
    %1546 = vmatpush1.msra.mxu0 %v201
    %1547 = vmatprep.subr.mxu0 %v206
    %1548 = vmatpush1.msra.mxu0 %v205
    %1549 = vmatprep.subr.mxu0 %v210
    %1550 = vmatpush1.msra.mxu0 %v209
    %1551 = vmatprep.subr.mxu0 %v214
    %1552 = vmatpush1.msra.mxu0 %v213
    %1553 = vmatprep.subr.mxu0 0.0
    %1554 = vmatpush1.msra.mxu0 0.0
    %1555 = vmatprep.subr.mxu0 0.0
    %1556 = vmatpush1.msra.mxu0 0.0
    %1557 = vmatprep.subr.mxu0 0.0
    %1558 = vmatpush1.msra.mxu0 0.0
    %1559 = vmatprep.subr.mxu0 0.0
    %1560 = vmatpush1.msra.mxu0 0.0
    %1561 = vmatprep.subr.mxu0 0.0
    %1562 = vmatpush1.msra.mxu0 0.0
    %1563 = vmatprep.subr.mxu0 0.0
    %1564 = vmatpush1.msra.mxu0 0.0
    %1565 = vmatprep.subr.mxu0 0.0
    %1566 = vmatpush1.msra.mxu0 0.0
    %1567 = vmatprep.subr.mxu0 0.0
    %1568 = vmatpush1.msra.mxu0 0.0
    %1569 = vmatprep.subr.mxu0 0.0
    %1570 = vmatpush1.msra.mxu0 0.0
    %1571 = vmatprep.subr.mxu0 0.0
    %1572 = vmatpush1.msra.mxu0 0.0
    %1573 = vmatprep.subr.mxu0 0.0
    %1574 = vmatpush1.msra.mxu0 0.0
    %1575 = vmatprep.subr.mxu0 0.0
    %1576 = vmatpush1.msra.mxu0 0.0
    %1577 = vmatprep.subr.mxu0 0.0
    %1578 = vmatpush1.msra.mxu0 0.0
    %1579 = vmatprep.subr.mxu0 0.0
    %1580 = vmatpush1.msra.mxu0 0.0
    %1581 = vmatprep.subr.mxu0 0.0
    %1582 = vmatpush1.msra.mxu0 0.0
    %1583 = vmatprep.subr.mxu0 0.0
    %1584 = vmatpush1.msra.mxu0 0.0
    %1585 = vmatprep.mubr.f32.mxu0 0.0
    %1586 = vmatmul.mubr.f32.gmra.mrb[0].mxu0 %v1519
    %v1587 = vpop.f32.mrb[0].mxu0
    %v1588 = vadd.f32 0.0, %v1587
    %v1589 = vpop.f32.mrb[0].mxu0
    %v1590 = vadd.f32 0.0, %v1589
    %1591 = vdwg.mxu0
    %1592 = vmatprep.subr.mxu0 %v156
    %1593 = vmatpush1.msra.mxu0 %v155
    %1594 = vmatprep.subr.mxu0 %v160
    %1595 = vmatpush1.msra.mxu0 %v159
    %1596 = vmatprep.subr.mxu0 %v164
    %1597 = vmatpush1.msra.mxu0 %v163
    %1598 = vmatprep.subr.mxu0 %v168
    %1599 = vmatpush1.msra.mxu0 %v167
    %1600 = vmatprep.subr.mxu0 %v172
    %1601 = vmatpush1.msra.mxu0 %v171
    %1602 = vmatprep.subr.mxu0 %v176
    %1603 = vmatpush1.msra.mxu0 %v175
    %1604 = vmatprep.subr.mxu0 %v180
    %1605 = vmatpush1.msra.mxu0 %v179
    %1606 = vmatprep.subr.mxu0 %v184
    %1607 = vmatpush1.msra.mxu0 %v183
    %1608 = vmatprep.subr.mxu0 %v188
    %1609 = vmatpush1.msra.mxu0 %v187
    %1610 = vmatprep.subr.mxu0 %v192
    %1611 = vmatpush1.msra.mxu0 %v191
    %1612 = vmatprep.subr.mxu0 %v196
    %1613 = vmatpush1.msra.mxu0 %v195
    %1614 = vmatprep.subr.mxu0 %v200
    %1615 = vmatpush1.msra.mxu0 %v199
    %1616 = vmatprep.subr.mxu0 %v204
    %1617 = vmatpush1.msra.mxu0 %v203
    %1618 = vmatprep.subr.mxu0 %v208
    %1619 = vmatpush1.msra.mxu0 %v207
    %1620 = vmatprep.subr.mxu0 %v212
    %1621 = vmatpush1.msra.mxu0 %v211
    %1622 = vmatprep.subr.mxu0 %v216
    %1623 = vmatpush1.msra.mxu0 %v215
    %1624 = vmatprep.subr.mxu0 0.0
    %1625 = vmatpush1.msra.mxu0 0.0
    %1626 = vmatprep.subr.mxu0 0.0
    %1627 = vmatpush1.msra.mxu0 0.0
    %1628 = vmatprep.subr.mxu0 0.0
    %1629 = vmatpush1.msra.mxu0 0.0
    %1630 = vmatprep.subr.mxu0 0.0
    %1631 = vmatpush1.msra.mxu0 0.0
    %1632 = vmatprep.subr.mxu0 0.0
    %1633 = vmatpush1.msra.mxu0 0.0
    %1634 = vmatprep.subr.mxu0 0.0
    %1635 = vmatpush1.msra.mxu0 0.0
    %1636 = vmatprep.subr.mxu0 0.0
    %1637 = vmatpush1.msra.mxu0 0.0
    %1638 = vmatprep.subr.mxu0 0.0
    %1639 = vmatpush1.msra.mxu0 0.0
    %1640 = vmatprep.subr.mxu0 0.0
    %1641 = vmatpush1.msra.mxu0 0.0
    %1642 = vmatprep.subr.mxu0 0.0
    %1643 = vmatpush1.msra.mxu0 0.0
    %1644 = vmatprep.subr.mxu0 0.0
    %1645 = vmatpush1.msra.mxu0 0.0
    %1646 = vmatprep.subr.mxu0 0.0
    %1647 = vmatpush1.msra.mxu0 0.0
    %1648 = vmatprep.subr.mxu0 0.0
    %1649 = vmatpush1.msra.mxu0 0.0
    %1650 = vmatprep.subr.mxu0 0.0
    %1651 = vmatpush1.msra.mxu0 0.0
    %1652 = vmatprep.subr.mxu0 0.0
    %1653 = vmatpush1.msra.mxu0 0.0
    %1654 = vmatprep.subr.mxu0 0.0
    %1655 = vmatpush1.msra.mxu0 0.0
    %1656 = vmatprep.mubr.f32.mxu0 0.0
    %1657 = vmatmul.mubr.f32.gmra.mrb[0].mxu0 %v1519
    %v1658 = vpop.f32.mrb[0].mxu0
    %v1659 = vadd.f32 0.0, %v1658
    %v1660 = vpop.f32.mrb[0].mxu0
    %v1661 = vadd.f32 0.0, %v1660
    %1662 = vdwg.mxu0
    %1663 = vmatprep.subr.mxu0 %v90
    %1664 = vmatpush1.msra.mxu0 %v89
    %1665 = vmatprep.subr.mxu0 %v94
    %1666 = vmatpush1.msra.mxu0 %v93
    %1667 = vmatprep.subr.mxu0 %v98
    %1668 = vmatpush1.msra.mxu0 %v97
    %1669 = vmatprep.subr.mxu0 %v102
    %1670 = vmatpush1.msra.mxu0 %v101
    %1671 = vmatprep.subr.mxu0 %v106
    %1672 = vmatpush1.msra.mxu0 %v105
    %1673 = vmatprep.subr.mxu0 %v110
    %1674 = vmatpush1.msra.mxu0 %v109
    %1675 = vmatprep.subr.mxu0 %v114
    %1676 = vmatpush1.msra.mxu0 %v113
    %1677 = vmatprep.subr.mxu0 %v118
    %1678 = vmatpush1.msra.mxu0 %v117
    %1679 = vmatprep.subr.mxu0 %v122
    %1680 = vmatpush1.msra.mxu0 %v121
    %1681 = vmatprep.subr.mxu0 %v126
    %1682 = vmatpush1.msra.mxu0 %v125
    %1683 = vmatprep.subr.mxu0 %v130
    %1684 = vmatpush1.msra.mxu0 %v129
    %1685 = vmatprep.subr.mxu0 %v134
    %1686 = vmatpush1.msra.mxu0 %v133
    %1687 = vmatprep.subr.mxu0 %v138
    %1688 = vmatpush1.msra.mxu0 %v137
    %1689 = vmatprep.subr.mxu0 %v142
    %1690 = vmatpush1.msra.mxu0 %v141
    %1691 = vmatprep.subr.mxu0 %v146
    %1692 = vmatpush1.msra.mxu0 %v145
    %1693 = vmatprep.subr.mxu0 %v150
    %1694 = vmatpush1.msra.mxu0 %v149
    %1695 = vmatprep.subr.mxu0 0.0
    %1696 = vmatpush1.msra.mxu0 0.0
    %1697 = vmatprep.subr.mxu0 0.0
    %1698 = vmatpush1.msra.mxu0 0.0
    %1699 = vmatprep.subr.mxu0 0.0
    %1700 = vmatpush1.msra.mxu0 0.0
    %1701 = vmatprep.subr.mxu0 0.0
    %1702 = vmatpush1.msra.mxu0 0.0
    %1703 = vmatprep.subr.mxu0 0.0
    %1704 = vmatpush1.msra.mxu0 0.0
    %1705 = vmatprep.subr.mxu0 0.0
    %1706 = vmatpush1.msra.mxu0 0.0
    %1707 = vmatprep.subr.mxu0 0.0
    %1708 = vmatpush1.msra.mxu0 0.0
    %1709 = vmatprep.subr.mxu0 0.0
    %1710 = vmatpush1.msra.mxu0 0.0
    %1711 = vmatprep.subr.mxu0 0.0
    %1712 = vmatpush1.msra.mxu0 0.0
    %1713 = vmatprep.subr.mxu0 0.0
    %1714 = vmatpush1.msra.mxu0 0.0
    %1715 = vmatprep.subr.mxu0 0.0
    %1716 = vmatpush1.msra.mxu0 0.0
    %1717 = vmatprep.subr.mxu0 0.0
    %1718 = vmatpush1.msra.mxu0 0.0
    %1719 = vmatprep.subr.mxu0 0.0
    %1720 = vmatpush1.msra.mxu0 0.0
    %1721 = vmatprep.subr.mxu0 0.0
    %1722 = vmatpush1.msra.mxu0 0.0
    %1723 = vmatprep.subr.mxu0 0.0
    %1724 = vmatpush1.msra.mxu0 0.0
    %1725 = vmatprep.subr.mxu0 0.0
    %1726 = vmatpush1.msra.mxu0 0.0
    %1727 = vmatprep.mubr.f32.mxu0 0.0
    %1728 = vmatmul.mubr.f32.gmra.mrb[0].mxu0 %v1518
    %v1729 = vpop.f32.mrb[0].mxu0
    %v1730 = vadd.f32 %v1588, %v1729
    %v1731 = vpop.f32.mrb[0].mxu0
    %v1732 = vadd.f32 %v1590, %v1731
    %1733 = vdwg.mxu0
    %1734 = vmatprep.subr.mxu0 %v92
    %1735 = vmatpush1.msra.mxu0 %v91
    %1736 = vmatprep.subr.mxu0 %v96
    %1737 = vmatpush1.msra.mxu0 %v95
    %1738 = vmatprep.subr.mxu0 %v100
    %1739 = vmatpush1.msra.mxu0 %v99
    %1740 = vmatprep.subr.mxu0 %v104
    %1741 = vmatpush1.msra.mxu0 %v103
    %1742 = vmatprep.subr.mxu0 %v108
    %1743 = vmatpush1.msra.mxu0 %v107
    %1744 = vmatprep.subr.mxu0 %v112
    %1745 = vmatpush1.msra.mxu0 %v111
    %1746 = vmatprep.subr.mxu0 %v116
    %1747 = vmatpush1.msra.mxu0 %v115
    %1748 = vmatprep.subr.mxu0 %v120
    %1749 = vmatpush1.msra.mxu0 %v119
    %1750 = vmatprep.subr.mxu0 %v124
    %1751 = vmatpush1.msra.mxu0 %v123
    %1752 = vmatprep.subr.mxu0 %v128
    %1753 = vmatpush1.msra.mxu0 %v127
    %1754 = vmatprep.subr.mxu0 %v132
    %1755 = vmatpush1.msra.mxu0 %v131
    %1756 = vmatprep.subr.mxu0 %v136
    %1757 = vmatpush1.msra.mxu0 %v135
    %1758 = vmatprep.subr.mxu0 %v140
    %1759 = vmatpush1.msra.mxu0 %v139
    %1760 = vmatprep.subr.mxu0 %v144
    %1761 = vmatpush1.msra.mxu0 %v143
    %1762 = vmatprep.subr.mxu0 %v148
    %1763 = vmatpush1.msra.mxu0 %v147
    %1764 = vmatprep.subr.mxu0 %v152
    %1765 = vmatpush1.msra.mxu0 %v151
    %1766 = vmatprep.subr.mxu0 0.0
    %1767 = vmatpush1.msra.mxu0 0.0
    %1768 = vmatprep.subr.mxu0 0.0
    %1769 = vmatpush1.msra.mxu0 0.0
    %1770 = vmatprep.subr.mxu0 0.0
    %1771 = vmatpush1.msra.mxu0 0.0
    %1772 = vmatprep.subr.mxu0 0.0
    %1773 = vmatpush1.msra.mxu0 0.0
    %1774 = vmatprep.subr.mxu0 0.0
    %1775 = vmatpush1.msra.mxu0 0.0
    %1776 = vmatprep.subr.mxu0 0.0
    %1777 = vmatpush1.msra.mxu0 0.0
    %1778 = vmatprep.subr.mxu0 0.0
    %1779 = vmatpush1.msra.mxu0 0.0
    %1780 = vmatprep.subr.mxu0 0.0
    %1781 = vmatpush1.msra.mxu0 0.0
    %1782 = vmatprep.subr.mxu0 0.0
    %1783 = vmatpush1.msra.mxu0 0.0
    %1784 = vmatprep.subr.mxu0 0.0
    %1785 = vmatpush1.msra.mxu0 0.0
    %1786 = vmatprep.subr.mxu0 0.0
    %1787 = vmatpush1.msra.mxu0 0.0
    %1788 = vmatprep.subr.mxu0 0.0
    %1789 = vmatpush1.msra.mxu0 0.0
    %1790 = vmatprep.subr.mxu0 0.0
    %1791 = vmatpush1.msra.mxu0 0.0
    %1792 = vmatprep.subr.mxu0 0.0
    %1793 = vmatpush1.msra.mxu0 0.0
    %1794 = vmatprep.subr.mxu0 0.0
    %1795 = vmatpush1.msra.mxu0 0.0
    %1796 = vmatprep.subr.mxu0 0.0
    %1797 = vmatpush1.msra.mxu0 0.0
    %1798 = vmatprep.mubr.f32.mxu0 0.0
    %1799 = vmatmul.mubr.f32.gmra.mrb[0].mxu0 %v1518
    %v1800 = vpop.f32.mrb[0].mxu0
    %v1801 = vadd.f32 %v1659, %v1800
    %v1802 = vpop.f32.mrb[0].mxu0
    %v1803 = vadd.f32 %v1661, %v1802
    %1804 = vdwg.mxu0
    %v1805 = vadd.f32 %v1730, %v222
    %v1806 = vadd.f32 %v1732, %v226
    %v1807 = vadd.f32 %v1801, %v230
    %v1808 = vadd.f32 %v1803, %v234
    %v1809 = vxor.u32 %v1805, 2147483648
    %v1810 = vmul.f32 %v1809, 1.442695
    %v1811 = vpow.pop %v1810
    %v1812 = vadd.f32 %v1811, 1.0
    %v1813 = vrcp.pop %v1812
    %v1814 = vmul.f32 1.0, %v1813
    %v1815 = vxor.u32 %v1806, 2147483648
    %v1816 = vmul.f32 %v1815, 1.442695
    %v1817 = vpow.pop %v1816
    %v1818 = vadd.f32 %v1817, 1.0
    %v1819 = vrcp.pop %v1818
    %v1820 = vmul.f32 1.0, %v1819
    %v1821 = vtanh.pop %v1807
    %v1822 = vxor.u32 %v1808, 2147483648
    %v1823 = vmul.f32 %v1822, 1.442695
    %v1824 = vpow.pop %v1823
    %v1825 = vadd.f32 %v1824, 1.0
    %v1826 = vrcp.pop %v1825
    %v1827 = vmul.f32 1.0, %v1826
    %v1828 = vmul.f32 %v1820, %v1520
    %v1829 = vmul.f32 %v1814, %v1821
    %v1830 = vadd.f32 %v1828, %v1829
    %v1831 = vtanh.pop %v1830
    %v1832 = vmul.f32 %v1827, %v1831
    %1833 = vst [vmem:[#allocation2] sm:$0xff] %v1832
    %1834 = vst [vmem:[#allocation3] sm:$0xff] %v1830
    %s1835 = scalar_lea.vmem [#allocation12], 32
    %1836 = vst [vmem:[%s1835] sm:$0xff] %v1832
    %s1837 = scalar_lea.vmem [#allocation4], 40
    %v1838 = vld [vmem:[%s1837] sm:$0xff]
    %v1839 = vld [vmem:[#allocation2] sm:$0xff]
    %v1840 = vld [vmem:[#allocation3] sm:$0xff]
    %1841 = vmatprep.subr.mxu0 %v154
    %1842 = vmatpush1.msra.mxu0 %v153
    %1843 = vmatprep.subr.mxu0 %v158
    %1844 = vmatpush1.msra.mxu0 %v157
    %1845 = vmatprep.subr.mxu0 %v162
    %1846 = vmatpush1.msra.mxu0 %v161
    %1847 = vmatprep.subr.mxu0 %v166
    %1848 = vmatpush1.msra.mxu0 %v165
    %1849 = vmatprep.subr.mxu0 %v170
    %1850 = vmatpush1.msra.mxu0 %v169
    %1851 = vmatprep.subr.mxu0 %v174
    %1852 = vmatpush1.msra.mxu0 %v173
    %1853 = vmatprep.subr.mxu0 %v178
    %1854 = vmatpush1.msra.mxu0 %v177
    %1855 = vmatprep.subr.mxu0 %v182
    %1856 = vmatpush1.msra.mxu0 %v181
    %1857 = vmatprep.subr.mxu0 %v186
    %1858 = vmatpush1.msra.mxu0 %v185
    %1859 = vmatprep.subr.mxu0 %v190
    %1860 = vmatpush1.msra.mxu0 %v189
    %1861 = vmatprep.subr.mxu0 %v194
    %1862 = vmatpush1.msra.mxu0 %v193
    %1863 = vmatprep.subr.mxu0 %v198
    %1864 = vmatpush1.msra.mxu0 %v197
    %1865 = vmatprep.subr.mxu0 %v202
    %1866 = vmatpush1.msra.mxu0 %v201
    %1867 = vmatprep.subr.mxu0 %v206
    %1868 = vmatpush1.msra.mxu0 %v205
    %1869 = vmatprep.subr.mxu0 %v210
    %1870 = vmatpush1.msra.mxu0 %v209
    %1871 = vmatprep.subr.mxu0 %v214
    %1872 = vmatpush1.msra.mxu0 %v213
    %1873 = vmatprep.subr.mxu0 0.0
    %1874 = vmatpush1.msra.mxu0 0.0
    %1875 = vmatprep.subr.mxu0 0.0
    %1876 = vmatpush1.msra.mxu0 0.0
    %1877 = vmatprep.subr.mxu0 0.0
    %1878 = vmatpush1.msra.mxu0 0.0
    %1879 = vmatprep.subr.mxu0 0.0
    %1880 = vmatpush1.msra.mxu0 0.0
    %1881 = vmatprep.subr.mxu0 0.0
    %1882 = vmatpush1.msra.mxu0 0.0
    %1883 = vmatprep.subr.mxu0 0.0
    %1884 = vmatpush1.msra.mxu0 0.0
    %1885 = vmatprep.subr.mxu0 0.0
    %1886 = vmatpush1.msra.mxu0 0.0
    %1887 = vmatprep.subr.mxu0 0.0
    %1888 = vmatpush1.msra.mxu0 0.0
    %1889 = vmatprep.subr.mxu0 0.0
    %1890 = vmatpush1.msra.mxu0 0.0
    %1891 = vmatprep.subr.mxu0 0.0
    %1892 = vmatpush1.msra.mxu0 0.0
    %1893 = vmatprep.subr.mxu0 0.0
    %1894 = vmatpush1.msra.mxu0 0.0
    %1895 = vmatprep.subr.mxu0 0.0
    %1896 = vmatpush1.msra.mxu0 0.0
    %1897 = vmatprep.subr.mxu0 0.0
    %1898 = vmatpush1.msra.mxu0 0.0
    %1899 = vmatprep.subr.mxu0 0.0
    %1900 = vmatpush1.msra.mxu0 0.0
    %1901 = vmatprep.subr.mxu0 0.0
    %1902 = vmatpush1.msra.mxu0 0.0
    %1903 = vmatprep.subr.mxu0 0.0
    %1904 = vmatpush1.msra.mxu0 0.0
    %1905 = vmatprep.mubr.f32.mxu0 0.0
    %1906 = vmatmul.mubr.f32.gmra.mrb[0].mxu0 %v1839
    %v1907 = vpop.f32.mrb[0].mxu0
    %v1908 = vadd.f32 0.0, %v1907
    %v1909 = vpop.f32.mrb[0].mxu0
    %v1910 = vadd.f32 0.0, %v1909
    %1911 = vdwg.mxu0
    %1912 = vmatprep.subr.mxu0 %v156
    %1913 = vmatpush1.msra.mxu0 %v155
    %1914 = vmatprep.subr.mxu0 %v160
    %1915 = vmatpush1.msra.mxu0 %v159
    %1916 = vmatprep.subr.mxu0 %v164
    %1917 = vmatpush1.msra.mxu0 %v163
    %1918 = vmatprep.subr.mxu0 %v168
    %1919 = vmatpush1.msra.mxu0 %v167
    %1920 = vmatprep.subr.mxu0 %v172
    %1921 = vmatpush1.msra.mxu0 %v171
    %1922 = vmatprep.subr.mxu0 %v176
    %1923 = vmatpush1.msra.mxu0 %v175
    %1924 = vmatprep.subr.mxu0 %v180
    %1925 = vmatpush1.msra.mxu0 %v179
    %1926 = vmatprep.subr.mxu0 %v184
    %1927 = vmatpush1.msra.mxu0 %v183
    %1928 = vmatprep.subr.mxu0 %v188
    %1929 = vmatpush1.msra.mxu0 %v187
    %1930 = vmatprep.subr.mxu0 %v192
    %1931 = vmatpush1.msra.mxu0 %v191
    %1932 = vmatprep.subr.mxu0 %v196
    %1933 = vmatpush1.msra.mxu0 %v195
    %1934 = vmatprep.subr.mxu0 %v200
    %1935 = vmatpush1.msra.mxu0 %v199
    %1936 = vmatprep.subr.mxu0 %v204
    %1937 = vmatpush1.msra.mxu0 %v203
    %1938 = vmatprep.subr.mxu0 %v208
    %1939 = vmatpush1.msra.mxu0 %v207
    %1940 = vmatprep.subr.mxu0 %v212
    %1941 = vmatpush1.msra.mxu0 %v211
    %1942 = vmatprep.subr.mxu0 %v216
    %1943 = vmatpush1.msra.mxu0 %v215
    %1944 = vmatprep.subr.mxu0 0.0
    %1945 = vmatpush1.msra.mxu0 0.0
    %1946 = vmatprep.subr.mxu0 0.0
    %1947 = vmatpush1.msra.mxu0 0.0
    %1948 = vmatprep.subr.mxu0 0.0
    %1949 = vmatpush1.msra.mxu0 0.0
    %1950 = vmatprep.subr.mxu0 0.0
    %1951 = vmatpush1.msra.mxu0 0.0
    %1952 = vmatprep.subr.mxu0 0.0
    %1953 = vmatpush1.msra.mxu0 0.0
    %1954 = vmatprep.subr.mxu0 0.0
    %1955 = vmatpush1.msra.mxu0 0.0
    %1956 = vmatprep.subr.mxu0 0.0
    %1957 = vmatpush1.msra.mxu0 0.0
    %1958 = vmatprep.subr.mxu0 0.0
    %1959 = vmatpush1.msra.mxu0 0.0
    %1960 = vmatprep.subr.mxu0 0.0
    %1961 = vmatpush1.msra.mxu0 0.0
    %1962 = vmatprep.subr.mxu0 0.0
    %1963 = vmatpush1.msra.mxu0 0.0
    %1964 = vmatprep.subr.mxu0 0.0
    %1965 = vmatpush1.msra.mxu0 0.0
    %1966 = vmatprep.subr.mxu0 0.0
    %1967 = vmatpush1.msra.mxu0 0.0
    %1968 = vmatprep.subr.mxu0 0.0
    %1969 = vmatpush1.msra.mxu0 0.0
    %1970 = vmatprep.subr.mxu0 0.0
    %1971 = vmatpush1.msra.mxu0 0.0
    %1972 = vmatprep.subr.mxu0 0.0
    %1973 = vmatpush1.msra.mxu0 0.0
    %1974 = vmatprep.subr.mxu0 0.0
    %1975 = vmatpush1.msra.mxu0 0.0
    %1976 = vmatprep.mubr.f32.mxu0 0.0
    %1977 = vmatmul.mubr.f32.gmra.mrb[0].mxu0 %v1839
    %v1978 = vpop.f32.mrb[0].mxu0
    %v1979 = vadd.f32 0.0, %v1978
    %v1980 = vpop.f32.mrb[0].mxu0
    %v1981 = vadd.f32 0.0, %v1980
    %1982 = vdwg.mxu0
    %1983 = vmatprep.subr.mxu0 %v90
    %1984 = vmatpush1.msra.mxu0 %v89
    %1985 = vmatprep.subr.mxu0 %v94
    %1986 = vmatpush1.msra.mxu0 %v93
    %1987 = vmatprep.subr.mxu0 %v98
    %1988 = vmatpush1.msra.mxu0 %v97
    %1989 = vmatprep.subr.mxu0 %v102
    %1990 = vmatpush1.msra.mxu0 %v101
    %1991 = vmatprep.subr.mxu0 %v106
    %1992 = vmatpush1.msra.mxu0 %v105
    %1993 = vmatprep.subr.mxu0 %v110
    %1994 = vmatpush1.msra.mxu0 %v109
    %1995 = vmatprep.subr.mxu0 %v114
    %1996 = vmatpush1.msra.mxu0 %v113
    %1997 = vmatprep.subr.mxu0 %v118
    %1998 = vmatpush1.msra.mxu0 %v117
    %1999 = vmatprep.subr.mxu0 %v122
    %2000 = vmatpush1.msra.mxu0 %v121
    %2001 = vmatprep.subr.mxu0 %v126
    %2002 = vmatpush1.msra.mxu0 %v125
    %2003 = vmatprep.subr.mxu0 %v130
    %2004 = vmatpush1.msra.mxu0 %v129
    %2005 = vmatprep.subr.mxu0 %v134
    %2006 = vmatpush1.msra.mxu0 %v133
    %2007 = vmatprep.subr.mxu0 %v138
    %2008 = vmatpush1.msra.mxu0 %v137
    %2009 = vmatprep.subr.mxu0 %v142
    %2010 = vmatpush1.msra.mxu0 %v141
    %2011 = vmatprep.subr.mxu0 %v146
    %2012 = vmatpush1.msra.mxu0 %v145
    %2013 = vmatprep.subr.mxu0 %v150
    %2014 = vmatpush1.msra.mxu0 %v149
    %2015 = vmatprep.subr.mxu0 0.0
    %2016 = vmatpush1.msra.mxu0 0.0
    %2017 = vmatprep.subr.mxu0 0.0
    %2018 = vmatpush1.msra.mxu0 0.0
    %2019 = vmatprep.subr.mxu0 0.0
    %2020 = vmatpush1.msra.mxu0 0.0
    %2021 = vmatprep.subr.mxu0 0.0
    %2022 = vmatpush1.msra.mxu0 0.0
    %2023 = vmatprep.subr.mxu0 0.0
    %2024 = vmatpush1.msra.mxu0 0.0
    %2025 = vmatprep.subr.mxu0 0.0
    %2026 = vmatpush1.msra.mxu0 0.0
    %2027 = vmatprep.subr.mxu0 0.0
    %2028 = vmatpush1.msra.mxu0 0.0
    %2029 = vmatprep.subr.mxu0 0.0
    %2030 = vmatpush1.msra.mxu0 0.0
    %2031 = vmatprep.subr.mxu0 0.0
    %2032 = vmatpush1.msra.mxu0 0.0
    %2033 = vmatprep.subr.mxu0 0.0
    %2034 = vmatpush1.msra.mxu0 0.0
    %2035 = vmatprep.subr.mxu0 0.0
    %2036 = vmatpush1.msra.mxu0 0.0
    %2037 = vmatprep.subr.mxu0 0.0
    %2038 = vmatpush1.msra.mxu0 0.0
    %2039 = vmatprep.subr.mxu0 0.0
    %2040 = vmatpush1.msra.mxu0 0.0
    %2041 = vmatprep.subr.mxu0 0.0
    %2042 = vmatpush1.msra.mxu0 0.0
    %2043 = vmatprep.subr.mxu0 0.0
    %2044 = vmatpush1.msra.mxu0 0.0
    %2045 = vmatprep.subr.mxu0 0.0
    %2046 = vmatpush1.msra.mxu0 0.0
    %2047 = vmatprep.mubr.f32.mxu0 0.0
    %2048 = vmatmul.mubr.f32.gmra.mrb[0].mxu0 %v1838
    %v2049 = vpop.f32.mrb[0].mxu0
    %v2050 = vadd.f32 %v1908, %v2049
    %v2051 = vpop.f32.mrb[0].mxu0
    %v2052 = vadd.f32 %v1910, %v2051
    %2053 = vdwg.mxu0
    %2054 = vmatprep.subr.mxu0 %v92
    %2055 = vmatpush1.msra.mxu0 %v91
    %2056 = vmatprep.subr.mxu0 %v96
    %2057 = vmatpush1.msra.mxu0 %v95
    %2058 = vmatprep.subr.mxu0 %v100
    %2059 = vmatpush1.msra.mxu0 %v99
    %2060 = vmatprep.subr.mxu0 %v104
    %2061 = vmatpush1.msra.mxu0 %v103
    %2062 = vmatprep.subr.mxu0 %v108
    %2063 = vmatpush1.msra.mxu0 %v107
    %2064 = vmatprep.subr.mxu0 %v112
    %2065 = vmatpush1.msra.mxu0 %v111
    %2066 = vmatprep.subr.mxu0 %v116
    %2067 = vmatpush1.msra.mxu0 %v115
    %2068 = vmatprep.subr.mxu0 %v120
    %2069 = vmatpush1.msra.mxu0 %v119
    %2070 = vmatprep.subr.mxu0 %v124
    %2071 = vmatpush1.msra.mxu0 %v123
    %2072 = vmatprep.subr.mxu0 %v128
    %2073 = vmatpush1.msra.mxu0 %v127
    %2074 = vmatprep.subr.mxu0 %v132
    %2075 = vmatpush1.msra.mxu0 %v131
    %2076 = vmatprep.subr.mxu0 %v136
    %2077 = vmatpush1.msra.mxu0 %v135
    %2078 = vmatprep.subr.mxu0 %v140
    %2079 = vmatpush1.msra.mxu0 %v139
    %2080 = vmatprep.subr.mxu0 %v144
    %2081 = vmatpush1.msra.mxu0 %v143
    %2082 = vmatprep.subr.mxu0 %v148
    %2083 = vmatpush1.msra.mxu0 %v147
    %2084 = vmatprep.subr.mxu0 %v152
    %2085 = vmatpush1.msra.mxu0 %v151
    %2086 = vmatprep.subr.mxu0 0.0
    %2087 = vmatpush1.msra.mxu0 0.0
    %2088 = vmatprep.subr.mxu0 0.0
    %2089 = vmatpush1.msra.mxu0 0.0
    %2090 = vmatprep.subr.mxu0 0.0
    %2091 = vmatpush1.msra.mxu0 0.0
    %2092 = vmatprep.subr.mxu0 0.0
    %2093 = vmatpush1.msra.mxu0 0.0
    %2094 = vmatprep.subr.mxu0 0.0
    %2095 = vmatpush1.msra.mxu0 0.0
    %2096 = vmatprep.subr.mxu0 0.0
    %2097 = vmatpush1.msra.mxu0 0.0
    %2098 = vmatprep.subr.mxu0 0.0
    %2099 = vmatpush1.msra.mxu0 0.0
    %2100 = vmatprep.subr.mxu0 0.0
    %2101 = vmatpush1.msra.mxu0 0.0
    %2102 = vmatprep.subr.mxu0 0.0
    %2103 = vmatpush1.msra.mxu0 0.0
    %2104 = vmatprep.subr.mxu0 0.0
    %2105 = vmatpush1.msra.mxu0 0.0
    %2106 = vmatprep.subr.mxu0 0.0
    %2107 = vmatpush1.msra.mxu0 0.0
    %2108 = vmatprep.subr.mxu0 0.0
    %2109 = vmatpush1.msra.mxu0 0.0
    %2110 = vmatprep.subr.mxu0 0.0
    %2111 = vmatpush1.msra.mxu0 0.0
    %2112 = vmatprep.subr.mxu0 0.0
    %2113 = vmatpush1.msra.mxu0 0.0
    %2114 = vmatprep.subr.mxu0 0.0
    %2115 = vmatpush1.msra.mxu0 0.0
    %2116 = vmatprep.subr.mxu0 0.0
    %2117 = vmatpush1.msra.mxu0 0.0
    %2118 = vmatprep.mubr.f32.mxu0 0.0
    %2119 = vmatmul.mubr.f32.gmra.mrb[0].mxu0 %v1838
    %v2120 = vpop.f32.mrb[0].mxu0
    %v2121 = vadd.f32 %v1979, %v2120
    %v2122 = vpop.f32.mrb[0].mxu0
    %v2123 = vadd.f32 %v1981, %v2122
    %2124 = vdwg.mxu0
    %v2125 = vadd.f32 %v2050, %v222
    %v2126 = vadd.f32 %v2052, %v226
    %v2127 = vadd.f32 %v2121, %v230
    %v2128 = vadd.f32 %v2123, %v234
    %v2129 = vxor.u32 %v2125, 2147483648
    %v2130 = vmul.f32 %v2129, 1.442695
    %v2131 = vpow.pop %v2130
    %v2132 = vadd.f32 %v2131, 1.0
    %v2133 = vrcp.pop %v2132
    %v2134 = vmul.f32 1.0, %v2133
    %v2135 = vxor.u32 %v2126, 2147483648
    %v2136 = vmul.f32 %v2135, 1.442695
    %v2137 = vpow.pop %v2136
    %v2138 = vadd.f32 %v2137, 1.0
    %v2139 = vrcp.pop %v2138
    %v2140 = vmul.f32 1.0, %v2139
    %v2141 = vtanh.pop %v2127
    %v2142 = vxor.u32 %v2128, 2147483648
    %v2143 = vmul.f32 %v2142, 1.442695
    %v2144 = vpow.pop %v2143
    %v2145 = vadd.f32 %v2144, 1.0
    %v2146 = vrcp.pop %v2145
    %v2147 = vmul.f32 1.0, %v2146
    %v2148 = vmul.f32 %v2140, %v1840
    %v2149 = vmul.f32 %v2134, %v2141
    %v2150 = vadd.f32 %v2148, %v2149
    %v2151 = vtanh.pop %v2150
    %v2152 = vmul.f32 %v2147, %v2151
    %2153 = vst [vmem:[#allocation2] sm:$0xff] %v2152
    %2154 = vst [vmem:[#allocation3] sm:$0xff] %v2150
    %s2155 = scalar_lea.vmem [#allocation12], 40
    %2156 = vst [vmem:[%s2155] sm:$0xff] %v2152
    %s2157 = scalar_lea.vmem [#allocation4], 48
    %v2158 = vld [vmem:[%s2157] sm:$0xff]
    %v2159 = vld [vmem:[#allocation2] sm:$0xff]
    %v2160 = vld [vmem:[#allocation3] sm:$0xff]
    %2161 = vmatprep.subr.mxu0 %v154
    %2162 = vmatpush1.msra.mxu0 %v153
    %2163 = vmatprep.subr.mxu0 %v158
    %2164 = vmatpush1.msra.mxu0 %v157
    %2165 = vmatprep.subr.mxu0 %v162
    %2166 = vmatpush1.msra.mxu0 %v161
    %2167 = vmatprep.subr.mxu0 %v166
    %2168 = vmatpush1.msra.mxu0 %v165
    %2169 = vmatprep.subr.mxu0 %v170
    %2170 = vmatpush1.msra.mxu0 %v169
    %2171 = vmatprep.subr.mxu0 %v174
    %2172 = vmatpush1.msra.mxu0 %v173
    %2173 = vmatprep.subr.mxu0 %v178
    %2174 = vmatpush1.msra.mxu0 %v177
    %2175 = vmatprep.subr.mxu0 %v182
    %2176 = vmatpush1.msra.mxu0 %v181
    %2177 = vmatprep.subr.mxu0 %v186
    %2178 = vmatpush1.msra.mxu0 %v185
    %2179 = vmatprep.subr.mxu0 %v190
    %2180 = vmatpush1.msra.mxu0 %v189
    %2181 = vmatprep.subr.mxu0 %v194
    %2182 = vmatpush1.msra.mxu0 %v193
    %2183 = vmatprep.subr.mxu0 %v198
    %2184 = vmatpush1.msra.mxu0 %v197
    %2185 = vmatprep.subr.mxu0 %v202
    %2186 = vmatpush1.msra.mxu0 %v201
    %2187 = vmatprep.subr.mxu0 %v206
    %2188 = vmatpush1.msra.mxu0 %v205
    %2189 = vmatprep.subr.mxu0 %v210
    %2190 = vmatpush1.msra.mxu0 %v209
    %2191 = vmatprep.subr.mxu0 %v214
    %2192 = vmatpush1.msra.mxu0 %v213
    %2193 = vmatprep.subr.mxu0 0.0
    %2194 = vmatpush1.msra.mxu0 0.0
    %2195 = vmatprep.subr.mxu0 0.0
    %2196 = vmatpush1.msra.mxu0 0.0
    %2197 = vmatprep.subr.mxu0 0.0
    %2198 = vmatpush1.msra.mxu0 0.0
    %2199 = vmatprep.subr.mxu0 0.0
    %2200 = vmatpush1.msra.mxu0 0.0
    %2201 = vmatprep.subr.mxu0 0.0
    %2202 = vmatpush1.msra.mxu0 0.0
    %2203 = vmatprep.subr.mxu0 0.0
    %2204 = vmatpush1.msra.mxu0 0.0
    %2205 = vmatprep.subr.mxu0 0.0
    %2206 = vmatpush1.msra.mxu0 0.0
    %2207 = vmatprep.subr.mxu0 0.0
    %2208 = vmatpush1.msra.mxu0 0.0
    %2209 = vmatprep.subr.mxu0 0.0
    %2210 = vmatpush1.msra.mxu0 0.0
    %2211 = vmatprep.subr.mxu0 0.0
    %2212 = vmatpush1.msra.mxu0 0.0
    %2213 = vmatprep.subr.mxu0 0.0
    %2214 = vmatpush1.msra.mxu0 0.0
    %2215 = vmatprep.subr.mxu0 0.0
    %2216 = vmatpush1.msra.mxu0 0.0
    %2217 = vmatprep.subr.mxu0 0.0
    %2218 = vmatpush1.msra.mxu0 0.0
    %2219 = vmatprep.subr.mxu0 0.0
    %2220 = vmatpush1.msra.mxu0 0.0
    %2221 = vmatprep.subr.mxu0 0.0
    %2222 = vmatpush1.msra.mxu0 0.0
    %2223 = vmatprep.subr.mxu0 0.0
    %2224 = vmatpush1.msra.mxu0 0.0
    %2225 = vmatprep.mubr.f32.mxu0 0.0
    %2226 = vmatmul.mubr.f32.gmra.mrb[0].mxu0 %v2159
    %v2227 = vpop.f32.mrb[0].mxu0
    %v2228 = vadd.f32 0.0, %v2227
    %v2229 = vpop.f32.mrb[0].mxu0
    %v2230 = vadd.f32 0.0, %v2229
    %2231 = vdwg.mxu0
    %2232 = vmatprep.subr.mxu0 %v156
    %2233 = vmatpush1.msra.mxu0 %v155
    %2234 = vmatprep.subr.mxu0 %v160
    %2235 = vmatpush1.msra.mxu0 %v159
    %2236 = vmatprep.subr.mxu0 %v164
    %2237 = vmatpush1.msra.mxu0 %v163
    %2238 = vmatprep.subr.mxu0 %v168
    %2239 = vmatpush1.msra.mxu0 %v167
    %2240 = vmatprep.subr.mxu0 %v172
    %2241 = vmatpush1.msra.mxu0 %v171
    %2242 = vmatprep.subr.mxu0 %v176
    %2243 = vmatpush1.msra.mxu0 %v175
    %2244 = vmatprep.subr.mxu0 %v180
    %2245 = vmatpush1.msra.mxu0 %v179
    %2246 = vmatprep.subr.mxu0 %v184
    %2247 = vmatpush1.msra.mxu0 %v183
    %2248 = vmatprep.subr.mxu0 %v188
    %2249 = vmatpush1.msra.mxu0 %v187
    %2250 = vmatprep.subr.mxu0 %v192
    %2251 = vmatpush1.msra.mxu0 %v191
    %2252 = vmatprep.subr.mxu0 %v196
    %2253 = vmatpush1.msra.mxu0 %v195
    %2254 = vmatprep.subr.mxu0 %v200
    %2255 = vmatpush1.msra.mxu0 %v199
    %2256 = vmatprep.subr.mxu0 %v204
    %2257 = vmatpush1.msra.mxu0 %v203
    %2258 = vmatprep.subr.mxu0 %v208
    %2259 = vmatpush1.msra.mxu0 %v207
    %2260 = vmatprep.subr.mxu0 %v212
    %2261 = vmatpush1.msra.mxu0 %v211
    %2262 = vmatprep.subr.mxu0 %v216
    %2263 = vmatpush1.msra.mxu0 %v215
    %2264 = vmatprep.subr.mxu0 0.0
    %2265 = vmatpush1.msra.mxu0 0.0
    %2266 = vmatprep.subr.mxu0 0.0
    %2267 = vmatpush1.msra.mxu0 0.0
    %2268 = vmatprep.subr.mxu0 0.0
    %2269 = vmatpush1.msra.mxu0 0.0
    %2270 = vmatprep.subr.mxu0 0.0
    %2271 = vmatpush1.msra.mxu0 0.0
    %2272 = vmatprep.subr.mxu0 0.0
    %2273 = vmatpush1.msra.mxu0 0.0
    %2274 = vmatprep.subr.mxu0 0.0
    %2275 = vmatpush1.msra.mxu0 0.0
    %2276 = vmatprep.subr.mxu0 0.0
    %2277 = vmatpush1.msra.mxu0 0.0
    %2278 = vmatprep.subr.mxu0 0.0
    %2279 = vmatpush1.msra.mxu0 0.0
    %2280 = vmatprep.subr.mxu0 0.0
    %2281 = vmatpush1.msra.mxu0 0.0
    %2282 = vmatprep.subr.mxu0 0.0
    %2283 = vmatpush1.msra.mxu0 0.0
    %2284 = vmatprep.subr.mxu0 0.0
    %2285 = vmatpush1.msra.mxu0 0.0
    %2286 = vmatprep.subr.mxu0 0.0
    %2287 = vmatpush1.msra.mxu0 0.0
    %2288 = vmatprep.subr.mxu0 0.0
    %2289 = vmatpush1.msra.mxu0 0.0
    %2290 = vmatprep.subr.mxu0 0.0
    %2291 = vmatpush1.msra.mxu0 0.0
    %2292 = vmatprep.subr.mxu0 0.0
    %2293 = vmatpush1.msra.mxu0 0.0
    %2294 = vmatprep.subr.mxu0 0.0
    %2295 = vmatpush1.msra.mxu0 0.0
    %2296 = vmatprep.mubr.f32.mxu0 0.0
    %2297 = vmatmul.mubr.f32.gmra.mrb[0].mxu0 %v2159
    %v2298 = vpop.f32.mrb[0].mxu0
    %v2299 = vadd.f32 0.0, %v2298
    %v2300 = vpop.f32.mrb[0].mxu0
    %v2301 = vadd.f32 0.0, %v2300
    %2302 = vdwg.mxu0
    %2303 = vmatprep.subr.mxu0 %v90
    %2304 = vmatpush1.msra.mxu0 %v89
    %2305 = vmatprep.subr.mxu0 %v94
    %2306 = vmatpush1.msra.mxu0 %v93
    %2307 = vmatprep.subr.mxu0 %v98
    %2308 = vmatpush1.msra.mxu0 %v97
    %2309 = vmatprep.subr.mxu0 %v102
    %2310 = vmatpush1.msra.mxu0 %v101
    %2311 = vmatprep.subr.mxu0 %v106
    %2312 = vmatpush1.msra.mxu0 %v105
    %2313 = vmatprep.subr.mxu0 %v110
    %2314 = vmatpush1.msra.mxu0 %v109
    %2315 = vmatprep.subr.mxu0 %v114
    %2316 = vmatpush1.msra.mxu0 %v113
    %2317 = vmatprep.subr.mxu0 %v118
    %2318 = vmatpush1.msra.mxu0 %v117
    %2319 = vmatprep.subr.mxu0 %v122
    %2320 = vmatpush1.msra.mxu0 %v121
    %2321 = vmatprep.subr.mxu0 %v126
    %2322 = vmatpush1.msra.mxu0 %v125
    %2323 = vmatprep.subr.mxu0 %v130
    %2324 = vmatpush1.msra.mxu0 %v129
    %2325 = vmatprep.subr.mxu0 %v134
    %2326 = vmatpush1.msra.mxu0 %v133
    %2327 = vmatprep.subr.mxu0 %v138
    %2328 = vmatpush1.msra.mxu0 %v137
    %2329 = vmatprep.subr.mxu0 %v142
    %2330 = vmatpush1.msra.mxu0 %v141
    %2331 = vmatprep.subr.mxu0 %v146
    %2332 = vmatpush1.msra.mxu0 %v145
    %2333 = vmatprep.subr.mxu0 %v150
    %2334 = vmatpush1.msra.mxu0 %v149
    %2335 = vmatprep.subr.mxu0 0.0
    %2336 = vmatpush1.msra.mxu0 0.0
    %2337 = vmatprep.subr.mxu0 0.0
    %2338 = vmatpush1.msra.mxu0 0.0
    %2339 = vmatprep.subr.mxu0 0.0
    %2340 = vmatpush1.msra.mxu0 0.0
    %2341 = vmatprep.subr.mxu0 0.0
    %2342 = vmatpush1.msra.mxu0 0.0
    %2343 = vmatprep.subr.mxu0 0.0
    %2344 = vmatpush1.msra.mxu0 0.0
    %2345 = vmatprep.subr.mxu0 0.0
    %2346 = vmatpush1.msra.mxu0 0.0
    %2347 = vmatprep.subr.mxu0 0.0
    %2348 = vmatpush1.msra.mxu0 0.0
    %2349 = vmatprep.subr.mxu0 0.0
    %2350 = vmatpush1.msra.mxu0 0.0
    %2351 = vmatprep.subr.mxu0 0.0
    %2352 = vmatpush1.msra.mxu0 0.0
    %2353 = vmatprep.subr.mxu0 0.0
    %2354 = vmatpush1.msra.mxu0 0.0
    %2355 = vmatprep.subr.mxu0 0.0
    %2356 = vmatpush1.msra.mxu0 0.0
    %2357 = vmatprep.subr.mxu0 0.0
    %2358 = vmatpush1.msra.mxu0 0.0
    %2359 = vmatprep.subr.mxu0 0.0
    %2360 = vmatpush1.msra.mxu0 0.0
    %2361 = vmatprep.subr.mxu0 0.0
    %2362 = vmatpush1.msra.mxu0 0.0
    %2363 = vmatprep.subr.mxu0 0.0
    %2364 = vmatpush1.msra.mxu0 0.0
    %2365 = vmatprep.subr.mxu0 0.0
    %2366 = vmatpush1.msra.mxu0 0.0
    %2367 = vmatprep.mubr.f32.mxu0 0.0
    %2368 = vmatmul.mubr.f32.gmra.mrb[0].mxu0 %v2158
    %v2369 = vpop.f32.mrb[0].mxu0
    %v2370 = vadd.f32 %v2228, %v2369
    %v2371 = vpop.f32.mrb[0].mxu0
    %v2372 = vadd.f32 %v2230, %v2371
    %2373 = vdwg.mxu0
    %2374 = vmatprep.subr.mxu0 %v92
    %2375 = vmatpush1.msra.mxu0 %v91
    %2376 = vmatprep.subr.mxu0 %v96
    %2377 = vmatpush1.msra.mxu0 %v95
    %2378 = vmatprep.subr.mxu0 %v100
    %2379 = vmatpush1.msra.mxu0 %v99
    %2380 = vmatprep.subr.mxu0 %v104
    %2381 = vmatpush1.msra.mxu0 %v103
    %2382 = vmatprep.subr.mxu0 %v108
    %2383 = vmatpush1.msra.mxu0 %v107
    %2384 = vmatprep.subr.mxu0 %v112
    %2385 = vmatpush1.msra.mxu0 %v111
    %2386 = vmatprep.subr.mxu0 %v116
    %2387 = vmatpush1.msra.mxu0 %v115
    %2388 = vmatprep.subr.mxu0 %v120
    %2389 = vmatpush1.msra.mxu0 %v119
    %2390 = vmatprep.subr.mxu0 %v124
    %2391 = vmatpush1.msra.mxu0 %v123
    %2392 = vmatprep.subr.mxu0 %v128
    %2393 = vmatpush1.msra.mxu0 %v127
    %2394 = vmatprep.subr.mxu0 %v132
    %2395 = vmatpush1.msra.mxu0 %v131
    %2396 = vmatprep.subr.mxu0 %v136
    %2397 = vmatpush1.msra.mxu0 %v135
    %2398 = vmatprep.subr.mxu0 %v140
    %2399 = vmatpush1.msra.mxu0 %v139
    %2400 = vmatprep.subr.mxu0 %v144
    %2401 = vmatpush1.msra.mxu0 %v143
    %2402 = vmatprep.subr.mxu0 %v148
    %2403 = vmatpush1.msra.mxu0 %v147
    %2404 = vmatprep.subr.mxu0 %v152
    %2405 = vmatpush1.msra.mxu0 %v151
    %2406 = vmatprep.subr.mxu0 0.0
    %2407 = vmatpush1.msra.mxu0 0.0
    %2408 = vmatprep.subr.mxu0 0.0
    %2409 = vmatpush1.msra.mxu0 0.0
    %2410 = vmatprep.subr.mxu0 0.0
    %2411 = vmatpush1.msra.mxu0 0.0
    %2412 = vmatprep.subr.mxu0 0.0
    %2413 = vmatpush1.msra.mxu0 0.0
    %2414 = vmatprep.subr.mxu0 0.0
    %2415 = vmatpush1.msra.mxu0 0.0
    %2416 = vmatprep.subr.mxu0 0.0
    %2417 = vmatpush1.msra.mxu0 0.0
    %2418 = vmatprep.subr.mxu0 0.0
    %2419 = vmatpush1.msra.mxu0 0.0
    %2420 = vmatprep.subr.mxu0 0.0
    %2421 = vmatpush1.msra.mxu0 0.0
    %2422 = vmatprep.subr.mxu0 0.0
    %2423 = vmatpush1.msra.mxu0 0.0
    %2424 = vmatprep.subr.mxu0 0.0
    %2425 = vmatpush1.msra.mxu0 0.0
    %2426 = vmatprep.subr.mxu0 0.0
    %2427 = vmatpush1.msra.mxu0 0.0
    %2428 = vmatprep.subr.mxu0 0.0
    %2429 = vmatpush1.msra.mxu0 0.0
    %2430 = vmatprep.subr.mxu0 0.0
    %2431 = vmatpush1.msra.mxu0 0.0
    %2432 = vmatprep.subr.mxu0 0.0
    %2433 = vmatpush1.msra.mxu0 0.0
    %2434 = vmatprep.subr.mxu0 0.0
    %2435 = vmatpush1.msra.mxu0 0.0
    %2436 = vmatprep.subr.mxu0 0.0
    %2437 = vmatpush1.msra.mxu0 0.0
    %2438 = vmatprep.mubr.f32.mxu0 0.0
    %2439 = vmatmul.mubr.f32.gmra.mrb[0].mxu0 %v2158
    %v2440 = vpop.f32.mrb[0].mxu0
    %v2441 = vadd.f32 %v2299, %v2440
    %v2442 = vpop.f32.mrb[0].mxu0
    %v2443 = vadd.f32 %v2301, %v2442
    %2444 = vdwg.mxu0
    %v2445 = vadd.f32 %v2370, %v222
    %v2446 = vadd.f32 %v2372, %v226
    %v2447 = vadd.f32 %v2441, %v230
    %v2448 = vadd.f32 %v2443, %v234
    %v2449 = vxor.u32 %v2445, 2147483648
    %v2450 = vmul.f32 %v2449, 1.442695
    %v2451 = vpow.pop %v2450
    %v2452 = vadd.f32 %v2451, 1.0
    %v2453 = vrcp.pop %v2452
    %v2454 = vmul.f32 1.0, %v2453
    %v2455 = vxor.u32 %v2446, 2147483648
    %v2456 = vmul.f32 %v2455, 1.442695
    %v2457 = vpow.pop %v2456
    %v2458 = vadd.f32 %v2457, 1.0
    %v2459 = vrcp.pop %v2458
    %v2460 = vmul.f32 1.0, %v2459
    %v2461 = vtanh.pop %v2447
    %v2462 = vxor.u32 %v2448, 2147483648
    %v2463 = vmul.f32 %v2462, 1.442695
    %v2464 = vpow.pop %v2463
    %v2465 = vadd.f32 %v2464, 1.0
    %v2466 = vrcp.pop %v2465
    %v2467 = vmul.f32 1.0, %v2466
    %v2468 = vmul.f32 %v2460, %v2160
    %v2469 = vmul.f32 %v2454, %v2461
    %v2470 = vadd.f32 %v2468, %v2469
    %v2471 = vtanh.pop %v2470
    %v2472 = vmul.f32 %v2467, %v2471
    %2473 = vst [vmem:[#allocation2] sm:$0xff] %v2472
    %2474 = vst [vmem:[#allocation3] sm:$0xff] %v2470
    %s2475 = scalar_lea.vmem [#allocation12], 48
    %2476 = vst [vmem:[%s2475] sm:$0xff] %v2472
    %s2477 = scalar_lea.vmem [#allocation4], 56
    %v2478 = vld [vmem:[%s2477] sm:$0xff]
    %v2479 = vld [vmem:[#allocation2] sm:$0xff]
    %v2480 = vld [vmem:[#allocation3] sm:$0xff]
    %2481 = vmatprep.subr.mxu0 %v154
    %2482 = vmatpush1.msra.mxu0 %v153
    %2483 = vmatprep.subr.mxu0 %v158
    %2484 = vmatpush1.msra.mxu0 %v157
    %2485 = vmatprep.subr.mxu0 %v162
    %2486 = vmatpush1.msra.mxu0 %v161
    %2487 = vmatprep.subr.mxu0 %v166
    %2488 = vmatpush1.msra.mxu0 %v165
    %2489 = vmatprep.subr.mxu0 %v170
    %2490 = vmatpush1.msra.mxu0 %v169
    %2491 = vmatprep.subr.mxu0 %v174
    %2492 = vmatpush1.msra.mxu0 %v173
    %2493 = vmatprep.subr.mxu0 %v178
    %2494 = vmatpush1.msra.mxu0 %v177
    %2495 = vmatprep.subr.mxu0 %v182
    %2496 = vmatpush1.msra.mxu0 %v181
    %2497 = vmatprep.subr.mxu0 %v186
    %2498 = vmatpush1.msra.mxu0 %v185
    %2499 = vmatprep.subr.mxu0 %v190
    %2500 = vmatpush1.msra.mxu0 %v189
    %2501 = vmatprep.subr.mxu0 %v194
    %2502 = vmatpush1.msra.mxu0 %v193
    %2503 = vmatprep.subr.mxu0 %v198
    %2504 = vmatpush1.msra.mxu0 %v197
    %2505 = vmatprep.subr.mxu0 %v202
    %2506 = vmatpush1.msra.mxu0 %v201
    %2507 = vmatprep.subr.mxu0 %v206
    %2508 = vmatpush1.msra.mxu0 %v205
    %2509 = vmatprep.subr.mxu0 %v210
    %2510 = vmatpush1.msra.mxu0 %v209
    %2511 = vmatprep.subr.mxu0 %v214
    %2512 = vmatpush1.msra.mxu0 %v213
    %2513 = vmatprep.subr.mxu0 0.0
    %2514 = vmatpush1.msra.mxu0 0.0
    %2515 = vmatprep.subr.mxu0 0.0
    %2516 = vmatpush1.msra.mxu0 0.0
    %2517 = vmatprep.subr.mxu0 0.0
    %2518 = vmatpush1.msra.mxu0 0.0
    %2519 = vmatprep.subr.mxu0 0.0
    %2520 = vmatpush1.msra.mxu0 0.0
    %2521 = vmatprep.subr.mxu0 0.0
    %2522 = vmatpush1.msra.mxu0 0.0
    %2523 = vmatprep.subr.mxu0 0.0
    %2524 = vmatpush1.msra.mxu0 0.0
    %2525 = vmatprep.subr.mxu0 0.0
    %2526 = vmatpush1.msra.mxu0 0.0
    %2527 = vmatprep.subr.mxu0 0.0
    %2528 = vmatpush1.msra.mxu0 0.0
    %2529 = vmatprep.subr.mxu0 0.0
    %2530 = vmatpush1.msra.mxu0 0.0
    %2531 = vmatprep.subr.mxu0 0.0
    %2532 = vmatpush1.msra.mxu0 0.0
    %2533 = vmatprep.subr.mxu0 0.0
    %2534 = vmatpush1.msra.mxu0 0.0
    %2535 = vmatprep.subr.mxu0 0.0
    %2536 = vmatpush1.msra.mxu0 0.0
    %2537 = vmatprep.subr.mxu0 0.0
    %2538 = vmatpush1.msra.mxu0 0.0
    %2539 = vmatprep.subr.mxu0 0.0
    %2540 = vmatpush1.msra.mxu0 0.0
    %2541 = vmatprep.subr.mxu0 0.0
    %2542 = vmatpush1.msra.mxu0 0.0
    %2543 = vmatprep.subr.mxu0 0.0
    %2544 = vmatpush1.msra.mxu0 0.0
    %2545 = vmatprep.mubr.f32.mxu0 0.0
    %2546 = vmatmul.mubr.f32.gmra.mrb[0].mxu0 %v2479
    %v2547 = vpop.f32.mrb[0].mxu0
    %v2548 = vadd.f32 0.0, %v2547
    %v2549 = vpop.f32.mrb[0].mxu0
    %v2550 = vadd.f32 0.0, %v2549
    %2551 = vdwg.mxu0
    %2552 = vmatprep.subr.mxu0 %v156
    %2553 = vmatpush1.msra.mxu0 %v155
    %2554 = vmatprep.subr.mxu0 %v160
    %2555 = vmatpush1.msra.mxu0 %v159
    %2556 = vmatprep.subr.mxu0 %v164
    %2557 = vmatpush1.msra.mxu0 %v163
    %2558 = vmatprep.subr.mxu0 %v168
    %2559 = vmatpush1.msra.mxu0 %v167
    %2560 = vmatprep.subr.mxu0 %v172
    %2561 = vmatpush1.msra.mxu0 %v171
    %2562 = vmatprep.subr.mxu0 %v176
    %2563 = vmatpush1.msra.mxu0 %v175
    %2564 = vmatprep.subr.mxu0 %v180
    %2565 = vmatpush1.msra.mxu0 %v179
    %2566 = vmatprep.subr.mxu0 %v184
    %2567 = vmatpush1.msra.mxu0 %v183
    %2568 = vmatprep.subr.mxu0 %v188
    %2569 = vmatpush1.msra.mxu0 %v187
    %2570 = vmatprep.subr.mxu0 %v192
    %2571 = vmatpush1.msra.mxu0 %v191
    %2572 = vmatprep.subr.mxu0 %v196
    %2573 = vmatpush1.msra.mxu0 %v195
    %2574 = vmatprep.subr.mxu0 %v200
    %2575 = vmatpush1.msra.mxu0 %v199
    %2576 = vmatprep.subr.mxu0 %v204
    %2577 = vmatpush1.msra.mxu0 %v203
    %2578 = vmatprep.subr.mxu0 %v208
    %2579 = vmatpush1.msra.mxu0 %v207
    %2580 = vmatprep.subr.mxu0 %v212
    %2581 = vmatpush1.msra.mxu0 %v211
    %2582 = vmatprep.subr.mxu0 %v216
    %2583 = vmatpush1.msra.mxu0 %v215
    %2584 = vmatprep.subr.mxu0 0.0
    %2585 = vmatpush1.msra.mxu0 0.0
    %2586 = vmatprep.subr.mxu0 0.0
    %2587 = vmatpush1.msra.mxu0 0.0
    %2588 = vmatprep.subr.mxu0 0.0
    %2589 = vmatpush1.msra.mxu0 0.0
    %2590 = vmatprep.subr.mxu0 0.0
    %2591 = vmatpush1.msra.mxu0 0.0
    %2592 = vmatprep.subr.mxu0 0.0
    %2593 = vmatpush1.msra.mxu0 0.0
    %2594 = vmatprep.subr.mxu0 0.0
    %2595 = vmatpush1.msra.mxu0 0.0
    %2596 = vmatprep.subr.mxu0 0.0
    %2597 = vmatpush1.msra.mxu0 0.0
    %2598 = vmatprep.subr.mxu0 0.0
    %2599 = vmatpush1.msra.mxu0 0.0
    %2600 = vmatprep.subr.mxu0 0.0
    %2601 = vmatpush1.msra.mxu0 0.0
    %2602 = vmatprep.subr.mxu0 0.0
    %2603 = vmatpush1.msra.mxu0 0.0
    %2604 = vmatprep.subr.mxu0 0.0
    %2605 = vmatpush1.msra.mxu0 0.0
    %2606 = vmatprep.subr.mxu0 0.0
    %2607 = vmatpush1.msra.mxu0 0.0
    %2608 = vmatprep.subr.mxu0 0.0
    %2609 = vmatpush1.msra.mxu0 0.0
    %2610 = vmatprep.subr.mxu0 0.0
    %2611 = vmatpush1.msra.mxu0 0.0
    %2612 = vmatprep.subr.mxu0 0.0
    %2613 = vmatpush1.msra.mxu0 0.0
    %2614 = vmatprep.subr.mxu0 0.0
    %2615 = vmatpush1.msra.mxu0 0.0
    %2616 = vmatprep.mubr.f32.mxu0 0.0
    %2617 = vmatmul.mubr.f32.gmra.mrb[0].mxu0 %v2479
    %v2618 = vpop.f32.mrb[0].mxu0
    %v2619 = vadd.f32 0.0, %v2618
    %v2620 = vpop.f32.mrb[0].mxu0
    %v2621 = vadd.f32 0.0, %v2620
    %2622 = vdwg.mxu0
    %2623 = vmatprep.subr.mxu0 %v90
    %2624 = vmatpush1.msra.mxu0 %v89
    %2625 = vmatprep.subr.mxu0 %v94
    %2626 = vmatpush1.msra.mxu0 %v93
    %2627 = vmatprep.subr.mxu0 %v98
    %2628 = vmatpush1.msra.mxu0 %v97
    %2629 = vmatprep.subr.mxu0 %v102
    %2630 = vmatpush1.msra.mxu0 %v101
    %2631 = vmatprep.subr.mxu0 %v106
    %2632 = vmatpush1.msra.mxu0 %v105
    %2633 = vmatprep.subr.mxu0 %v110
    %2634 = vmatpush1.msra.mxu0 %v109
    %2635 = vmatprep.subr.mxu0 %v114
    %2636 = vmatpush1.msra.mxu0 %v113
    %2637 = vmatprep.subr.mxu0 %v118
    %2638 = vmatpush1.msra.mxu0 %v117
    %2639 = vmatprep.subr.mxu0 %v122
    %2640 = vmatpush1.msra.mxu0 %v121
    %2641 = vmatprep.subr.mxu0 %v126
    %2642 = vmatpush1.msra.mxu0 %v125
    %2643 = vmatprep.subr.mxu0 %v130
    %2644 = vmatpush1.msra.mxu0 %v129
    %2645 = vmatprep.subr.mxu0 %v134
    %2646 = vmatpush1.msra.mxu0 %v133
    %2647 = vmatprep.subr.mxu0 %v138
    %2648 = vmatpush1.msra.mxu0 %v137
    %2649 = vmatprep.subr.mxu0 %v142
    %2650 = vmatpush1.msra.mxu0 %v141
    %2651 = vmatprep.subr.mxu0 %v146
    %2652 = vmatpush1.msra.mxu0 %v145
    %2653 = vmatprep.subr.mxu0 %v150
    %2654 = vmatpush1.msra.mxu0 %v149
    %2655 = vmatprep.subr.mxu0 0.0
    %2656 = vmatpush1.msra.mxu0 0.0
    %2657 = vmatprep.subr.mxu0 0.0
    %2658 = vmatpush1.msra.mxu0 0.0
    %2659 = vmatprep.subr.mxu0 0.0
    %2660 = vmatpush1.msra.mxu0 0.0
    %2661 = vmatprep.subr.mxu0 0.0
    %2662 = vmatpush1.msra.mxu0 0.0
    %2663 = vmatprep.subr.mxu0 0.0
    %2664 = vmatpush1.msra.mxu0 0.0
    %2665 = vmatprep.subr.mxu0 0.0
    %2666 = vmatpush1.msra.mxu0 0.0
    %2667 = vmatprep.subr.mxu0 0.0
    %2668 = vmatpush1.msra.mxu0 0.0
    %2669 = vmatprep.subr.mxu0 0.0
    %2670 = vmatpush1.msra.mxu0 0.0
    %2671 = vmatprep.subr.mxu0 0.0
    %2672 = vmatpush1.msra.mxu0 0.0
    %2673 = vmatprep.subr.mxu0 0.0
    %2674 = vmatpush1.msra.mxu0 0.0
    %2675 = vmatprep.subr.mxu0 0.0
    %2676 = vmatpush1.msra.mxu0 0.0
    %2677 = vmatprep.subr.mxu0 0.0
    %2678 = vmatpush1.msra.mxu0 0.0
    %2679 = vmatprep.subr.mxu0 0.0
    %2680 = vmatpush1.msra.mxu0 0.0
    %2681 = vmatprep.subr.mxu0 0.0
    %2682 = vmatpush1.msra.mxu0 0.0
    %2683 = vmatprep.subr.mxu0 0.0
    %2684 = vmatpush1.msra.mxu0 0.0
    %2685 = vmatprep.subr.mxu0 0.0
    %2686 = vmatpush1.msra.mxu0 0.0
    %2687 = vmatprep.mubr.f32.mxu0 0.0
    %2688 = vmatmul.mubr.f32.gmra.mrb[0].mxu0 %v2478
    %v2689 = vpop.f32.mrb[0].mxu0
    %v2690 = vadd.f32 %v2548, %v2689
    %v2691 = vpop.f32.mrb[0].mxu0
    %v2692 = vadd.f32 %v2550, %v2691
    %2693 = vdwg.mxu0
    %2694 = vmatprep.subr.mxu0 %v92
    %2695 = vmatpush1.msra.mxu0 %v91
    %2696 = vmatprep.subr.mxu0 %v96
    %2697 = vmatpush1.msra.mxu0 %v95
    %2698 = vmatprep.subr.mxu0 %v100
    %2699 = vmatpush1.msra.mxu0 %v99
    %2700 = vmatprep.subr.mxu0 %v104
    %2701 = vmatpush1.msra.mxu0 %v103
    %2702 = vmatprep.subr.mxu0 %v108
    %2703 = vmatpush1.msra.mxu0 %v107
    %2704 = vmatprep.subr.mxu0 %v112
    %2705 = vmatpush1.msra.mxu0 %v111
    %2706 = vmatprep.subr.mxu0 %v116
    %2707 = vmatpush1.msra.mxu0 %v115
    %2708 = vmatprep.subr.mxu0 %v120
    %2709 = vmatpush1.msra.mxu0 %v119
    %2710 = vmatprep.subr.mxu0 %v124
    %2711 = vmatpush1.msra.mxu0 %v123
    %2712 = vmatprep.subr.mxu0 %v128
    %2713 = vmatpush1.msra.mxu0 %v127
    %2714 = vmatprep.subr.mxu0 %v132
    %2715 = vmatpush1.msra.mxu0 %v131
    %2716 = vmatprep.subr.mxu0 %v136
    %2717 = vmatpush1.msra.mxu0 %v135
    %2718 = vmatprep.subr.mxu0 %v140
    %2719 = vmatpush1.msra.mxu0 %v139
    %2720 = vmatprep.subr.mxu0 %v144
    %2721 = vmatpush1.msra.mxu0 %v143
    %2722 = vmatprep.subr.mxu0 %v148
    %2723 = vmatpush1.msra.mxu0 %v147
    %2724 = vmatprep.subr.mxu0 %v152
    %2725 = vmatpush1.msra.mxu0 %v151
    %2726 = vmatprep.subr.mxu0 0.0
    %2727 = vmatpush1.msra.mxu0 0.0
    %2728 = vmatprep.subr.mxu0 0.0
    %2729 = vmatpush1.msra.mxu0 0.0
    %2730 = vmatprep.subr.mxu0 0.0
    %2731 = vmatpush1.msra.mxu0 0.0
    %2732 = vmatprep.subr.mxu0 0.0
    %2733 = vmatpush1.msra.mxu0 0.0
    %2734 = vmatprep.subr.mxu0 0.0
    %2735 = vmatpush1.msra.mxu0 0.0
    %2736 = vmatprep.subr.mxu0 0.0
    %2737 = vmatpush1.msra.mxu0 0.0
    %2738 = vmatprep.subr.mxu0 0.0
    %2739 = vmatpush1.msra.mxu0 0.0
    %2740 = vmatprep.subr.mxu0 0.0
    %2741 = vmatpush1.msra.mxu0 0.0
    %2742 = vmatprep.subr.mxu0 0.0
    %2743 = vmatpush1.msra.mxu0 0.0
    %2744 = vmatprep.subr.mxu0 0.0
    %2745 = vmatpush1.msra.mxu0 0.0
    %2746 = vmatprep.subr.mxu0 0.0
    %2747 = vmatpush1.msra.mxu0 0.0
    %2748 = vmatprep.subr.mxu0 0.0
    %2749 = vmatpush1.msra.mxu0 0.0
    %2750 = vmatprep.subr.mxu0 0.0
    %2751 = vmatpush1.msra.mxu0 0.0
    %2752 = vmatprep.subr.mxu0 0.0
    %2753 = vmatpush1.msra.mxu0 0.0
    %2754 = vmatprep.subr.mxu0 0.0
    %2755 = vmatpush1.msra.mxu0 0.0
    %2756 = vmatprep.subr.mxu0 0.0
    %2757 = vmatpush1.msra.mxu0 0.0
    %2758 = vmatprep.mubr.f32.mxu0 0.0
    %2759 = vmatmul.mubr.f32.gmra.mrb[0].mxu0 %v2478
    %v2760 = vpop.f32.mrb[0].mxu0
    %v2761 = vadd.f32 %v2619, %v2760
    %v2762 = vpop.f32.mrb[0].mxu0
    %v2763 = vadd.f32 %v2621, %v2762
    %2764 = vdwg.mxu0
    %v2765 = vadd.f32 %v2690, %v222
    %v2766 = vadd.f32 %v2692, %v226
    %v2767 = vadd.f32 %v2761, %v230
    %v2768 = vadd.f32 %v2763, %v234
    %v2769 = vxor.u32 %v2765, 2147483648
    %v2770 = vmul.f32 %v2769, 1.442695
    %v2771 = vpow.pop %v2770
    %v2772 = vadd.f32 %v2771, 1.0
    %v2773 = vrcp.pop %v2772
    %v2774 = vmul.f32 1.0, %v2773
    %v2775 = vxor.u32 %v2766, 2147483648
    %v2776 = vmul.f32 %v2775, 1.442695
    %v2777 = vpow.pop %v2776
    %v2778 = vadd.f32 %v2777, 1.0
    %v2779 = vrcp.pop %v2778
    %v2780 = vmul.f32 1.0, %v2779
    %v2781 = vtanh.pop %v2767
    %v2782 = vxor.u32 %v2768, 2147483648
    %v2783 = vmul.f32 %v2782, 1.442695
    %v2784 = vpow.pop %v2783
    %v2785 = vadd.f32 %v2784, 1.0
    %v2786 = vrcp.pop %v2785
    %v2787 = vmul.f32 1.0, %v2786
    %v2788 = vmul.f32 %v2780, %v2480
    %v2789 = vmul.f32 %v2774, %v2781
    %v2790 = vadd.f32 %v2788, %v2789
    %v2791 = vtanh.pop %v2790
    %v2792 = vmul.f32 %v2787, %v2791
    %2793 = vst [vmem:[#allocation2] sm:$0xff] %v2792
    %2794 = vst [vmem:[#allocation3] sm:$0xff] %v2790
    %s2795 = scalar_lea.vmem [#allocation12], 56
    %2796 = vst [vmem:[%s2795] sm:$0xff] %v2792
    // Predicated region
    $region46: #{tpu_custom_call.1} parent=1 // pred_check
      %p2797 = pneg %p81
    $region47: #{tpu_custom_call.1} parent=1 // pred_check_branch
      %2799 = sbr.rel (%p2797) target = $region49
    $region48: #{tpu_custom_call.1} parent=1 // pred_region
      %v2800 = vld [vmem:[#allocation2] sm:$0xff]
      %2801 = vst [vmem:[#allocation13] sm:$0xff] %v2800
      %v2802 = vld [vmem:[#allocation3] sm:$0xff]
      %2803 = vst [vmem:[#allocation15] sm:$0xff] %v2802
    $region49: #{tpu_custom_call.1} parent=1 // pred_fallthru
      _
    // Predicated region
    $region50: #{tpu_custom_call.1} parent=1 // pred_check
      _
    $region51: #{tpu_custom_call.1} parent=1 // pred_check_branch
      %2805 = sbr.rel (0) target = $region53
    $region52: #{tpu_custom_call.1} parent=1 // pred_region
      %s2807 = ssub.s32 1024, 1024
      %2808 = vsyncadd [#allocation6], %s2807
      %s2809 = sshll.u32 [#allocation12], 4
      %s2810 = int_to_ptr.vmem [resolvable:$true] %s2809
      %2815 = dma.vmem_to_hbm [thread:$0]  %s2810, 1024, %s6, [#allocation6], 128, 128, 8
    $region53: #{tpu_custom_call.1} parent=1 // pred_fallthru
      _
    // Predicated region
    $region54: #{tpu_custom_call.1} parent=1 // pred_check
      _
    $region55: #{tpu_custom_call.1} parent=1 // pred_check_branch
      %2817 = sbr.rel (0) target = $region57
    $region56: #{tpu_custom_call.1} parent=1 // pred_region
      %s2819 = ssub.s32 128, 128
      %2820 = vsyncadd [#allocation14], %s2819
      %s2822 = sshll.u32 [#allocation13], 4
      %s2823 = int_to_ptr.vmem [resolvable:$true] %s2822
      %2825 = dma.vmem_to_hbm [thread:$0]  %s2823, 128, %s7, [#allocation14]
    $region57: #{tpu_custom_call.1} parent=1 // pred_fallthru
      _
    // Predicated region
    $region58: #{tpu_custom_call.1} parent=1 // pred_check
      _
    $region59: #{tpu_custom_call.1} parent=1 // pred_check_branch
      %2827 = sbr.rel (0) target = $region61
    $region60: #{tpu_custom_call.1} parent=1 // pred_region
      %s2829 = ssub.s32 128, 128
      %2830 = vsyncadd [#allocation14], %s2829
      %s2832 = sshll.u32 [#allocation15], 4
      %s2833 = int_to_ptr.vmem [resolvable:$true] %s2832
      %2835 = dma.vmem_to_hbm [thread:$0]  %s2833, 128, %s8, [#allocation14]
    $region61: #{tpu_custom_call.1} parent=1 // pred_fallthru
      _
    // Predicated region
    $region62: #{tpu_custom_call.1} parent=1 // pred_check
      _
    $region63: #{tpu_custom_call.1} parent=1 // pred_check_branch
      %2837 = sbr.rel (0) target = $region65
    $region64: #{tpu_custom_call.1} parent=1 // pred_region
      %2838 = dma.done [#allocation6], 1024
    $region65: #{tpu_custom_call.1} parent=1 // pred_fallthru
      _
    // Predicated region
    $region66: #{tpu_custom_call.1} parent=1 // pred_check
      _
    $region67: #{tpu_custom_call.1} parent=1 // pred_check_branch
      %2840 = sbr.rel (0) target = $region69
    $region68: #{tpu_custom_call.1} parent=1 // pred_region
      %2841 = dma.done [#allocation14], 128
    $region69: #{tpu_custom_call.1} parent=1 // pred_fallthru
      _
    // Predicated region
    $region70: #{tpu_custom_call.1} parent=1 // pred_check
      _
    $region71: #{tpu_custom_call.1} parent=1 // pred_check_branch
      %2843 = sbr.rel (0) target = $region73
    $region72: #{tpu_custom_call.1} parent=1 // pred_region
      %2844 = dma.done [#allocation14], 128
    $region73: #{tpu_custom_call.1} parent=1 // pred_fallthru
      _
    %2845 = vsyncpa [#allocation5], 1
    %2846 = vsyncpa [#allocation8], 1
    %2847 = vsyncpa [#allocation11], 1
    %2848 = vsyncpa [#allocation6], 1
    %2849 = vsyncpa [#allocation14], 1

</llo_original>
